<compile_context>
chip_gen: v7x
topology: tpu7x:2x2x1
jax: 0.10.0
libtpu: 0.0.40
codegen_flags: <defaults>
</compile_context>

<pallas_src>
import math
import functools

import jax
import jax.numpy as jnp
from jax import lax
from jax.experimental import pallas as pl
from jax.experimental.pallas import tpu as pltpu

# ------------------------------------------------------------------ dimensions
D_X, D_EMB, D_VF = 2, 8, 4                    # raw node features / pretrained emb / vertex feats
SECOND_ORDER = 16                             # FM embedding dim
NODE_IN = D_X + D_EMB + D_VF + SECOND_ORDER   # 30 = node_feature_input_dim
HIDDEN, EMBED = 16, 16                        # pool_layer hidden/embedding dims
PRED_IN = HIDDEN + EMBED                      # 32 = pred_input_dim (concat, num_layers=2)
ASSIGN_HIDDEN, ASSIGN_DIM = 32, 16            # assign_hidden_dim, int(32*0.5)
ASSIGN_CAT = ASSIGN_HIDDEN + ASSIGN_DIM       # 48
LABEL_DIM = 32
PRED_HIDDEN = 50
MAX_NODES = 32
MU, THETA, ORDER = 1.0, 3.5, 3


def _bessel_iv(n, x, terms=30):
    """Modified Bessel function of the first kind (series), replaces scipy.special.iv."""
    s = 0.0
    for k in range(terms):
        s += (0.5 * x) ** (2 * k + n) / (math.factorial(k) * math.factorial(k + n))
    return s


IV0 = _bessel_iv(0, THETA)
IV1 = _bessel_iv(1, THETA)

# ------------------------------------------------------------------ packed-parameter layout
# Every entry (weights AND biases) gets an 8-aligned row block so all in-kernel static
# slices land on aligned sublane offsets.
_LAYOUT = [
    # fused first-layer weight [conv_first_w | assign_first_w] (30,48), split by input group
    ("wf_x", D_X, HIDDEN + ASSIGN_HIDDEN),
    ("wf_e", D_EMB, HIDDEN + ASSIGN_HIDDEN),
    ("wf_v", D_VF, HIDDEN + ASSIGN_HIDDEN),
    ("wf_f", SECOND_ORDER, HIDDEN + ASSIGN_HIDDEN),
    ("fm_w0", D_X, SECOND_ORDER),
    ("fm_w1", D_EMB, SECOND_ORDER),
    ("fm_w2", D_VF, SECOND_ORDER),
    # block-diagonal fused second layer: [conv_last (16x16) ; assign_last (32x16)]
    ("w_second", ASSIGN_CAT, PRED_IN),
    ("assign_pred", ASSIGN_CAT, ASSIGN_DIM),
    ("after_first", PRED_IN, HIDDEN),
    ("after_last", HIDDEN, EMBED),
    ("pred1", PRED_IN * 2, PRED_HIDDEN),
    ("pred2", PRED_HIDDEN, LABEL_DIM),
    ("fc", LABEL_DIM, 2),
    # biases (each one row, but 8-aligned row block)
    ("b_first", 1, HIDDEN + ASSIGN_HIDDEN),
    ("b_second", 1, PRED_IN),
    ("b_assign_pred", 1, ASSIGN_DIM),
    ("b_after_first", 1, HIDDEN),
    ("b_after_last", 1, EMBED),
    ("b_pred1", 1, PRED_HIDDEN),
    ("b_pred2", 1, LABEL_DIM),
    ("b_fc", 1, 2),
    ("b_fm0", 1, SECOND_ORDER),
    ("b_fm1", 1, SECOND_ORDER),
    ("b_fm2", 1, SECOND_ORDER),
]

_OFF, _SHAPES = {}, {}
_row = 0
for _n, _fi, _fo in _LAYOUT:
    _OFF[_n] = _row
    _SHAPES[_n] = (_fi, _fo)
    _row += -(-_fi // 8) * 8                   # round rows up to a multiple of 8
PACK_ROWS = _row                               # 448
PACK_COLS = 64
assert all(fo <= PACK_COLS for _, _, fo in _LAYOUT)


def _slab(ref, name, r0=0, r1=None):
    """Static slice of one packed weight/bias (optionally a row sub-block)."""
    off = _OFF[name]
    fin, fout = _SHAPES[name]
    if r1 is None:
        r1 = fin
    return ref[off + r0:off + r1, 0:fout]


# ------------------------------------------------------------------ fused forward kernel
def _fused_forward_kernel(x_ref, emb_ref, vf_ref, adj_ref, wp_ref, logp_ref, assign_ref):
    f32 = jnp.float32
    dot = functools.partial(jnp.dot, preferred_element_type=f32)
    W = lambda name, r0=0, r1=None: _slab(wp_ref, name, r0, r1)

    x = x_ref[0]        # (N, 2)
    em = emb_ref[0]     # (N, 8)
    vf = vf_ref[0]      # (N, 4)
    a = adj_ref[0]      # (N, N)

    # ---- FM second-order interaction (add_fm) ----
    e0 = dot(x, W("fm_w0")) + W("b_fm0")
    e1 = dot(em, W("fm_w1")) + W("b_fm1")
    e2 = dot(vf, W("fm_w2")) + W("b_fm2")
    ssum = e0 + e1 + e2
    fm = 0.5 * (ssum * ssum - (e0 * e0 + e1 * e1 + e2 * e2))            # (N,16)

    # ---- x2 = [x | emb | vf | fm] is never materialized; push it through the fused
    #      first-layer weight:  z = x2 @ [conv_first_w | assign_first_w]  (N,48) ----
    z = (dot(x, W("wf_x")) + dot(em, W("wf_e"))
         + dot(vf, W("wf_v")) + dot(fm, W("wf_f")))

    # ---- ProNE propagation (added_forward).  conv is linear over nodes, so apply the
    #      Chebyshev recurrence directly to the feature slab z (== (conv @ x2) @ W_first). ----
    rowsum = jnp.sum(a, axis=1, keepdims=True)                           # (N,1)
    d_inv = jnp.where(rowsum == 0.0, 0.0, pl.reciprocal(rowsum, approx=True))
    da = d_inv * a                                                       # D^-1 A

    def m_apply(f):
        # M @ f with M = (I - DA) - MU*I ; for MU == 1 this is exactly -DA @ f.
        mf = -dot(da, f)
        if MU != 1.0:
            mf = mf + (1.0 - MU) * f
        return mf

    f0 = z
    f1 = 0.5 * (m_apply(m_apply(f0)) - f0)
    acc = IV0 * f0 - 2.0 * IV1 * f1
    for i in range(2, ORDER):                                            # static unroll (i = 2)
        f2 = m_apply(m_apply(f1)) - f1 - f0
        coef = 2.0 * _bessel_iv(i, THETA)
        acc = acc + (coef if i % 2 == 0 else -coef) * f2
        f0, f1 = f1, f2
    # acc == xx @ [conv_first_w | assign_first_w]                        (N,48)

    # ---- shared first graph-conv layer of both GNN branches ----
    h1 = jnp.maximum(dot(a, acc) + W("b_first"), 0.0)                    # (N,48), ReLU
    h1e = h1[:, 0:HIDDEN]                                                # embedding hidden (N,16)
    h1a = h1[:, HIDDEN:ASSIGN_CAT]                                       # assign hidden    (N,32)

    # ---- fused second graph-conv layers: one A@h1 pass + one block-diagonal matmul ----
    ah1 = dot(a, h1)                                                     # (N,48)
    h2 = dot(ah1, W("w_second")) + W("b_second")                         # (N,32) = [h2e | h2a]
    h2e = h2[:, 0:EMBED]                                                 # (N,16)
    h2a = h2[:, EMBED:PRED_IN]                                           # (N,16)

    # ---- assign_pred on [h1a | h2a] + softmax over clusters ----
    logits = (dot(h1a, W("assign_pred", 0, ASSIGN_HIDDEN))
              + dot(h2a, W("assign_pred", ASSIGN_HIDDEN, ASSIGN_CAT))
              + W("b_assign_pred"))                                      # (N,16)
    lmax = jnp.max(logits, axis=-1, keepdims=True)
    ex = jnp.exp(logits - lmax)
    S = ex * pl.reciprocal(jnp.sum(ex, axis=-1, keepdims=True), approx=True)
    assign_ref[0] = S                                                    # first_assignment_mat

    # ---- diffpool coarsening: S^T X and S^T A S via dot_general (no transpose) ----
    cT = (((0,), (0,)), ((), ()))                                        # contract node axis
    xp1 = lax.dot_general(S, h1e, cT, preferred_element_type=f32)        # (K,16)
    xp2 = lax.dot_general(S, h2e, cT, preferred_element_type=f32)        # (K,16)
    sta = lax.dot_general(S, a, cT, preferred_element_type=f32)          # (K,N)
    adj_pool = dot(sta, S)                                               # (K,K)

    # ---- post-pool GNN (pred_input_dim 32 -> 16 -> 16) ----
    t = dot(xp1, W("after_first", 0, HIDDEN)) + dot(xp2, W("after_first", HIDDEN, PRED_IN))
    h1p = jnp.maximum(dot(adj_pool, t) + W("b_after_first"), 0.0)        # (K,16)
    h2p = dot(dot(adj_pool, h1p), W("after_last")) + W("b_after_last")   # (K,16)

    # ---- readout sums over nodes / clusters ----
    o1 = jnp.sum(h1e, axis=0, keepdims=True)                             # (1,16)
    o2 = jnp.sum(h2e, axis=0, keepdims=True)
    o3 = jnp.sum(h1p, axis=0, keepdims=True)
    o4 = jnp.sum(h2p, axis=0, keepdims=True)

    # ---- pred_model: Linear(64,50) -> ReLU -> Linear(50,32) (input kept split) ----
    h = (dot(o1, W("pred1", 0, HIDDEN))
         + dot(o2, W("pred1", HIDDEN, PRED_IN))
         + dot(o3, W("pred1", PRED_IN, PRED_IN + HIDDEN))
         + dot(o4, W("pred1", PRED_IN + HIDDEN, 2 * PRED_IN))
         + W("b_pred1"))
    h = jnp.maximum(h, 0.0)                                              # (1,50)
    ypred = dot(h, W("pred2")) + W("b_pred2")                            # (1,32)

    # ---- head: fc_after_pool(relu(ypred)) + log_softmax (exact) ----
    logit2 = dot(jnp.maximum(ypred, 0.0), W("fc")) + W("b_fc")           # (1,2)
    zc = logit2 - jnp.max(logit2, axis=-1, keepdims=True)
    logp_ref[0] = zc - jnp.log(jnp.sum(jnp.exp(zc), axis=-1, keepdims=True))


def batch_wrap_diffgat_pool_forward(packed_params, x, adj, emb, vertex_features):
    B, N, _ = x.shape
    batch3 = lambda d: pl.BlockSpec((1, N, d), lambda b: (b, 0, 0))
    logp, assign = pl.pallas_call(
        _fused_forward_kernel,
        out_shape=(jax.ShapeDtypeStruct((B, 1, 2), jnp.float32),
                   jax.ShapeDtypeStruct((B, N, ASSIGN_DIM), jnp.float32)),
        grid=(B,),
        in_specs=[batch3(D_X), batch3(D_EMB), batch3(D_VF), batch3(N),
                  pl.BlockSpec((PACK_ROWS, PACK_COLS), lambda b: (0, 0))],
        out_specs=(pl.BlockSpec((1, 1, 2), lambda b: (b, 0, 0)),
                   pl.BlockSpec((1, N, ASSIGN_DIM), lambda b: (b, 0, 0))),
        compiler_params=pltpu.CompilerParams(dimension_semantics=("parallel",)),
    )(x, emb, vertex_features, adj, packed_params)
    return logp.reshape(B, 2), assign


# ------------------------------------------------------------------ parameters
def init_params(key):
    ks = iter(jax.random.split(key, 32))

    def linear(k, fin, fout):
        k1, k2 = jax.random.split(k)
        bound = 1.0 / math.sqrt(fin)
        w = jax.random.uniform(k1, (fin, fout), jnp.float32, -bound, bound)
        b = jax.random.uniform(k2, (1, fout), jnp.float32, -bound, bound)
        return w, b

    def graphconv(k, fin, fout):
        # xavier_uniform with relu gain, bias = 0 (matches the GraphConv init loop)
        gain = math.sqrt(2.0)
        bound = gain * math.sqrt(6.0 / (fin + fout))
        w = jax.random.uniform(k, (fin, fout), jnp.float32, -bound, bound)
        return w, jnp.zeros((1, fout), jnp.float32)

    p = {}
    p['fm_w0'], p['fm_b0'] = linear(next(ks), D_X, SECOND_ORDER)
    p['fm_w1'], p['fm_b1'] = linear(next(ks), D_EMB, SECOND_ORDER)
    p['fm_w2'], p['fm_b2'] = linear(next(ks), D_VF, SECOND_ORDER)
    p['conv_first_w'], p['conv_first_b'] = graphconv(next(ks), NODE_IN, HIDDEN)
    p['conv_last_w'], p['conv_last_b'] = graphconv(next(ks), HIDDEN, EMBED)
    p['assign_first_w'], p['assign_first_b'] = graphconv(next(ks), NODE_IN, ASSIGN_HIDDEN)
    p['assign_last_w'], p['assign_last_b'] = graphconv(next(ks), ASSIGN_HIDDEN, ASSIGN_DIM)
    p['assign_pred_w'], p['assign_pred_b'] = linear(next(ks), ASSIGN_CAT, ASSIGN_DIM)
    p['after_first_w'], p['after_first_b'] = graphconv(next(ks), PRED_IN, HIDDEN)
    p['after_last_w'], p['after_last_b'] = graphconv(next(ks), HIDDEN, EMBED)
    p['pred1_w'], p['pred1_b'] = linear(next(ks), PRED_IN * 2, PRED_HIDDEN)
    p['pred2_w'], p['pred2_b'] = linear(next(ks), PRED_HIDDEN, LABEL_DIM)
    p['fc_w'], p['fc_b'] = linear(next(ks), LABEL_DIM, 2)
    return p


def pack_params(p):
    """Pack every weight/bias into one (PACK_ROWS, 64) f32 slab (done once on the host)."""
    wf = jnp.concatenate([p['conv_first_w'], p['assign_first_w']], axis=1)   # (30,48)
    w_second = jnp.zeros((ASSIGN_CAT, PRED_IN), jnp.float32)                 # block diag (48,32)
    w_second = w_second.at[0:HIDDEN, 0:EMBED].set(p['conv_last_w'])
    w_second = w_second.at[HIDDEN:ASSIGN_CAT, EMBED:PRED_IN].set(p['assign_last_w'])

    entries = {
        'wf_x': wf[0:D_X],
        'wf_e': wf[D_X:D_X + D_EMB],
        'wf_v': wf[D_X + D_EMB:D_X + D_EMB + D_VF],
        'wf_f': wf[D_X + D_EMB + D_VF:],
        'fm_w0': p['fm_w0'], 'fm_w1': p['fm_w1'], 'fm_w2': p['fm_w2'],
        'w_second': w_second,
        'assign_pred': p['assign_pred_w'],
        'after_first': p['after_first_w'],
        'after_last': p['after_last_w'],
        'pred1': p['pred1_w'],
        'pred2': p['pred2_w'],
        'fc': p['fc_w'],
        'b_first': jnp.concatenate([p['conv_first_b'], p['assign_first_b']], axis=1),
        'b_second': jnp.concatenate([p['conv_last_b'], p['assign_last_b']], axis=1),
        'b_assign_pred': p['assign_pred_b'],
        'b_after_first': p['after_first_b'],
        'b_after_last': p['after_last_b'],
        'b_pred1': p['pred1_b'],
        'b_pred2': p['pred2_b'],
        'b_fc': p['fc_b'],
        'b_fm0': p['fm_b0'], 'b_fm1': p['fm_b1'], 'b_fm2': p['fm_b2'],
    }
    pack = jnp.zeros((PACK_ROWS, PACK_COLS), jnp.float32)
    for name, fin, fout in _LAYOUT:
        blk = jnp.asarray(entries[name], jnp.float32).reshape(fin, fout)
        pack = pack.at[_OFF[name]:_OFF[name] + fin, 0:fout].set(blk)
    return pack


# ------------------------------------------------------------------ pure-JAX reference (unfused)
def reference_forward(p, x, adj, emb, vf):
    e0 = x @ p['fm_w0'] + p['fm_b0']
    e1 = emb @ p['fm_w1'] + p['fm_b1']
    e2 = vf @ p['fm_w2'] + p['fm_b2']
    s = e0 + e1 + e2
    fm = 0.5 * (s * s - (e0 * e0 + e1 * e1 + e2 * e2))
    x2 = jnp.concatenate([x, emb, vf, fm], axis=2)

    rowsum = jnp.sum(adj, axis=2, keepdims=True)
    dinv = jnp.where(rowsum == 0.0, 0.0, 1.0 / rowsum)
    da = dinv * adj
    eye = jnp.eye(adj.shape[1], dtype=jnp.float32)[None]
    m = (eye - da) - MU * eye
    lx0 = jnp.broadcast_to(eye, m.shape)
    lx1 = 0.5 * (m @ m - lx0)
    conv = IV0 * lx0 - 2.0 * IV1 * lx1
    for i in range(2, ORDER):
        lx2 = m @ (m @ lx1) - lx1 - lx0
        coef = 2.0 * _bessel_iv(i, THETA)
        conv = conv + (coef if i % 2 == 0 else -coef) * lx2
        lx0, lx1 = lx1, lx2
    xx = conv @ x2

    def gcn(xin, a, w1, b1, w2, b2):
        h1 = jnp.maximum(a @ xin @ w1 + b1, 0.0)
        h2 = a @ h1 @ w2 + b2
        return jnp.concatenate([h1, h2], axis=-1)

    emb_t = gcn(xx, adj, p['conv_first_w'], p['conv_first_b'], p['conv_last_w'], p['conv_last_b'])
    out1 = jnp.sum(emb_t, axis=1)
    af = gcn(xx, adj, p['assign_first_w'], p['assign_first_b'],
             p['assign_last_w'], p['assign_last_b'])
    S = jax.nn.softmax(af @ p['assign_pred_w'] + p['assign_pred_b'], axis=-1)
    st = jnp.swapaxes(S, 1, 2)
    x_pool = st @ emb_t
    adj_pool = st @ adj @ S
    emb2 = gcn(x_pool, adj_pool, p['after_first_w'], p['after_first_b'],
               p['after_last_w'], p['after_last_b'])
    out2 = jnp.sum(emb2, axis=1)
    output = jnp.concatenate([out1, out2], axis=1)
    h = jnp.maximum(output @ p['pred1_w'] + p['pred1_b'], 0.0)
    ypred = h @ p['pred2_w'] + p['pred2_b']
    logits2 = jnp.maximum(ypred, 0.0) @ p['fc_w'] + p['fc_b']
    return jax.nn.log_softmax(logits2, axis=-1), S


# ------------------------------------------------------------------ main
if __name__ == "__main__":
    key = jax.random.PRNGKey(0)
    k1, k2, k3, k4, k5 = jax.random.split(key, 5)

    B, N = 2, MAX_NODES
    x = jax.random.normal(k1, (B, N, D_X), jnp.float32)
    emb = jax.random.normal(k2, (B, N, D_EMB), jnp.float32)
    vertex_features = jax.random.normal(k3, (B, N, D_VF), jnp.float32)
    adj = (jax.random.uniform(k4, (B, N, N)) > 0.5).astype(jnp.float32)

    params = init_params(k5)
    packed = pack_params(params)

    fwd = jax.jit(batch_wrap_diffgat_pool_forward)
    log_probs, assign_mat = fwd(packed, x, adj, emb, vertex_features)
    jax.block_until_ready((log_probs, assign_mat))

    assert log_probs.shape == (B, 2)
    assert assign_mat.shape == (B, N, ASSIGN_DIM)
    assert bool(jnp.all(jnp.isfinite(log_probs)))

    # cross-check the fused kernel against the straightforward (unfused) JAX math;
    # loose tolerance covers the approx-reciprocal EUP path.
    ref_logp, ref_assign = reference_forward(params, x, adj, emb, vertex_features)
    assert bool(jnp.allclose(log_probs, ref_logp, atol=5e-2, rtol=5e-2)), \
        float(jnp.max(jnp.abs(log_probs - ref_logp)))
    assert bool(jnp.allclose(assign_mat, ref_assign, atol=5e-2, rtol=5e-2)), \
        float(jnp.max(jnp.abs(assign_mat - ref_assign)))

    print("KERNEL_OK")
</pallas_src>

<mosaic_0001>
module attributes {stable_mosaic.version = 11 : i64} {
  func.func @_fused_forward_kernel(%arg0: i32, %arg1: memref<1x32x2xf32, #tpu.memory_space<vmem>>, %arg2: memref<1x32x8xf32, #tpu.memory_space<vmem>>, %arg3: memref<1x32x4xf32, #tpu.memory_space<vmem>>, %arg4: memref<1x32x32xf32, #tpu.memory_space<vmem>>, %arg5: memref<448x64xf32, #tpu.memory_space<vmem>>, %arg6: memref<1x1x2xf32, #tpu.memory_space<vmem>>, %arg7: memref<1x32x16xf32, #tpu.memory_space<vmem>>) attributes {dimension_semantics = [#tpu.dimension_semantics<parallel>], iteration_bounds = array<i64: 2>, scalar_prefetch = 0 : i64, scratch_operands = 0 : i64, tpu.core_type = #tpu.core_type<tc>, window_params = [{transform_indices = @transform_0, window_bounds = array<i64: 1, 32, 2>}, {transform_indices = @transform_1, window_bounds = array<i64: 1, 32, 8>}, {transform_indices = @transform_2, window_bounds = array<i64: 1, 32, 4>}, {transform_indices = @transform_3, window_bounds = array<i64: 1, 32, 32>}, {pipeline_mode = #tpu.pipeline_mode<synchronous>, transform_indices = @transform_4, window_bounds = array<i64: 448, 64>}, {transform_indices = @transform_5, window_bounds = array<i64: 1, 1, 2>}, {transform_indices = @transform_6, window_bounds = array<i64: 1, 32, 16>}]} {
    %c0 = arith.constant 0 : index
    %c0_0 = arith.constant 0 : index
    %c0_1 = arith.constant 0 : index
    %0 = vector.load %arg1[%c0, %c0_0, %c0_1] : memref<1x32x2xf32, #tpu.memory_space<vmem>>, vector<1x32x2xf32>
    %1 = vector.shape_cast %0 : vector<1x32x2xf32> to vector<32x2xf32>
    %c0_2 = arith.constant 0 : index
    %c0_3 = arith.constant 0 : index
    %c0_4 = arith.constant 0 : index
    %2 = vector.load %arg2[%c0_2, %c0_3, %c0_4] : memref<1x32x8xf32, #tpu.memory_space<vmem>>, vector<1x32x8xf32>
    %3 = vector.shape_cast %2 : vector<1x32x8xf32> to vector<32x8xf32>
    %c0_5 = arith.constant 0 : index
    %c0_6 = arith.constant 0 : index
    %c0_7 = arith.constant 0 : index
    %4 = vector.load %arg3[%c0_5, %c0_6, %c0_7] : memref<1x32x4xf32, #tpu.memory_space<vmem>>, vector<1x32x4xf32>
    %5 = vector.shape_cast %4 : vector<1x32x4xf32> to vector<32x4xf32>
    %c0_8 = arith.constant 0 : index
    %c0_9 = arith.constant 0 : index
    %c0_10 = arith.constant 0 : index
    %6 = vector.load %arg4[%c0_8, %c0_9, %c0_10] : memref<1x32x32xf32, #tpu.memory_space<vmem>>, vector<1x32x32xf32>
    %7 = vector.shape_cast %6 : vector<1x32x32xf32> to vector<32x32xf32>
    %c40 = arith.constant 40 : index
    %c0_11 = arith.constant 0 : index
    %8 = vector.load %arg5[%c40, %c0_11] : memref<448x64xf32, #tpu.memory_space<vmem>>, vector<2x16xf32>
    %cst = arith.constant dense<0.000000e+00> : vector<32x16xf32>
    %9 = tpu.matmul %1, %8, %cst {dimension_numbers = #tpu.dot_dimension_numbers<[1], [0], [0], [1], [0, 0, 1, 1], [], []>} : vector<32x2xf32>, vector<2x16xf32>, vector<32x16xf32> -> vector<32x16xf32>
    %c424 = arith.constant 424 : index
    %c0_12 = arith.constant 0 : index
    %10 = vector.load %arg5[%c424, %c0_12] : memref<448x64xf32, #tpu.memory_space<vmem>>, vector<1x16xf32>
    %11 = vector.broadcast %10 : vector<1x16xf32> to vector<32x16xf32>
    %12 = arith.addf %9, %11 : vector<32x16xf32>
    %c48 = arith.constant 48 : index
    %c0_13 = arith.constant 0 : index
    %13 = vector.load %arg5[%c48, %c0_13] : memref<448x64xf32, #tpu.memory_space<vmem>>, vector<8x16xf32>
    %cst_14 = arith.constant dense<0.000000e+00> : vector<32x16xf32>
    %14 = tpu.matmul %3, %13, %cst_14 {dimension_numbers = #tpu.dot_dimension_numbers<[1], [0], [0], [1], [0, 0, 1, 1], [], []>} : vector<32x8xf32>, vector<8x16xf32>, vector<32x16xf32> -> vector<32x16xf32>
    %c432 = arith.constant 432 : index
    %c0_15 = arith.constant 0 : index
    %15 = vector.load %arg5[%c432, %c0_15] : memref<448x64xf32, #tpu.memory_space<vmem>>, vector<1x16xf32>
    %16 = vector.broadcast %15 : vector<1x16xf32> to vector<32x16xf32>
    %17 = arith.addf %14, %16 : vector<32x16xf32>
    %c56 = arith.constant 56 : index
    %c0_16 = arith.constant 0 : index
    %18 = vector.load %arg5[%c56, %c0_16] : memref<448x64xf32, #tpu.memory_space<vmem>>, vector<4x16xf32>
    %cst_17 = arith.constant dense<0.000000e+00> : vector<32x16xf32>
    %19 = tpu.matmul %5, %18, %cst_17 {dimension_numbers = #tpu.dot_dimension_numbers<[1], [0], [0], [1], [0, 0, 1, 1], [], []>} : vector<32x4xf32>, vector<4x16xf32>, vector<32x16xf32> -> vector<32x16xf32>
    %c440 = arith.constant 440 : index
    %c0_18 = arith.constant 0 : index
    %20 = vector.load %arg5[%c440, %c0_18] : memref<448x64xf32, #tpu.memory_space<vmem>>, vector<1x16xf32>
    %21 = vector.broadcast %20 : vector<1x16xf32> to vector<32x16xf32>
    %22 = arith.addf %19, %21 : vector<32x16xf32>
    %23 = arith.addf %12, %17 : vector<32x16xf32>
    %24 = arith.addf %23, %22 : vector<32x16xf32>
    %25 = arith.mulf %24, %24 : vector<32x16xf32>
    %26 = arith.mulf %12, %12 : vector<32x16xf32>
    %27 = arith.mulf %17, %17 : vector<32x16xf32>
    %28 = arith.addf %26, %27 : vector<32x16xf32>
    %29 = arith.mulf %22, %22 : vector<32x16xf32>
    %30 = arith.addf %28, %29 : vector<32x16xf32>
    %31 = arith.subf %25, %30 : vector<32x16xf32>
    %cst_19 = arith.constant 5.000000e-01 : f32
    %32 = vector.broadcast %cst_19 : f32 to vector<32x16xf32>
    %33 = arith.mulf %32, %31 : vector<32x16xf32>
    %c0_20 = arith.constant 0 : index
    %c0_21 = arith.constant 0 : index
    %34 = vector.load %arg5[%c0_20, %c0_21] : memref<448x64xf32, #tpu.memory_space<vmem>>, vector<2x48xf32>
    %cst_22 = arith.constant dense<0.000000e+00> : vector<32x48xf32>
    %35 = tpu.matmul %1, %34, %cst_22 {dimension_numbers = #tpu.dot_dimension_numbers<[1], [0], [0], [1], [0, 0, 1, 1], [], []>} : vector<32x2xf32>, vector<2x48xf32>, vector<32x48xf32> -> vector<32x48xf32>
    %c8 = arith.constant 8 : index
    %c0_23 = arith.constant 0 : index
    %36 = vector.load %arg5[%c8, %c0_23] : memref<448x64xf32, #tpu.memory_space<vmem>>, vector<8x48xf32>
    %cst_24 = arith.constant dense<0.000000e+00> : vector<32x48xf32>
    %37 = tpu.matmul %3, %36, %cst_24 {dimension_numbers = #tpu.dot_dimension_numbers<[1], [0], [0], [1], [0, 0, 1, 1], [], []>} : vector<32x8xf32>, vector<8x48xf32>, vector<32x48xf32> -> vector<32x48xf32>
    %38 = arith.addf %35, %37 : vector<32x48xf32>
    %c16 = arith.constant 16 : index
    %c0_25 = arith.constant 0 : index
    %39 = vector.load %arg5[%c16, %c0_25] : memref<448x64xf32, #tpu.memory_space<vmem>>, vector<4x48xf32>
    %cst_26 = arith.constant dense<0.000000e+00> : vector<32x48xf32>
    %40 = tpu.matmul %5, %39, %cst_26 {dimension_numbers = #tpu.dot_dimension_numbers<[1], [0], [0], [1], [0, 0, 1, 1], [], []>} : vector<32x4xf32>, vector<4x48xf32>, vector<32x48xf32> -> vector<32x48xf32>
    %41 = arith.addf %38, %40 : vector<32x48xf32>
    %c24 = arith.constant 24 : index
    %c0_27 = arith.constant 0 : index
    %42 = vector.load %arg5[%c24, %c0_27] : memref<448x64xf32, #tpu.memory_space<vmem>>, vector<16x48xf32>
    %cst_28 = arith.constant dense<0.000000e+00> : vector<32x48xf32>
    %43 = tpu.matmul %33, %42, %cst_28 {dimension_numbers = #tpu.dot_dimension_numbers<[1], [0], [0], [1], [0, 0, 1, 1], [], []>} : vector<32x16xf32>, vector<16x48xf32>, vector<32x48xf32> -> vector<32x48xf32>
    %44 = arith.addf %41, %43 : vector<32x48xf32>
    %cst_29 = arith.constant dense<0.000000e+00> : vector<32xf32>
    %45 = vector.multi_reduction <add>, %7, %cst_29 [1] : vector<32x32xf32> to vector<32xf32>
    %46 = vector.shape_cast %45 : vector<32xf32> to vector<32x1xf32>
    %cst_30 = arith.constant 0.000000e+00 : f32
    %47 = vector.broadcast %cst_30 : f32 to vector<32x1xf32>
    %48 = arith.cmpf oeq, %46, %47 : vector<32x1xf32>
    %49 = tpu.reciprocal %46 {approx = true} : vector<32x1xf32> -> vector<32x1xf32>
    %cst_31 = arith.constant 0.000000e+00 : f32
    %50 = vector.broadcast %cst_31 : f32 to vector<32x1xf32>
    %51 = arith.select %48, %50, %49 : vector<32x1xi1>, vector<32x1xf32>
    %52 = vector.broadcast %51 : vector<32x1xf32> to vector<32x32xf32>
    %53 = arith.mulf %52, %7 : vector<32x32xf32>
    %cst_32 = arith.constant dense<0.000000e+00> : vector<32x48xf32>
    %54 = tpu.matmul %53, %44, %cst_32 {dimension_numbers = #tpu.dot_dimension_numbers<[1], [0], [0], [1], [0, 0, 1, 1], [], []>} : vector<32x32xf32>, vector<32x48xf32>, vector<32x48xf32> -> vector<32x48xf32>
    %cst_33 = arith.constant 0.000000e+00 : f32
    %55 = vector.broadcast %cst_33 : f32 to vector<32x48xf32>
    %56 = arith.subf %55, %54 : vector<32x48xf32>
    %cst_34 = arith.constant dense<0.000000e+00> : vector<32x48xf32>
    %57 = tpu.matmul %53, %56, %cst_34 {dimension_numbers = #tpu.dot_dimension_numbers<[1], [0], [0], [1], [0, 0, 1, 1], [], []>} : vector<32x32xf32>, vector<32x48xf32>, vector<32x48xf32> -> vector<32x48xf32>
    %cst_35 = arith.constant 0.000000e+00 : f32
    %58 = vector.broadcast %cst_35 : f32 to vector<32x48xf32>
    %59 = arith.subf %58, %57 : vector<32x48xf32>
    %60 = arith.subf %59, %44 : vector<32x48xf32>
    %cst_36 = arith.constant 5.000000e-01 : f32
    %61 = vector.broadcast %cst_36 : f32 to vector<32x48xf32>
    %62 = arith.mulf %61, %60 : vector<32x48xf32>
    %cst_37 = arith.constant 7.37820339 : f32
    %63 = vector.broadcast %cst_37 : f32 to vector<32x48xf32>
    %64 = arith.mulf %63, %44 : vector<32x48xf32>
    %cst_38 = arith.constant 12.4116697 : f32
    %65 = vector.broadcast %cst_38 : f32 to vector<32x48xf32>
    %66 = arith.mulf %65, %62 : vector<32x48xf32>
    %67 = arith.subf %64, %66 : vector<32x48xf32>
    %cst_39 = arith.constant dense<0.000000e+00> : vector<32x48xf32>
    %68 = tpu.matmul %53, %62, %cst_39 {dimension_numbers = #tpu.dot_dimension_numbers<[1], [0], [0], [1], [0, 0, 1, 1], [], []>} : vector<32x32xf32>, vector<32x48xf32>, vector<32x48xf32> -> vector<32x48xf32>
    %cst_40 = arith.constant 0.000000e+00 : f32
    %69 = vector.broadcast %cst_40 : f32 to vector<32x48xf32>
    %70 = arith.subf %69, %68 : vector<32x48xf32>
    %cst_41 = arith.constant dense<0.000000e+00> : vector<32x48xf32>
    %71 = tpu.matmul %53, %70, %cst_41 {dimension_numbers = #tpu.dot_dimension_numbers<[1], [0], [0], [1], [0, 0, 1, 1], [], []>} : vector<32x32xf32>, vector<32x48xf32>, vector<32x48xf32> -> vector<32x48xf32>
    %cst_42 = arith.constant 0.000000e+00 : f32
    %72 = vector.broadcast %cst_42 : f32 to vector<32x48xf32>
    %73 = arith.subf %72, %71 : vector<32x48xf32>
    %74 = arith.subf %73, %62 : vector<32x48xf32>
    %75 = arith.subf %74, %44 : vector<32x48xf32>
    %cst_43 = arith.constant 7.66402388 : f32
    %76 = vector.broadcast %cst_43 : f32 to vector<32x48xf32>
    %77 = arith.mulf %76, %75 : vector<32x48xf32>
    %78 = arith.addf %67, %77 : vector<32x48xf32>
    %cst_44 = arith.constant dense<0.000000e+00> : vector<32x48xf32>
    %79 = tpu.matmul %7, %78, %cst_44 {dimension_numbers = #tpu.dot_dimension_numbers<[1], [0], [0], [1], [0, 0, 1, 1], [], []>} : vector<32x32xf32>, vector<32x48xf32>, vector<32x48xf32> -> vector<32x48xf32>
    %c360 = arith.constant 360 : index
    %c0_45 = arith.constant 0 : index
    %80 = vector.load %arg5[%c360, %c0_45] : memref<448x64xf32, #tpu.memory_space<vmem>>, vector<1x48xf32>
    %81 = vector.broadcast %80 : vector<1x48xf32> to vector<32x48xf32>
    %82 = arith.addf %79, %81 : vector<32x48xf32>
    %cst_46 = arith.constant 0.000000e+00 : f32
    %83 = vector.broadcast %cst_46 : f32 to vector<32x48xf32>
    %84 = arith.maximumf %82, %83 : vector<32x48xf32>
    %85 = vector.extract_strided_slice %84 {offsets = [0, 0], sizes = [32, 16], strides = [1, 1]} : vector<32x48xf32> to vector<32x16xf32>
    %86 = vector.extract_strided_slice %84 {offsets = [0, 16], sizes = [32, 32], strides = [1, 1]} : vector<32x48xf32> to vector<32x32xf32>
    %cst_47 = arith.constant dense<0.000000e+00> : vector<32x48xf32>
    %87 = tpu.matmul %7, %84, %cst_47 {dimension_numbers = #tpu.dot_dimension_numbers<[1], [0], [0], [1], [0, 0, 1, 1], [], []>} : vector<32x32xf32>, vector<32x48xf32>, vector<32x48xf32> -> vector<32x48xf32>
    %c64 = arith.constant 64 : index
    %c0_48 = arith.constant 0 : index
    %88 = vector.load %arg5[%c64, %c0_48] : memref<448x64xf32, #tpu.memory_space<vmem>>, vector<48x32xf32>
    %cst_49 = arith.constant dense<0.000000e+00> : vector<32x32xf32>
    %89 = tpu.matmul %87, %88, %cst_49 {dimension_numbers = #tpu.dot_dimension_numbers<[1], [0], [0], [1], [0, 0, 1, 1], [], []>} : vector<32x48xf32>, vector<48x32xf32>, vector<32x32xf32> -> vector<32x32xf32>
    %c368 = arith.constant 368 : index
    %c0_50 = arith.constant 0 : index
    %90 = vector.load %arg5[%c368, %c0_50] : memref<448x64xf32, #tpu.memory_space<vmem>>, vector<1x32xf32>
    %91 = vector.broadcast %90 : vector<1x32xf32> to vector<32x32xf32>
    %92 = arith.addf %89, %91 : vector<32x32xf32>
    %93 = vector.extract_strided_slice %92 {offsets = [0, 0], sizes = [32, 16], strides = [1, 1]} : vector<32x32xf32> to vector<32x16xf32>
    %94 = vector.extract_strided_slice %92 {offsets = [0, 16], sizes = [32, 16], strides = [1, 1]} : vector<32x32xf32> to vector<32x16xf32>
    %c112 = arith.constant 112 : index
    %c0_51 = arith.constant 0 : index
    %95 = vector.load %arg5[%c112, %c0_51] : memref<448x64xf32, #tpu.memory_space<vmem>>, vector<32x16xf32>
    %cst_52 = arith.constant dense<0.000000e+00> : vector<32x16xf32>
    %96 = tpu.matmul %86, %95, %cst_52 {dimension_numbers = #tpu.dot_dimension_numbers<[1], [0], [0], [1], [0, 0, 1, 1], [], []>} : vector<32x32xf32>, vector<32x16xf32>, vector<32x16xf32> -> vector<32x16xf32>
    %c144 = arith.constant 144 : index
    %c0_53 = arith.constant 0 : index
    %97 = vector.load %arg5[%c144, %c0_53] : memref<448x64xf32, #tpu.memory_space<vmem>>, vector<16x16xf32>
    %cst_54 = arith.constant dense<0.000000e+00> : vector<32x16xf32>
    %98 = tpu.matmul %94, %97, %cst_54 {dimension_numbers = #tpu.dot_dimension_numbers<[1], [0], [0], [1], [0, 0, 1, 1], [], []>} : vector<32x16xf32>, vector<16x16xf32>, vector<32x16xf32> -> vector<32x16xf32>
    %99 = arith.addf %96, %98 : vector<32x16xf32>
    %c376 = arith.constant 376 : index
    %c0_55 = arith.constant 0 : index
    %100 = vector.load %arg5[%c376, %c0_55] : memref<448x64xf32, #tpu.memory_space<vmem>>, vector<1x16xf32>
    %101 = vector.broadcast %100 : vector<1x16xf32> to vector<32x16xf32>
    %102 = arith.addf %99, %101 : vector<32x16xf32>
    %cst_56 = arith.constant dense<0xFF800000> : vector<32xf32>
    %103 = vector.multi_reduction <maximumf>, %102, %cst_56 [1] : vector<32x16xf32> to vector<32xf32>
    %104 = vector.shape_cast %103 : vector<32xf32> to vector<32x1xf32>
    %105 = vector.broadcast %104 : vector<32x1xf32> to vector<32x16xf32>
    %106 = arith.subf %102, %105 : vector<32x16xf32>
    %107 = math.exp %106 : vector<32x16xf32>
    %cst_57 = arith.constant dense<0.000000e+00> : vector<32xf32>
    %108 = vector.multi_reduction <add>, %107, %cst_57 [1] : vector<32x16xf32> to vector<32xf32>
    %109 = vector.shape_cast %108 : vector<32xf32> to vector<32x1xf32>
    %110 = tpu.reciprocal %109 {approx = true} : vector<32x1xf32> -> vector<32x1xf32>
    %111 = vector.broadcast %110 : vector<32x1xf32> to vector<32x16xf32>
    %112 = arith.mulf %107, %111 : vector<32x16xf32>
    %c0_58 = arith.constant 0 : index
    %c0_59 = arith.constant 0 : index
    %c0_60 = arith.constant 0 : index
    %113 = vector.load %arg7[%c0_58, %c0_59, %c0_60] : memref<1x32x16xf32, #tpu.memory_space<vmem>>, vector<1x32x16xf32>
    %114 = vector.shape_cast %113 : vector<1x32x16xf32> to vector<32x16xf32>
    %115 = vector.shape_cast %112 : vector<32x16xf32> to vector<1x32x16xf32>
    tpu.vector_store %arg7[%c0_58, %c0_59, %c0_60], %115 {strides = array<i32>} : memref<1x32x16xf32, #tpu.memory_space<vmem>>, vector<1x32x16xf32>,
    %cst_61 = arith.constant dense<0.000000e+00> : vector<16x16xf32>
    %116 = tpu.matmul %112, %85, %cst_61 {dimension_numbers = #tpu.dot_dimension_numbers<[0], [0], [1], [1], [0, 1, 1, 1], [], []>} : vector<32x16xf32>, vector<32x16xf32>, vector<16x16xf32> -> vector<16x16xf32>
    %cst_62 = arith.constant dense<0.000000e+00> : vector<16x16xf32>
    %117 = tpu.matmul %112, %93, %cst_62 {dimension_numbers = #tpu.dot_dimension_numbers<[0], [0], [1], [1], [0, 1, 1, 1], [], []>} : vector<32x16xf32>, vector<32x16xf32>, vector<16x16xf32> -> vector<16x16xf32>
    %cst_63 = arith.constant dense<0.000000e+00> : vector<16x32xf32>
    %118 = tpu.matmul %112, %7, %cst_63 {dimension_numbers = #tpu.dot_dimension_numbers<[0], [0], [1], [1], [0, 1, 1, 1], [], []>} : vector<32x16xf32>, vector<32x32xf32>, vector<16x32xf32> -> vector<16x32xf32>
    %cst_64 = arith.constant dense<0.000000e+00> : vector<16x16xf32>
    %119 = tpu.matmul %118, %112, %cst_64 {dimension_numbers = #tpu.dot_dimension_numbers<[1], [0], [0], [1], [0, 0, 1, 1], [], []>} : vector<16x32xf32>, vector<32x16xf32>, vector<16x16xf32> -> vector<16x16xf32>
    %c160 = arith.constant 160 : index
    %c0_65 = arith.constant 0 : index
    %120 = vector.load %arg5[%c160, %c0_65] : memref<448x64xf32, #tpu.memory_space<vmem>>, vector<16x16xf32>
    %cst_66 = arith.constant dense<0.000000e+00> : vector<16x16xf32>
    %121 = tpu.matmul %116, %120, %cst_66 {dimension_numbers = #tpu.dot_dimension_numbers<[1], [0], [0], [1], [0, 0, 1, 1], [], []>} : vector<16x16xf32>, vector<16x16xf32>, vector<16x16xf32> -> vector<16x16xf32>
    %c176 = arith.constant 176 : index
    %c0_67 = arith.constant 0 : index
    %122 = vector.load %arg5[%c176, %c0_67] : memref<448x64xf32, #tpu.memory_space<vmem>>, vector<16x16xf32>
    %cst_68 = arith.constant dense<0.000000e+00> : vector<16x16xf32>
    %123 = tpu.matmul %117, %122, %cst_68 {dimension_numbers = #tpu.dot_dimension_numbers<[1], [0], [0], [1], [0, 0, 1, 1], [], []>} : vector<16x16xf32>, vector<16x16xf32>, vector<16x16xf32> -> vector<16x16xf32>
    %124 = arith.addf %121, %123 : vector<16x16xf32>
    %cst_69 = arith.constant dense<0.000000e+00> : vector<16x16xf32>
    %125 = tpu.matmul %119, %124, %cst_69 {dimension_numbers = #tpu.dot_dimension_numbers<[1], [0], [0], [1], [0, 0, 1, 1], [], []>} : vector<16x16xf32>, vector<16x16xf32>, vector<16x16xf32> -> vector<16x16xf32>
    %c384 = arith.constant 384 : index
    %c0_70 = arith.constant 0 : index
    %126 = vector.load %arg5[%c384, %c0_70] : memref<448x64xf32, #tpu.memory_space<vmem>>, vector<1x16xf32>
    %127 = vector.broadcast %126 : vector<1x16xf32> to vector<16x16xf32>
    %128 = arith.addf %125, %127 : vector<16x16xf32>
    %cst_71 = arith.constant 0.000000e+00 : f32
    %129 = vector.broadcast %cst_71 : f32 to vector<16x16xf32>
    %130 = arith.maximumf %128, %129 : vector<16x16xf32>
    %cst_72 = arith.constant dense<0.000000e+00> : vector<16x16xf32>
    %131 = tpu.matmul %119, %130, %cst_72 {dimension_numbers = #tpu.dot_dimension_numbers<[1], [0], [0], [1], [0, 0, 1, 1], [], []>} : vector<16x16xf32>, vector<16x16xf32>, vector<16x16xf32> -> vector<16x16xf32>
    %c192 = arith.constant 192 : index
    %c0_73 = arith.constant 0 : index
    %132 = vector.load %arg5[%c192, %c0_73] : memref<448x64xf32, #tpu.memory_space<vmem>>, vector<16x16xf32>
    %cst_74 = arith.constant dense<0.000000e+00> : vector<16x16xf32>
    %133 = tpu.matmul %131, %132, %cst_74 {dimension_numbers = #tpu.dot_dimension_numbers<[1], [0], [0], [1], [0, 0, 1, 1], [], []>} : vector<16x16xf32>, vector<16x16xf32>, vector<16x16xf32> -> vector<16x16xf32>
    %c392 = arith.constant 392 : index
    %c0_75 = arith.constant 0 : index
    %134 = vector.load %arg5[%c392, %c0_75] : memref<448x64xf32, #tpu.memory_space<vmem>>, vector<1x16xf32>
    %135 = vector.broadcast %134 : vector<1x16xf32> to vector<16x16xf32>
    %136 = arith.addf %133, %135 : vector<16x16xf32>
    %cst_76 = arith.constant dense<0.000000e+00> : vector<16xf32>
    %137 = vector.multi_reduction <add>, %85, %cst_76 [0] : vector<32x16xf32> to vector<16xf32>
    %138 = vector.shape_cast %137 : vector<16xf32> to vector<1x16xf32>
    %cst_77 = arith.constant dense<0.000000e+00> : vector<16xf32>
    %139 = vector.multi_reduction <add>, %93, %cst_77 [0] : vector<32x16xf32> to vector<16xf32>
    %140 = vector.shape_cast %139 : vector<16xf32> to vector<1x16xf32>
    %cst_78 = arith.constant dense<0.000000e+00> : vector<16xf32>
    %141 = vector.multi_reduction <add>, %130, %cst_78 [0] : vector<16x16xf32> to vector<16xf32>
    %142 = vector.shape_cast %141 : vector<16xf32> to vector<1x16xf32>
    %cst_79 = arith.constant dense<0.000000e+00> : vector<16xf32>
    %143 = vector.multi_reduction <add>, %136, %cst_79 [0] : vector<16x16xf32> to vector<16xf32>
    %144 = vector.shape_cast %143 : vector<16xf32> to vector<1x16xf32>
    %c208 = arith.constant 208 : index
    %c0_80 = arith.constant 0 : index
    %145 = vector.load %arg5[%c208, %c0_80] : memref<448x64xf32, #tpu.memory_space<vmem>>, vector<16x50xf32>
    %cst_81 = arith.constant dense<0.000000e+00> : vector<1x50xf32>
    %146 = tpu.matmul %138, %145, %cst_81 {dimension_numbers = #tpu.dot_dimension_numbers<[1], [0], [0], [1], [0, 0, 1, 1], [], []>} : vector<1x16xf32>, vector<16x50xf32>, vector<1x50xf32> -> vector<1x50xf32>
    %c224 = arith.constant 224 : index
    %c0_82 = arith.constant 0 : index
    %147 = vector.load %arg5[%c224, %c0_82] : memref<448x64xf32, #tpu.memory_space<vmem>>, vector<16x50xf32>
    %cst_83 = arith.constant dense<0.000000e+00> : vector<1x50xf32>
    %148 = tpu.matmul %140, %147, %cst_83 {dimension_numbers = #tpu.dot_dimension_numbers<[1], [0], [0], [1], [0, 0, 1, 1], [], []>} : vector<1x16xf32>, vector<16x50xf32>, vector<1x50xf32> -> vector<1x50xf32>
    %149 = arith.addf %146, %148 : vector<1x50xf32>
    %c240 = arith.constant 240 : index
    %c0_84 = arith.constant 0 : index
    %150 = vector.load %arg5[%c240, %c0_84] : memref<448x64xf32, #tpu.memory_space<vmem>>, vector<16x50xf32>
    %cst_85 = arith.constant dense<0.000000e+00> : vector<1x50xf32>
    %151 = tpu.matmul %142, %150, %cst_85 {dimension_numbers = #tpu.dot_dimension_numbers<[1], [0], [0], [1], [0, 0, 1, 1], [], []>} : vector<1x16xf32>, vector<16x50xf32>, vector<1x50xf32> -> vector<1x50xf32>
    %152 = arith.addf %149, %151 : vector<1x50xf32>
    %c256 = arith.constant 256 : index
    %c0_86 = arith.constant 0 : index
    %153 = vector.load %arg5[%c256, %c0_86] : memref<448x64xf32, #tpu.memory_space<vmem>>, vector<16x50xf32>
    %cst_87 = arith.constant dense<0.000000e+00> : vector<1x50xf32>
    %154 = tpu.matmul %144, %153, %cst_87 {dimension_numbers = #tpu.dot_dimension_numbers<[1], [0], [0], [1], [0, 0, 1, 1], [], []>} : vector<1x16xf32>, vector<16x50xf32>, vector<1x50xf32> -> vector<1x50xf32>
    %155 = arith.addf %152, %154 : vector<1x50xf32>
    %c400 = arith.constant 400 : index
    %c0_88 = arith.constant 0 : index
    %156 = vector.load %arg5[%c400, %c0_88] : memref<448x64xf32, #tpu.memory_space<vmem>>, vector<1x50xf32>
    %157 = arith.addf %155, %156 : vector<1x50xf32>
    %cst_89 = arith.constant 0.000000e+00 : f32
    %158 = vector.broadcast %cst_89 : f32 to vector<1x50xf32>
    %159 = arith.maximumf %157, %158 : vector<1x50xf32>
    %c272 = arith.constant 272 : index
    %c0_90 = arith.constant 0 : index
    %160 = vector.load %arg5[%c272, %c0_90] : memref<448x64xf32, #tpu.memory_space<vmem>>, vector<50x32xf32>
    %cst_91 = arith.constant dense<0.000000e+00> : vector<1x32xf32>
    %161 = tpu.matmul %159, %160, %cst_91 {dimension_numbers = #tpu.dot_dimension_numbers<[1], [0], [0], [1], [0, 0, 1, 1], [], []>} : vector<1x50xf32>, vector<50x32xf32>, vector<1x32xf32> -> vector<1x32xf32>
    %c408 = arith.constant 408 : index
    %c0_92 = arith.constant 0 : index
    %162 = vector.load %arg5[%c408, %c0_92] : memref<448x64xf32, #tpu.memory_space<vmem>>, vector<1x32xf32>
    %163 = arith.addf %161, %162 : vector<1x32xf32>
    %cst_93 = arith.constant 0.000000e+00 : f32
    %164 = vector.broadcast %cst_93 : f32 to vector<1x32xf32>
    %165 = arith.maximumf %163, %164 : vector<1x32xf32>
    %c328 = arith.constant 328 : index
    %c0_94 = arith.constant 0 : index
    %166 = vector.load %arg5[%c328, %c0_94] : memref<448x64xf32, #tpu.memory_space<vmem>>, vector<32x2xf32>
    %cst_95 = arith.constant dense<0.000000e+00> : vector<1x2xf32>
    %167 = tpu.matmul %165, %166, %cst_95 {dimension_numbers = #tpu.dot_dimension_numbers<[1], [0], [0], [1], [0, 0, 1, 1], [], []>} : vector<1x32xf32>, vector<32x2xf32>, vector<1x2xf32> -> vector<1x2xf32>
    %c416 = arith.constant 416 : index
    %c0_96 = arith.constant 0 : index
    %168 = vector.load %arg5[%c416, %c0_96] : memref<448x64xf32, #tpu.memory_space<vmem>>, vector<1x2xf32>
    %169 = arith.addf %167, %168 : vector<1x2xf32>
    %cst_97 = arith.constant dense<0xFF800000> : vector<1xf32>
    %170 = vector.multi_reduction <maximumf>, %169, %cst_97 [1] : vector<1x2xf32> to vector<1xf32>
    %171 = vector.shape_cast %170 : vector<1xf32> to vector<1x1xf32>
    %172 = vector.broadcast %171 : vector<1x1xf32> to vector<1x2xf32>
    %173 = arith.subf %169, %172 : vector<1x2xf32>
    %174 = math.exp %173 : vector<1x2xf32>
    %cst_98 = arith.constant dense<0.000000e+00> : vector<1xf32>
    %175 = vector.multi_reduction <add>, %174, %cst_98 [1] : vector<1x2xf32> to vector<1xf32>
    %176 = vector.shape_cast %175 : vector<1xf32> to vector<1x1xf32>
    %177 = math.log %176 : vector<1x1xf32>
    %178 = vector.broadcast %177 : vector<1x1xf32> to vector<1x2xf32>
    %179 = arith.subf %173, %178 : vector<1x2xf32>
    %c0_99 = arith.constant 0 : index
    %c0_100 = arith.constant 0 : index
    %c0_101 = arith.constant 0 : index
    %180 = vector.load %arg6[%c0_99, %c0_100, %c0_101] : memref<1x1x2xf32, #tpu.memory_space<vmem>>, vector<1x1x2xf32>
    %181 = vector.shape_cast %180 : vector<1x1x2xf32> to vector<1x2xf32>
    %182 = vector.shape_cast %179 : vector<1x2xf32> to vector<1x1x2xf32>
    tpu.vector_store %arg6[%c0_99, %c0_100, %c0_101], %182 {strides = array<i32>} : memref<1x1x2xf32, #tpu.memory_space<vmem>>, vector<1x1x2xf32>,
    return
  }
  func.func @transform_0(%arg0: i32) -> (i32, i32, i32) {
    %c0_i32 = arith.constant 0 : i32
    %c0_i32_0 = arith.constant 0 : i32
    %c0_i32_1 = arith.constant 0 : i32
    return %arg0, %c0_i32, %c0_i32_0 : i32, i32, i32
  }
  func.func @transform_1(%arg0: i32) -> (i32, i32, i32) {
    %c0_i32 = arith.constant 0 : i32
    %c0_i32_0 = arith.constant 0 : i32
    %c0_i32_1 = arith.constant 0 : i32
    return %arg0, %c0_i32, %c0_i32_0 : i32, i32, i32
  }
  func.func @transform_2(%arg0: i32) -> (i32, i32, i32) {
    %c0_i32 = arith.constant 0 : i32
    %c0_i32_0 = arith.constant 0 : i32
    %c0_i32_1 = arith.constant 0 : i32
    return %arg0, %c0_i32, %c0_i32_0 : i32, i32, i32
  }
  func.func @transform_3(%arg0: i32) -> (i32, i32, i32) {
    %c0_i32 = arith.constant 0 : i32
    %c0_i32_0 = arith.constant 0 : i32
    %c0_i32_1 = arith.constant 0 : i32
    return %arg0, %c0_i32, %c0_i32_0 : i32, i32, i32
  }
  func.func @transform_4(%arg0: i32) -> (i32, i32) {
    %c0_i32 = arith.constant 0 : i32
    %c0_i32_0 = arith.constant 0 : i32
    %c0_i32_1 = arith.constant 0 : i32
    return %c0_i32, %c0_i32_0 : i32, i32
  }
  func.func @transform_5(%arg0: i32) -> (i32, i32, i32) {
    %c0_i32 = arith.constant 0 : i32
    %c0_i32_0 = arith.constant 0 : i32
    %c0_i32_1 = arith.constant 0 : i32
    return %arg0, %c0_i32, %c0_i32_0 : i32, i32, i32
  }
  func.func @transform_6(%arg0: i32) -> (i32, i32, i32) {
    %c0_i32 = arith.constant 0 : i32
    %c0_i32_0 = arith.constant 0 : i32
    %c0_i32_1 = arith.constant 0 : i32
    return %arg0, %c0_i32, %c0_i32_0 : i32, i32, i32
  }
}

</mosaic_0001>

<llo_original>
// kernel: batch_wrap_diffgat_pool_forward.1
$region0: #{batch_wrap_diffgat_pool_forward.1}
  #allocation0 [shape = 'u32[]', space=smem, size = 0x4, offset = 0x4, fixed_abs, tag = 'smem constant byte address 0x4 - core index']
  #allocation1 [shape = 'u32[144,128]{1,0:T(1,128)}', space=vmem, size = 0x12000, scoped, tag = 'internal scratch']
  %s0 = inlined_call_operand.vmem [shape: f32[2,32,2], index: 0, kind: input, shape index: {}]
  %s1 = inlined_call_operand.vmem [shape: f32[2,32,8], index: 1, kind: input, shape index: {}]
  %s2 = inlined_call_operand.vmem [shape: f32[2,32,4], index: 2, kind: input, shape index: {}]
  %s3 = inlined_call_operand.vmem [shape: f32[2,32,32], index: 3, kind: input, shape index: {}]
  %s4 = inlined_call_operand.vmem [shape: f32[448,64], index: 4, kind: input, shape index: {}]
  %s5 = inlined_call_operand.hbm [shape: f32[2,1,2], index: 5, kind: output, shape index: {0}]
  %s6 = inlined_call_operand.vmem [shape: f32[2,32,16], index: 6, kind: output, shape index: {1}]
  %7 = xla_tuple %s5, %s6
  %s8 = sld [smem:[#allocation0]]
  $region61: #{batch_wrap_diffgat_pool_forward.1} parent=0
    _
  %s10 = ssub.s32 1, %s8
  %s11 = scalar_select 0, %s10, %s8
  $region1: #{batch_wrap_diffgat_pool_forward.1} parent=0
    #allocation2 [shape = 'u8[1024]{0}', space=vmem, size = 0x400, scoped, tag = 'output window, operand 0']
    #allocation3 [shape = 's32[2]{0}', space=sflag, size = 0x8, scoped, tag = 'scoped memory for batch_wrap_diffgat_pool_forward.1']
    %12 = vsyncpa [#allocation3], 0
    %s13 = scalar_lea.sflag [#allocation3], 1
    %14 = vsyncpa %s13, 0
    loop: start=0, step=1, limit=4
    $region2: #{batch_wrap_diffgat_pool_forward.1} parent=1 // loop_pre_header
      _
    $region3: #{batch_wrap_diffgat_pool_forward.1} parent=1 // loop_header
      %s16 = sphi 0, %s20
      %p17 = scmp.ge.s32.totalorder %s16, 4
      %s26 = sphi 0, %s28
      %s29 = sphi 0, %s26
      %s30 = sphi 0, %s29
      %s46 = sphi 0, %s30
      %s52 = sphi 0, %s54
      %s55 = sphi 0, %s52
      %s56 = sphi 0, %s55
      %s72 = sphi 0, %s56
      %s78 = sphi 0, %s80
      %s81 = sphi 0, %s78
      %s82 = sphi 0, %s81
      %s98 = sphi 0, %s82
      %s104 = sphi 0, %s106
      %s107 = sphi 0, %s104
      %s108 = sphi 0, %s107
      %s124 = sphi 0, %s108
      %s128 = sphi 0, %s128
      %s130 = sphi 0, %s128
      %s131 = sphi 0, %s130
      %s145 = sphi 0, %s131
      %s151 = sphi 0, %s153
      %s154 = sphi 0, %s151
      %s155 = sphi 0, %s154
      %s171 = sphi 0, %s155
      %s177 = sphi 0, %s179
      %s180 = sphi 0, %s177
      %s181 = sphi 0, %s180
      %s197 = sphi 0, %s181
    $region4: #{batch_wrap_diffgat_pool_forward.1} parent=1 // loop_header_branch
      %19 = sbr.rel (%p17) target = $region8
    $region5: #{batch_wrap_diffgat_pool_forward.1} parent=1 // loop_body
      %s21 = ssub.s32 %s16, 1
      %s22 = ssub.s32 %s16, 2
      %s23 = sadd.s32 %s16, 1
      %s24 = ssub.s32 %s16, %s23
      %p25 = scmp.eq.s32.totalorder %s24, 0
      %s27 = sadd.s32 %s26, 1
      %s28 = scalar_select %p25, %s26, %s27
      %p31 = pneg %p25
      %p32 = scmp.eq.s32.totalorder %s16, 1
      %p33 = por %p31, %p32
      %p34 = scmp.ne.s32.totalorder %s26, %s29
      %p35 = scmp.eq.s32.totalorder %s16, 0
      %p36 = por %p34, %p35
      %p37 = scmp.ne.s32.totalorder %s26, %s29
      %p38 = scmp.eq.s32.totalorder %s21, 1
      %p39 = por %p37, %p38
      %p40 = scmp.ne.s32.totalorder %s29, %s30
      %p41 = scmp.eq.s32.totalorder %s21, 0
      %p42 = por %p40, %p41
      %p43 = scmp.ne.s32.totalorder %s29, %s30
      %p44 = scmp.eq.s32.totalorder %s22, 1
      %p45 = por %p43, %p44
      %p47 = scmp.ne.s32.totalorder %s30, %s46
      %p48 = scmp.eq.s32.totalorder %s22, 0
      %p49 = por %p47, %p48
      %s50 = ssub.s32 %s16, %s23
      %p51 = scmp.eq.s32.totalorder %s50, 0
      %s53 = sadd.s32 %s52, 1
      %s54 = scalar_select %p51, %s52, %s53
      %p57 = pneg %p51
      %p58 = scmp.eq.s32.totalorder %s16, 1
      %p59 = por %p57, %p58
      %p60 = scmp.ne.s32.totalorder %s52, %s55
      %p61 = scmp.eq.s32.totalorder %s16, 0
      %p62 = por %p60, %p61
      %p63 = scmp.ne.s32.totalorder %s52, %s55
      %p64 = scmp.eq.s32.totalorder %s21, 1
      %p65 = por %p63, %p64
      %p66 = scmp.ne.s32.totalorder %s55, %s56
      %p67 = scmp.eq.s32.totalorder %s21, 0
      %p68 = por %p66, %p67
      %p69 = scmp.ne.s32.totalorder %s55, %s56
      %p70 = scmp.eq.s32.totalorder %s22, 1
      %p71 = por %p69, %p70
      %p73 = scmp.ne.s32.totalorder %s56, %s72
      %p74 = scmp.eq.s32.totalorder %s22, 0
      %p75 = por %p73, %p74
      %s76 = ssub.s32 %s16, %s23
      %p77 = scmp.eq.s32.totalorder %s76, 0
      %s79 = sadd.s32 %s78, 1
      %s80 = scalar_select %p77, %s78, %s79
      %p83 = pneg %p77
      %p84 = scmp.eq.s32.totalorder %s16, 1
      %p85 = por %p83, %p84
      %p86 = scmp.ne.s32.totalorder %s78, %s81
      %p87 = scmp.eq.s32.totalorder %s16, 0
      %p88 = por %p86, %p87
      %p89 = scmp.ne.s32.totalorder %s78, %s81
      %p90 = scmp.eq.s32.totalorder %s21, 1
      %p91 = por %p89, %p90
      %p92 = scmp.ne.s32.totalorder %s81, %s82
      %p93 = scmp.eq.s32.totalorder %s21, 0
      %p94 = por %p92, %p93
      %p95 = scmp.ne.s32.totalorder %s81, %s82
      %p96 = scmp.eq.s32.totalorder %s22, 1
      %p97 = por %p95, %p96
      %p99 = scmp.ne.s32.totalorder %s82, %s98
      %p100 = scmp.eq.s32.totalorder %s22, 0
      %p101 = por %p99, %p100
      %s102 = ssub.s32 %s16, %s23
      %p103 = scmp.eq.s32.totalorder %s102, 0
      %s105 = sadd.s32 %s104, 1
      %s106 = scalar_select %p103, %s104, %s105
      %p109 = pneg %p103
      %p110 = scmp.eq.s32.totalorder %s16, 1
      %p111 = por %p109, %p110
      %p112 = scmp.ne.s32.totalorder %s104, %s107
      %p113 = scmp.eq.s32.totalorder %s16, 0
      %p114 = por %p112, %p113
      %p115 = scmp.ne.s32.totalorder %s104, %s107
      %p116 = scmp.eq.s32.totalorder %s21, 1
      %p117 = por %p115, %p116
      %p118 = scmp.ne.s32.totalorder %s107, %s108
      %p119 = scmp.eq.s32.totalorder %s21, 0
      %p120 = por %p118, %p119
      %p121 = scmp.ne.s32.totalorder %s107, %s108
      %p122 = scmp.eq.s32.totalorder %s22, 1
      %p123 = por %p121, %p122
      %p125 = scmp.ne.s32.totalorder %s108, %s124
      %p126 = scmp.eq.s32.totalorder %s22, 0
      %p127 = por %p125, %p126
      %s129 = sadd.s32 %s128, 1
      %p132 = scmp.eq.s32.totalorder %s16, 1
      %p133 = scmp.ne.s32.totalorder %s128, %s130
      %p134 = scmp.eq.s32.totalorder %s16, 0
      %p135 = por %p133, %p134
      %p136 = scmp.ne.s32.totalorder %s128, %s130
      %p137 = scmp.eq.s32.totalorder %s21, 1
      %p138 = por %p136, %p137
      %p139 = scmp.ne.s32.totalorder %s130, %s131
      %p140 = scmp.eq.s32.totalorder %s21, 0
      %p141 = por %p139, %p140
      %p142 = scmp.ne.s32.totalorder %s130, %s131
      %p143 = scmp.eq.s32.totalorder %s22, 1
      %p144 = por %p142, %p143
      %p146 = scmp.ne.s32.totalorder %s131, %s145
      %p147 = scmp.eq.s32.totalorder %s22, 0
      %p148 = por %p146, %p147
      %s149 = ssub.s32 %s16, %s23
      %p150 = scmp.eq.s32.totalorder %s149, 0
      %s152 = sadd.s32 %s151, 1
      %s153 = scalar_select %p150, %s151, %s152
      %p156 = pneg %p150
      %p157 = scmp.eq.s32.totalorder %s16, 1
      %p158 = por %p156, %p157
      %p159 = scmp.ne.s32.totalorder %s151, %s154
      %p160 = scmp.eq.s32.totalorder %s16, 0
      %p161 = por %p159, %p160
      %p162 = scmp.ne.s32.totalorder %s151, %s154
      %p163 = scmp.eq.s32.totalorder %s21, 1
      %p164 = por %p162, %p163
      %p165 = scmp.ne.s32.totalorder %s154, %s155
      %p166 = scmp.eq.s32.totalorder %s21, 0
      %p167 = por %p165, %p166
      %p168 = scmp.ne.s32.totalorder %s154, %s155
      %p169 = scmp.eq.s32.totalorder %s22, 1
      %p170 = por %p168, %p169
      %p172 = scmp.ne.s32.totalorder %s155, %s171
      %p173 = scmp.eq.s32.totalorder %s22, 0
      %p174 = por %p172, %p173
      %s175 = ssub.s32 %s16, %s23
      %p176 = scmp.eq.s32.totalorder %s175, 0
      %s178 = sadd.s32 %s177, 1
      %s179 = scalar_select %p176, %s177, %s178
      %p182 = pneg %p176
      %p183 = scmp.eq.s32.totalorder %s16, 1
      %p184 = por %p182, %p183
      %p185 = scmp.ne.s32.totalorder %s177, %s180
      %p186 = scmp.eq.s32.totalorder %s16, 0
      %p187 = por %p185, %p186
      %p188 = scmp.ne.s32.totalorder %s177, %s180
      %p189 = scmp.eq.s32.totalorder %s21, 1
      %p190 = por %p188, %p189
      %p191 = scmp.ne.s32.totalorder %s180, %s181
      %p192 = scmp.eq.s32.totalorder %s21, 0
      %p193 = por %p191, %p192
      %p194 = scmp.ne.s32.totalorder %s180, %s181
      %p195 = scmp.eq.s32.totalorder %s22, 1
      %p196 = por %p194, %p195
      %p198 = scmp.ne.s32.totalorder %s181, %s197
      %p199 = scmp.eq.s32.totalorder %s22, 0
      %p200 = por %p198, %p199
      %p201 = scmp.le.s32.totalorder 1, %s16
      %p202 = scmp.lt.s32.totalorder %s16, 3
      %p203 = pnand %p201, %p202
      %p204 = pneg %p203
      // Predicated region
      $region9: #{batch_wrap_diffgat_pool_forward.1} parent=5 // pred_check
        _
      $region10: #{batch_wrap_diffgat_pool_forward.1} parent=5 // pred_check_branch
        %206 = sbr.rel (%p203) target = $region12
      $region11: #{batch_wrap_diffgat_pool_forward.1} parent=5 // pred_region
        %s207 = ssub.s32 %s16, 1
        // Predicated region
        $region13: #{batch_wrap_diffgat_pool_forward.1} parent=11 // pred_check
          %p208 = pneg %p141
        $region14: #{batch_wrap_diffgat_pool_forward.1} parent=11 // pred_check_branch
          %210 = sbr.rel (%p208) target = $region16
        $region15: #{batch_wrap_diffgat_pool_forward.1} parent=11 // pred_region
          _
        $region16: #{batch_wrap_diffgat_pool_forward.1} parent=11 // pred_fallthru
          _
      $region12: #{batch_wrap_diffgat_pool_forward.1} parent=5 // pred_fallthru
        _
      %p211 = scmp.lt.s32.totalorder %s16, 2
      // Predicated region
      $region17: #{batch_wrap_diffgat_pool_forward.1} parent=5 // pred_check
        %p212 = pneg %p211
      $region18: #{batch_wrap_diffgat_pool_forward.1} parent=5 // pred_check_branch
        %214 = sbr.rel (%p212) target = $region20
      $region19: #{batch_wrap_diffgat_pool_forward.1} parent=5 // pred_region
        // Predicated region
        $region21: #{batch_wrap_diffgat_pool_forward.1} parent=19 // pred_check
          %p215 = pneg %p36
        $region22: #{batch_wrap_diffgat_pool_forward.1} parent=19 // pred_check_branch
          %217 = sbr.rel (%p215) target = $region24
        $region23: #{batch_wrap_diffgat_pool_forward.1} parent=19 // pred_region
          %p218 = scmp.lt.s32.totalorder %s16, 1
          %s219 = scalar_select %p218, %s16, 1
          %s220 = smul.addr %s219, 4
          %s221 = smul.addr %s220, 8
          %s222 = scalar_lea.vmem %s0, %s221
        $region24: #{batch_wrap_diffgat_pool_forward.1} parent=19 // pred_fallthru
          _
        // Predicated region
        $region25: #{batch_wrap_diffgat_pool_forward.1} parent=19 // pred_check
          %p223 = pneg %p62
        $region26: #{batch_wrap_diffgat_pool_forward.1} parent=19 // pred_check_branch
          %225 = sbr.rel (%p223) target = $region28
        $region27: #{batch_wrap_diffgat_pool_forward.1} parent=19 // pred_region
          %p226 = scmp.lt.s32.totalorder %s16, 1
          %s227 = scalar_select %p226, %s16, 1
          %s228 = smul.addr %s227, 4
          %s229 = smul.addr %s228, 8
          %s230 = scalar_lea.vmem %s1, %s229
        $region28: #{batch_wrap_diffgat_pool_forward.1} parent=19 // pred_fallthru
          _
        // Predicated region
        $region29: #{batch_wrap_diffgat_pool_forward.1} parent=19 // pred_check
          %p231 = pneg %p88
        $region30: #{batch_wrap_diffgat_pool_forward.1} parent=19 // pred_check_branch
          %233 = sbr.rel (%p231) target = $region32
        $region31: #{batch_wrap_diffgat_pool_forward.1} parent=19 // pred_region
          %p234 = scmp.lt.s32.totalorder %s16, 1
          %s235 = scalar_select %p234, %s16, 1
          %s236 = smul.addr %s235, 4
          %s237 = smul.addr %s236, 8
          %s238 = scalar_lea.vmem %s2, %s237
        $region32: #{batch_wrap_diffgat_pool_forward.1} parent=19 // pred_fallthru
          _
        // Predicated region
        $region33: #{batch_wrap_diffgat_pool_forward.1} parent=19 // pred_check
          %p239 = pneg %p114
        $region34: #{batch_wrap_diffgat_pool_forward.1} parent=19 // pred_check_branch
          %241 = sbr.rel (%p239) target = $region36
        $region35: #{batch_wrap_diffgat_pool_forward.1} parent=19 // pred_region
          %p242 = scmp.lt.s32.totalorder %s16, 1
          %s243 = scalar_select %p242, %s16, 1
          %s244 = smul.addr %s243, 4
          %s245 = smul.addr %s244, 8
          %s246 = scalar_lea.vmem %s3, %s245
        $region36: #{batch_wrap_diffgat_pool_forward.1} parent=19 // pred_fallthru
          _
      $region20: #{batch_wrap_diffgat_pool_forward.1} parent=5 // pred_fallthru
        _
      %p247 = scmp.le.s32.totalorder 1, %s16
      %p248 = scmp.lt.s32.totalorder %s16, 3
      %p249 = pnand %p247, %p248
      %p250 = pneg %p249
      // Predicated region
      $region37: #{batch_wrap_diffgat_pool_forward.1} parent=5 // pred_check
        _
      $region38: #{batch_wrap_diffgat_pool_forward.1} parent=5 // pred_check_branch
        %252 = sbr.rel (%p249) target = $region40
      $region39: #{batch_wrap_diffgat_pool_forward.1} parent=5 // pred_region
        %s253 = ssub.s32 %s16, 1
        %p254 = scmp.lt.s32.totalorder %s21, 1
        %s255 = scalar_select %p254, %s21, 1
        %s256 = smul.addr %s255, 4
        %s257 = smul.addr %s256, 8
        %s258 = scalar_lea.vmem %s0, %s257
        %p259 = pneg %p42
        %p260 = pneg %p39
        %p261 = scmp.lt.s32.totalorder %s21, 1
        %s262 = scalar_select %p261, %s21, 1
        %s263 = smul.addr %s262, 4
        %s264 = smul.addr %s263, 8
        %s265 = scalar_lea.vmem %s1, %s264
        %p266 = pneg %p68
        %p267 = pneg %p65
        %p268 = scmp.lt.s32.totalorder %s21, 1
        %s269 = scalar_select %p268, %s21, 1
        %s270 = smul.addr %s269, 4
        %s271 = smul.addr %s270, 8
        %s272 = scalar_lea.vmem %s2, %s271
        %p273 = pneg %p94
        %p274 = pneg %p91
        %p275 = scmp.lt.s32.totalorder %s21, 1
        %s276 = scalar_select %p275, %s21, 1
        %s277 = smul.addr %s276, 4
        %s278 = smul.addr %s277, 8
        %s279 = scalar_lea.vmem %s3, %s278
        %p280 = pneg %p120
        %p281 = pneg %p117
        %p282 = pneg %p141
        %p283 = pneg %p138
        %p284 = pneg %p167
        %p285 = pneg %p164
        %s286 = sand.u32 %s154, 1
        %s287 = scalar_lea.sflag [#allocation3], %s286
        %s288 = sand.u32 %s154, 1
        %s289 = scalar_lea.vmem [#allocation2], %s288
        %p290 = pneg %p193
        %p291 = pneg %p190
        %p292 = scmp.lt.s32.totalorder %s21, 1
        %s293 = scalar_select %p292, %s21, 1
        %s294 = smul.addr %s293, 4
        %s295 = smul.addr %s294, 8
        %s296 = scalar_lea.vmem %s6, %s295
        %p297 = scmp.lt.s32.totalorder %s21, 1
        %s298 = scalar_select %p297, %s21, 1
        %s299 = smul.addr %s298, 4
        %s300 = smul.addr %s299, 8
        %s301 = scalar_lea.vmem %s0, %s300
        %p302 = scmp.lt.s32.totalorder %s21, 1
        %s303 = scalar_select %p302, %s21, 1
        %s304 = smul.addr %s303, 4
        %s305 = smul.addr %s304, 8
        %s306 = scalar_lea.vmem %s1, %s305
        %p307 = scmp.lt.s32.totalorder %s21, 1
        %s308 = scalar_select %p307, %s21, 1
        %s309 = smul.addr %s308, 4
        %s310 = smul.addr %s309, 8
        %s311 = scalar_lea.vmem %s2, %s310
        %p312 = scmp.lt.s32.totalorder %s21, 1
        %s313 = scalar_select %p312, %s21, 1
        %s314 = smul.addr %s313, 4
        %s315 = smul.addr %s314, 8
        %s316 = scalar_lea.vmem %s3, %s315
        %p317 = scmp.lt.s32.totalorder %s21, 1
        %s318 = scalar_select %p317, %s21, 1
        %s319 = smul.addr %s318, 4
        %s320 = smul.addr %s319, 8
        %s321 = scalar_lea.vmem %s6, %s320
        %v322 = vld [vmem:[%s301] sm:$0xff]
        %v323 = vld [vmem:[%s301 + $0x8] sm:$0xff]
        %v324 = vld [vmem:[%s301 + $0x10] sm:$0xff]
        %v325 = vld [vmem:[%s301 + $0x18] sm:$0xff]
        %v326 = vld [vmem:[%s306] sm:$0xff]
        %v327 = vld [vmem:[%s306 + $0x8] sm:$0xff]
        %v328 = vld [vmem:[%s306 + $0x10] sm:$0xff]
        %v329 = vld [vmem:[%s306 + $0x18] sm:$0xff]
        %v330 = vld [vmem:[%s311] sm:$0xff]
        %v331 = vld [vmem:[%s311 + $0x8] sm:$0xff]
        %v332 = vld [vmem:[%s311 + $0x10] sm:$0xff]
        %v333 = vld [vmem:[%s311 + $0x18] sm:$0xff]
        %v334 = vld [vmem:[%s316] sm:$0xff]
        %v335 = vld [vmem:[%s316 + $0x8] sm:$0xff]
        %v336 = vld [vmem:[%s316 + $0x10] sm:$0xff]
        %v337 = vld [vmem:[%s316 + $0x18] sm:$0xff]
        %v338 = vld [vmem:[%s4 + $0x28] sm:$0x3]
        %v339 = vld [vmem:[%s4 + $0x1a8] sm:$0x1]
        %v340 = vlaneseq
        %v341 = vshrl.u32 %v340, 7
        %v342 = vsub.s32 0, %v341
        %v343 = vrot.slane %v339, %v342
        %vm344 = vcmask 15360
        %v346 = vsel %vm344, %v322, 0
        %v349 = vsel %vm344, %v323, 0
        %v352 = vsel %vm344, %v324, 0
        %v355 = vsel %vm344, %v325, 0
        %vm357 = vcmask 1041408
        %v359 = vsel %vm357, %v338, 0
        %361 = vmatprep.subr.mxu0 0.0
        %362 = vmatpush1.msra.mxu0 %v359
        %363 = vmatprep.subr.mxu0 0.0
        %364 = vmatpush1.msra.mxu0 0.0
        %365 = vmatprep.subr.mxu0 0.0
        %366 = vmatpush1.msra.mxu0 0.0
        %367 = vmatprep.subr.mxu0 0.0
        %368 = vmatpush1.msra.mxu0 0.0
        %369 = vmatprep.subr.mxu0 0.0
        %370 = vmatpush1.msra.mxu0 0.0
        %371 = vmatprep.subr.mxu0 0.0
        %372 = vmatpush1.msra.mxu0 0.0
        %373 = vmatprep.subr.mxu0 0.0
        %374 = vmatpush1.msra.mxu0 0.0
        %375 = vmatprep.subr.mxu0 0.0
        %376 = vmatpush1.msra.mxu0 0.0
        %377 = vmatprep.subr.mxu0 0.0
        %378 = vmatpush1.msra.mxu0 0.0
        %379 = vmatprep.subr.mxu0 0.0
        %380 = vmatpush1.msra.mxu0 0.0
        %381 = vmatprep.subr.mxu0 0.0
        %382 = vmatpush1.msra.mxu0 0.0
        %383 = vmatprep.subr.mxu0 0.0
        %384 = vmatpush1.msra.mxu0 0.0
        %385 = vmatprep.subr.mxu0 0.0
        %386 = vmatpush1.msra.mxu0 0.0
        %387 = vmatprep.subr.mxu0 0.0
        %388 = vmatpush1.msra.mxu0 0.0
        %389 = vmatprep.subr.mxu0 0.0
        %390 = vmatpush1.msra.mxu0 0.0
        %391 = vmatprep.subr.mxu0 0.0
        %392 = vmatpush1.msra.mxu0 0.0
        %393 = vmatprep.subr.mxu0 0.0
        %394 = vmatpush1.msra.mxu0 0.0
        %395 = vmatprep.subr.mxu0 0.0
        %396 = vmatpush1.msra.mxu0 0.0
        %397 = vmatprep.subr.mxu0 0.0
        %398 = vmatpush1.msra.mxu0 0.0
        %399 = vmatprep.subr.mxu0 0.0
        %400 = vmatpush1.msra.mxu0 0.0
        %401 = vmatprep.subr.mxu0 0.0
        %402 = vmatpush1.msra.mxu0 0.0
        %403 = vmatprep.subr.mxu0 0.0
        %404 = vmatpush1.msra.mxu0 0.0
        %405 = vmatprep.subr.mxu0 0.0
        %406 = vmatpush1.msra.mxu0 0.0
        %407 = vmatprep.subr.mxu0 0.0
        %408 = vmatpush1.msra.mxu0 0.0
        %409 = vmatprep.subr.mxu0 0.0
        %410 = vmatpush1.msra.mxu0 0.0
        %411 = vmatprep.subr.mxu0 0.0
        %412 = vmatpush1.msra.mxu0 0.0
        %413 = vmatprep.subr.mxu0 0.0
        %414 = vmatpush1.msra.mxu0 0.0
        %415 = vmatprep.subr.mxu0 0.0
        %416 = vmatpush1.msra.mxu0 0.0
        %417 = vmatprep.subr.mxu0 0.0
        %418 = vmatpush1.msra.mxu0 0.0
        %419 = vmatprep.subr.mxu0 0.0
        %420 = vmatpush1.msra.mxu0 0.0
        %421 = vmatprep.subr.mxu0 0.0
        %422 = vmatpush1.msra.mxu0 0.0
        %423 = vmatprep.subr.mxu0 0.0
        %424 = vmatpush1.msra.mxu0 0.0
        %425 = vmatprep.mubr.f32.mxu0 0.0
        %426 = vmatmul.mubr.f32.gmra.mrb[0].mxu0 %v346
        %v427 = vpop.f32.mrb[0].mxu0
        %v428 = vadd.f32 %v343, %v427
        %v429 = vpop.f32.mrb[0].mxu0
        %430 = vmatprep.mubr.f32.mxu0 0.0
        %431 = vmatmul.mubr.f32.gmra.mrb[0].mxu0 %v349
        %v432 = vpop.f32.mrb[0].mxu0
        %v433 = vadd.f32 %v343, %v432
        %v434 = vpop.f32.mrb[0].mxu0
        %435 = vmatprep.mubr.f32.mxu0 0.0
        %436 = vmatmul.mubr.f32.gmra.mrb[0].mxu0 %v352
        %v437 = vpop.f32.mrb[0].mxu0
        %v438 = vadd.f32 %v343, %v437
        %v439 = vpop.f32.mrb[0].mxu0
        %440 = vmatprep.mubr.f32.mxu0 0.0
        %441 = vmatmul.mubr.f32.gmra.mrb[0].mxu0 %v355
        %v442 = vpop.f32.mrb[0].mxu0
        %v443 = vadd.f32 %v343, %v442
        %v444 = vpop.f32.mrb[0].mxu0
        %445 = vdwg.mxu0
        %v446 = vld [vmem:[%s4 + $0x30] sm:$0xff]
        %v447 = vld [vmem:[%s4 + $0x1b0] sm:$0x1]
        %v448 = vlaneseq
        %v449 = vshrl.u32 %v448, 7
        %v450 = vsub.s32 0, %v449
        %v451 = vrot.slane %v447, %v450
        %vm452 = vcmask 64512
        %v454 = vsel %vm452, %v326, 0
        %v457 = vsel %vm452, %v327, 0
        %v460 = vsel %vm452, %v328, 0
        %v463 = vsel %vm452, %v329, 0
        %465 = vmatprep.subr.mxu0 0.0
        %466 = vmatpush1.msra.mxu0 %v446
        %467 = vmatprep.subr.mxu0 0.0
        %468 = vmatpush1.msra.mxu0 0.0
        %469 = vmatprep.subr.mxu0 0.0
        %470 = vmatpush1.msra.mxu0 0.0
        %471 = vmatprep.subr.mxu0 0.0
        %472 = vmatpush1.msra.mxu0 0.0
        %473 = vmatprep.subr.mxu0 0.0
        %474 = vmatpush1.msra.mxu0 0.0
        %475 = vmatprep.subr.mxu0 0.0
        %476 = vmatpush1.msra.mxu0 0.0
        %477 = vmatprep.subr.mxu0 0.0
        %478 = vmatpush1.msra.mxu0 0.0
        %479 = vmatprep.subr.mxu0 0.0
        %480 = vmatpush1.msra.mxu0 0.0
        %481 = vmatprep.subr.mxu0 0.0
        %482 = vmatpush1.msra.mxu0 0.0
        %483 = vmatprep.subr.mxu0 0.0
        %484 = vmatpush1.msra.mxu0 0.0
        %485 = vmatprep.subr.mxu0 0.0
        %486 = vmatpush1.msra.mxu0 0.0
        %487 = vmatprep.subr.mxu0 0.0
        %488 = vmatpush1.msra.mxu0 0.0
        %489 = vmatprep.subr.mxu0 0.0
        %490 = vmatpush1.msra.mxu0 0.0
        %491 = vmatprep.subr.mxu0 0.0
        %492 = vmatpush1.msra.mxu0 0.0
        %493 = vmatprep.subr.mxu0 0.0
        %494 = vmatpush1.msra.mxu0 0.0
        %495 = vmatprep.subr.mxu0 0.0
        %496 = vmatpush1.msra.mxu0 0.0
        %497 = vmatprep.subr.mxu0 0.0
        %498 = vmatpush1.msra.mxu0 0.0
        %499 = vmatprep.subr.mxu0 0.0
        %500 = vmatpush1.msra.mxu0 0.0
        %501 = vmatprep.subr.mxu0 0.0
        %502 = vmatpush1.msra.mxu0 0.0
        %503 = vmatprep.subr.mxu0 0.0
        %504 = vmatpush1.msra.mxu0 0.0
        %505 = vmatprep.subr.mxu0 0.0
        %506 = vmatpush1.msra.mxu0 0.0
        %507 = vmatprep.subr.mxu0 0.0
        %508 = vmatpush1.msra.mxu0 0.0
        %509 = vmatprep.subr.mxu0 0.0
        %510 = vmatpush1.msra.mxu0 0.0
        %511 = vmatprep.subr.mxu0 0.0
        %512 = vmatpush1.msra.mxu0 0.0
        %513 = vmatprep.subr.mxu0 0.0
        %514 = vmatpush1.msra.mxu0 0.0
        %515 = vmatprep.subr.mxu0 0.0
        %516 = vmatpush1.msra.mxu0 0.0
        %517 = vmatprep.subr.mxu0 0.0
        %518 = vmatpush1.msra.mxu0 0.0
        %519 = vmatprep.subr.mxu0 0.0
        %520 = vmatpush1.msra.mxu0 0.0
        %521 = vmatprep.subr.mxu0 0.0
        %522 = vmatpush1.msra.mxu0 0.0
        %523 = vmatprep.subr.mxu0 0.0
        %524 = vmatpush1.msra.mxu0 0.0
        %525 = vmatprep.subr.mxu0 0.0
        %526 = vmatpush1.msra.mxu0 0.0
        %527 = vmatprep.subr.mxu0 0.0
        %528 = vmatpush1.msra.mxu0 0.0
        %529 = vmatprep.mubr.f32.mxu0 0.0
        %530 = vmatmul.mubr.f32.gmra.mrb[0].mxu0 %v454
        %v531 = vpop.f32.mrb[0].mxu0
        %v532 = vadd.f32 %v451, %v531
        %v533 = vpop.f32.mrb[0].mxu0
        %534 = vmatprep.mubr.f32.mxu0 0.0
        %535 = vmatmul.mubr.f32.gmra.mrb[0].mxu0 %v457
        %v536 = vpop.f32.mrb[0].mxu0
        %v537 = vadd.f32 %v451, %v536
        %v538 = vpop.f32.mrb[0].mxu0
        %539 = vmatprep.mubr.f32.mxu0 0.0
        %540 = vmatmul.mubr.f32.gmra.mrb[0].mxu0 %v460
        %v541 = vpop.f32.mrb[0].mxu0
        %v542 = vadd.f32 %v451, %v541
        %v543 = vpop.f32.mrb[0].mxu0
        %544 = vmatprep.mubr.f32.mxu0 0.0
        %545 = vmatmul.mubr.f32.gmra.mrb[0].mxu0 %v463
        %v546 = vpop.f32.mrb[0].mxu0
        %v547 = vadd.f32 %v451, %v546
        %v548 = vpop.f32.mrb[0].mxu0
        %549 = vdwg.mxu0
        %v550 = vld [vmem:[%s4 + $0x38] sm:$0xf]
        %v551 = vld [vmem:[%s4 + $0x1b8] sm:$0x1]
        %v552 = vlaneseq
        %v553 = vshrl.u32 %v552, 7
        %v554 = vsub.s32 0, %v553
        %v555 = vrot.slane %v551, %v554
        %vm556 = vcmask 31744
        %v558 = vsel %vm556, %v330, 0
        %v561 = vsel %vm556, %v331, 0
        %v564 = vsel %vm556, %v332, 0
        %v567 = vsel %vm556, %v333, 0
        %vm569 = vcmask 1043456
        %v571 = vsel %vm569, %v550, 0
        %573 = vmatprep.subr.mxu0 0.0
        %574 = vmatpush1.msra.mxu0 %v571
        %575 = vmatprep.subr.mxu0 0.0
        %576 = vmatpush1.msra.mxu0 0.0
        %577 = vmatprep.subr.mxu0 0.0
        %578 = vmatpush1.msra.mxu0 0.0
        %579 = vmatprep.subr.mxu0 0.0
        %580 = vmatpush1.msra.mxu0 0.0
        %581 = vmatprep.subr.mxu0 0.0
        %582 = vmatpush1.msra.mxu0 0.0
        %583 = vmatprep.subr.mxu0 0.0
        %584 = vmatpush1.msra.mxu0 0.0
        %585 = vmatprep.subr.mxu0 0.0
        %586 = vmatpush1.msra.mxu0 0.0
        %587 = vmatprep.subr.mxu0 0.0
        %588 = vmatpush1.msra.mxu0 0.0
        %589 = vmatprep.subr.mxu0 0.0
        %590 = vmatpush1.msra.mxu0 0.0
        %591 = vmatprep.subr.mxu0 0.0
        %592 = vmatpush1.msra.mxu0 0.0
        %593 = vmatprep.subr.mxu0 0.0
        %594 = vmatpush1.msra.mxu0 0.0
        %595 = vmatprep.subr.mxu0 0.0
        %596 = vmatpush1.msra.mxu0 0.0
        %597 = vmatprep.subr.mxu0 0.0
        %598 = vmatpush1.msra.mxu0 0.0
        %599 = vmatprep.subr.mxu0 0.0
        %600 = vmatpush1.msra.mxu0 0.0
        %601 = vmatprep.subr.mxu0 0.0
        %602 = vmatpush1.msra.mxu0 0.0
        %603 = vmatprep.subr.mxu0 0.0
        %604 = vmatpush1.msra.mxu0 0.0
        %605 = vmatprep.subr.mxu0 0.0
        %606 = vmatpush1.msra.mxu0 0.0
        %607 = vmatprep.subr.mxu0 0.0
        %608 = vmatpush1.msra.mxu0 0.0
        %609 = vmatprep.subr.mxu0 0.0
        %610 = vmatpush1.msra.mxu0 0.0
        %611 = vmatprep.subr.mxu0 0.0
        %612 = vmatpush1.msra.mxu0 0.0
        %613 = vmatprep.subr.mxu0 0.0
        %614 = vmatpush1.msra.mxu0 0.0
        %615 = vmatprep.subr.mxu0 0.0
        %616 = vmatpush1.msra.mxu0 0.0
        %617 = vmatprep.subr.mxu0 0.0
        %618 = vmatpush1.msra.mxu0 0.0
        %619 = vmatprep.subr.mxu0 0.0
        %620 = vmatpush1.msra.mxu0 0.0
        %621 = vmatprep.subr.mxu0 0.0
        %622 = vmatpush1.msra.mxu0 0.0
        %623 = vmatprep.subr.mxu0 0.0
        %624 = vmatpush1.msra.mxu0 0.0
        %625 = vmatprep.subr.mxu0 0.0
        %626 = vmatpush1.msra.mxu0 0.0
        %627 = vmatprep.subr.mxu0 0.0
        %628 = vmatpush1.msra.mxu0 0.0
        %629 = vmatprep.subr.mxu0 0.0
        %630 = vmatpush1.msra.mxu0 0.0
        %631 = vmatprep.subr.mxu0 0.0
        %632 = vmatpush1.msra.mxu0 0.0
        %633 = vmatprep.subr.mxu0 0.0
        %634 = vmatpush1.msra.mxu0 0.0
        %635 = vmatprep.subr.mxu0 0.0
        %636 = vmatpush1.msra.mxu0 0.0
        %637 = vmatprep.mubr.f32.mxu0 0.0
        %638 = vmatmul.mubr.f32.gmra.mrb[0].mxu0 %v558
        %v639 = vpop.f32.mrb[0].mxu0
        %v640 = vadd.f32 %v555, %v639
        %v641 = vpop.f32.mrb[0].mxu0
        %642 = vmatprep.mubr.f32.mxu0 0.0
        %643 = vmatmul.mubr.f32.gmra.mrb[0].mxu0 %v561
        %v644 = vpop.f32.mrb[0].mxu0
        %v645 = vadd.f32 %v555, %v644
        %v646 = vpop.f32.mrb[0].mxu0
        %647 = vmatprep.mubr.f32.mxu0 0.0
        %648 = vmatmul.mubr.f32.gmra.mrb[0].mxu0 %v564
        %v649 = vpop.f32.mrb[0].mxu0
        %v650 = vadd.f32 %v555, %v649
        %v651 = vpop.f32.mrb[0].mxu0
        %652 = vmatprep.mubr.f32.mxu0 0.0
        %653 = vmatmul.mubr.f32.gmra.mrb[0].mxu0 %v567
        %v654 = vpop.f32.mrb[0].mxu0
        %v655 = vadd.f32 %v555, %v654
        %v656 = vpop.f32.mrb[0].mxu0
        %657 = vdwg.mxu0
        %v658 = vadd.f32 %v428, %v532
        %v659 = vadd.f32 %v433, %v537
        %v660 = vadd.f32 %v438, %v542
        %v661 = vadd.f32 %v443, %v547
        %v662 = vadd.f32 %v658, %v640
        %v663 = vadd.f32 %v659, %v645
        %v664 = vadd.f32 %v660, %v650
        %v665 = vadd.f32 %v661, %v655
        %v666 = vmul.f32 %v662, %v662
        %v667 = vmul.f32 %v663, %v663
        %v668 = vmul.f32 %v664, %v664
        %v669 = vmul.f32 %v665, %v665
        %v670 = vmul.f32 %v428, %v428
        %v671 = vmul.f32 %v433, %v433
        %v672 = vmul.f32 %v438, %v438
        %v673 = vmul.f32 %v443, %v443
        %v674 = vmul.f32 %v532, %v532
        %v675 = vmul.f32 %v537, %v537
        %v676 = vmul.f32 %v542, %v542
        %v677 = vmul.f32 %v547, %v547
        %v678 = vadd.f32 %v670, %v674
        %v679 = vadd.f32 %v671, %v675
        %v680 = vadd.f32 %v672, %v676
        %v681 = vadd.f32 %v673, %v677
        %v682 = vmul.f32 %v640, %v640
        %v683 = vmul.f32 %v645, %v645
        %v684 = vmul.f32 %v650, %v650
        %v685 = vmul.f32 %v655, %v655
        %v686 = vadd.f32 %v678, %v682
        %v687 = vadd.f32 %v679, %v683
        %v688 = vadd.f32 %v680, %v684
        %v689 = vadd.f32 %v681, %v685
        %v690 = vsub.f32 %v666, %v686
        %v691 = vsub.f32 %v667, %v687
        %v692 = vsub.f32 %v668, %v688
        %v693 = vsub.f32 %v669, %v689
        %v694 = vmul.f32 %v690, 0.5
        %v695 = vmul.f32 %v691, 0.5
        %v696 = vmul.f32 %v692, 0.5
        %v697 = vmul.f32 %v693, 0.5
        %v698 = vld [vmem:[%s4] sm:$0x3]
        %v699 = vld [vmem:[%s4 + $0x8] sm:$0xff]
        %700 = vmatprep.subr.mxu0 0.0
        %701 = vmatpush1.msra.mxu0 %v699
        %702 = vmatprep.subr.mxu0 0.0
        %703 = vmatpush1.msra.mxu0 0.0
        %704 = vmatprep.subr.mxu0 0.0
        %705 = vmatpush1.msra.mxu0 0.0
        %706 = vmatprep.subr.mxu0 0.0
        %707 = vmatpush1.msra.mxu0 0.0
        %708 = vmatprep.subr.mxu0 0.0
        %709 = vmatpush1.msra.mxu0 0.0
        %710 = vmatprep.subr.mxu0 0.0
        %711 = vmatpush1.msra.mxu0 0.0
        %712 = vmatprep.subr.mxu0 0.0
        %713 = vmatpush1.msra.mxu0 0.0
        %714 = vmatprep.subr.mxu0 0.0
        %715 = vmatpush1.msra.mxu0 0.0
        %716 = vmatprep.subr.mxu0 0.0
        %717 = vmatpush1.msra.mxu0 0.0
        %718 = vmatprep.subr.mxu0 0.0
        %719 = vmatpush1.msra.mxu0 0.0
        %720 = vmatprep.subr.mxu0 0.0
        %721 = vmatpush1.msra.mxu0 0.0
        %722 = vmatprep.subr.mxu0 0.0
        %723 = vmatpush1.msra.mxu0 0.0
        %724 = vmatprep.subr.mxu0 0.0
        %725 = vmatpush1.msra.mxu0 0.0
        %726 = vmatprep.subr.mxu0 0.0
        %727 = vmatpush1.msra.mxu0 0.0
        %728 = vmatprep.subr.mxu0 0.0
        %729 = vmatpush1.msra.mxu0 0.0
        %730 = vmatprep.subr.mxu0 0.0
        %731 = vmatpush1.msra.mxu0 0.0
        %732 = vmatprep.subr.mxu0 0.0
        %733 = vmatpush1.msra.mxu0 0.0
        %734 = vmatprep.subr.mxu0 0.0
        %735 = vmatpush1.msra.mxu0 0.0
        %736 = vmatprep.subr.mxu0 0.0
        %737 = vmatpush1.msra.mxu0 0.0
        %738 = vmatprep.subr.mxu0 0.0
        %739 = vmatpush1.msra.mxu0 0.0
        %740 = vmatprep.subr.mxu0 0.0
        %741 = vmatpush1.msra.mxu0 0.0
        %742 = vmatprep.subr.mxu0 0.0
        %743 = vmatpush1.msra.mxu0 0.0
        %744 = vmatprep.subr.mxu0 0.0
        %745 = vmatpush1.msra.mxu0 0.0
        %746 = vmatprep.subr.mxu0 0.0
        %747 = vmatpush1.msra.mxu0 0.0
        %748 = vmatprep.subr.mxu0 0.0
        %749 = vmatpush1.msra.mxu0 0.0
        %750 = vmatprep.subr.mxu0 0.0
        %751 = vmatpush1.msra.mxu0 0.0
        %752 = vmatprep.subr.mxu0 0.0
        %753 = vmatpush1.msra.mxu0 0.0
        %754 = vmatprep.subr.mxu0 0.0
        %755 = vmatpush1.msra.mxu0 0.0
        %756 = vmatprep.subr.mxu0 0.0
        %757 = vmatpush1.msra.mxu0 0.0
        %758 = vmatprep.subr.mxu0 0.0
        %759 = vmatpush1.msra.mxu0 0.0
        %760 = vmatprep.subr.mxu0 0.0
        %761 = vmatpush1.msra.mxu0 0.0
        %762 = vmatprep.subr.mxu0 0.0
        %763 = vmatpush1.msra.mxu0 0.0
        %764 = vmatprep.mubr.f32.mxu0 0.0
        %765 = vmatmul.mubr.f32.gmra.mrb[0].mxu0 %v454
        %v766 = vpop.f32.mrb[0].mxu0
        %v767 = vadd.f32 0.0, %v766
        %v768 = vpop.f32.mrb[0].mxu0
        %769 = vmatprep.mubr.f32.mxu0 0.0
        %770 = vmatmul.mubr.f32.gmra.mrb[0].mxu0 %v457
        %v771 = vpop.f32.mrb[0].mxu0
        %v772 = vadd.f32 0.0, %v771
        %v773 = vpop.f32.mrb[0].mxu0
        %774 = vmatprep.mubr.f32.mxu0 0.0
        %775 = vmatmul.mubr.f32.gmra.mrb[0].mxu0 %v460
        %v776 = vpop.f32.mrb[0].mxu0
        %v777 = vadd.f32 0.0, %v776
        %v778 = vpop.f32.mrb[0].mxu0
        %779 = vmatprep.mubr.f32.mxu0 0.0
        %780 = vmatmul.mubr.f32.gmra.mrb[0].mxu0 %v463
        %v781 = vpop.f32.mrb[0].mxu0
        %v782 = vadd.f32 0.0, %v781
        %v783 = vpop.f32.mrb[0].mxu0
        %784 = vdwg.mxu0
        %v786 = vsel %vm357, %v698, 0
        %788 = vmatprep.subr.mxu0 0.0
        %789 = vmatpush1.msra.mxu0 %v786
        %790 = vmatprep.subr.mxu0 0.0
        %791 = vmatpush1.msra.mxu0 0.0
        %792 = vmatprep.subr.mxu0 0.0
        %793 = vmatpush1.msra.mxu0 0.0
        %794 = vmatprep.subr.mxu0 0.0
        %795 = vmatpush1.msra.mxu0 0.0
        %796 = vmatprep.subr.mxu0 0.0
        %797 = vmatpush1.msra.mxu0 0.0
        %798 = vmatprep.subr.mxu0 0.0
        %799 = vmatpush1.msra.mxu0 0.0
        %800 = vmatprep.subr.mxu0 0.0
        %801 = vmatpush1.msra.mxu0 0.0
        %802 = vmatprep.subr.mxu0 0.0
        %803 = vmatpush1.msra.mxu0 0.0
        %804 = vmatprep.subr.mxu0 0.0
        %805 = vmatpush1.msra.mxu0 0.0
        %806 = vmatprep.subr.mxu0 0.0
        %807 = vmatpush1.msra.mxu0 0.0
        %808 = vmatprep.subr.mxu0 0.0
        %809 = vmatpush1.msra.mxu0 0.0
        %810 = vmatprep.subr.mxu0 0.0
        %811 = vmatpush1.msra.mxu0 0.0
        %812 = vmatprep.subr.mxu0 0.0
        %813 = vmatpush1.msra.mxu0 0.0
        %814 = vmatprep.subr.mxu0 0.0
        %815 = vmatpush1.msra.mxu0 0.0
        %816 = vmatprep.subr.mxu0 0.0
        %817 = vmatpush1.msra.mxu0 0.0
        %818 = vmatprep.subr.mxu0 0.0
        %819 = vmatpush1.msra.mxu0 0.0
        %820 = vmatprep.subr.mxu0 0.0
        %821 = vmatpush1.msra.mxu0 0.0
        %822 = vmatprep.subr.mxu0 0.0
        %823 = vmatpush1.msra.mxu0 0.0
        %824 = vmatprep.subr.mxu0 0.0
        %825 = vmatpush1.msra.mxu0 0.0
        %826 = vmatprep.subr.mxu0 0.0
        %827 = vmatpush1.msra.mxu0 0.0
        %828 = vmatprep.subr.mxu0 0.0
        %829 = vmatpush1.msra.mxu0 0.0
        %830 = vmatprep.subr.mxu0 0.0
        %831 = vmatpush1.msra.mxu0 0.0
        %832 = vmatprep.subr.mxu0 0.0
        %833 = vmatpush1.msra.mxu0 0.0
        %834 = vmatprep.subr.mxu0 0.0
        %835 = vmatpush1.msra.mxu0 0.0
        %836 = vmatprep.subr.mxu0 0.0
        %837 = vmatpush1.msra.mxu0 0.0
        %838 = vmatprep.subr.mxu0 0.0
        %839 = vmatpush1.msra.mxu0 0.0
        %840 = vmatprep.subr.mxu0 0.0
        %841 = vmatpush1.msra.mxu0 0.0
        %842 = vmatprep.subr.mxu0 0.0
        %843 = vmatpush1.msra.mxu0 0.0
        %844 = vmatprep.subr.mxu0 0.0
        %845 = vmatpush1.msra.mxu0 0.0
        %846 = vmatprep.subr.mxu0 0.0
        %847 = vmatpush1.msra.mxu0 0.0
        %848 = vmatprep.subr.mxu0 0.0
        %849 = vmatpush1.msra.mxu0 0.0
        %850 = vmatprep.subr.mxu0 0.0
        %851 = vmatpush1.msra.mxu0 0.0
        %852 = vmatprep.mubr.f32.mxu0 0.0
        %853 = vmatmul.mubr.f32.gmra.mrb[0].mxu0 %v346
        %v854 = vpop.f32.mrb[0].mxu0
        %v855 = vadd.f32 %v767, %v854
        %v856 = vpop.f32.mrb[0].mxu0
        %857 = vmatprep.mubr.f32.mxu0 0.0
        %858 = vmatmul.mubr.f32.gmra.mrb[0].mxu0 %v349
        %v859 = vpop.f32.mrb[0].mxu0
        %v860 = vadd.f32 %v772, %v859
        %v861 = vpop.f32.mrb[0].mxu0
        %862 = vmatprep.mubr.f32.mxu0 0.0
        %863 = vmatmul.mubr.f32.gmra.mrb[0].mxu0 %v352
        %v864 = vpop.f32.mrb[0].mxu0
        %v865 = vadd.f32 %v777, %v864
        %v866 = vpop.f32.mrb[0].mxu0
        %867 = vmatprep.mubr.f32.mxu0 0.0
        %868 = vmatmul.mubr.f32.gmra.mrb[0].mxu0 %v355
        %v869 = vpop.f32.mrb[0].mxu0
        %v870 = vadd.f32 %v782, %v869
        %v871 = vpop.f32.mrb[0].mxu0
        %872 = vdwg.mxu0
        %v873 = vld [vmem:[%s4 + $0x10] sm:$0xf]
        %v875 = vsel %vm569, %v873, 0
        %877 = vmatprep.subr.mxu0 0.0
        %878 = vmatpush1.msra.mxu0 %v875
        %879 = vmatprep.subr.mxu0 0.0
        %880 = vmatpush1.msra.mxu0 0.0
        %881 = vmatprep.subr.mxu0 0.0
        %882 = vmatpush1.msra.mxu0 0.0
        %883 = vmatprep.subr.mxu0 0.0
        %884 = vmatpush1.msra.mxu0 0.0
        %885 = vmatprep.subr.mxu0 0.0
        %886 = vmatpush1.msra.mxu0 0.0
        %887 = vmatprep.subr.mxu0 0.0
        %888 = vmatpush1.msra.mxu0 0.0
        %889 = vmatprep.subr.mxu0 0.0
        %890 = vmatpush1.msra.mxu0 0.0
        %891 = vmatprep.subr.mxu0 0.0
        %892 = vmatpush1.msra.mxu0 0.0
        %893 = vmatprep.subr.mxu0 0.0
        %894 = vmatpush1.msra.mxu0 0.0
        %895 = vmatprep.subr.mxu0 0.0
        %896 = vmatpush1.msra.mxu0 0.0
        %897 = vmatprep.subr.mxu0 0.0
        %898 = vmatpush1.msra.mxu0 0.0
        %899 = vmatprep.subr.mxu0 0.0
        %900 = vmatpush1.msra.mxu0 0.0
        %901 = vmatprep.subr.mxu0 0.0
        %902 = vmatpush1.msra.mxu0 0.0
        %903 = vmatprep.subr.mxu0 0.0
        %904 = vmatpush1.msra.mxu0 0.0
        %905 = vmatprep.subr.mxu0 0.0
        %906 = vmatpush1.msra.mxu0 0.0
        %907 = vmatprep.subr.mxu0 0.0
        %908 = vmatpush1.msra.mxu0 0.0
        %909 = vmatprep.subr.mxu0 0.0
        %910 = vmatpush1.msra.mxu0 0.0
        %911 = vmatprep.subr.mxu0 0.0
        %912 = vmatpush1.msra.mxu0 0.0
        %913 = vmatprep.subr.mxu0 0.0
        %914 = vmatpush1.msra.mxu0 0.0
        %915 = vmatprep.subr.mxu0 0.0
        %916 = vmatpush1.msra.mxu0 0.0
        %917 = vmatprep.subr.mxu0 0.0
        %918 = vmatpush1.msra.mxu0 0.0
        %919 = vmatprep.subr.mxu0 0.0
        %920 = vmatpush1.msra.mxu0 0.0
        %921 = vmatprep.subr.mxu0 0.0
        %922 = vmatpush1.msra.mxu0 0.0
        %923 = vmatprep.subr.mxu0 0.0
        %924 = vmatpush1.msra.mxu0 0.0
        %925 = vmatprep.subr.mxu0 0.0
        %926 = vmatpush1.msra.mxu0 0.0
        %927 = vmatprep.subr.mxu0 0.0
        %928 = vmatpush1.msra.mxu0 0.0
        %929 = vmatprep.subr.mxu0 0.0
        %930 = vmatpush1.msra.mxu0 0.0
        %931 = vmatprep.subr.mxu0 0.0
        %932 = vmatpush1.msra.mxu0 0.0
        %933 = vmatprep.subr.mxu0 0.0
        %934 = vmatpush1.msra.mxu0 0.0
        %935 = vmatprep.subr.mxu0 0.0
        %936 = vmatpush1.msra.mxu0 0.0
        %937 = vmatprep.subr.mxu0 0.0
        %938 = vmatpush1.msra.mxu0 0.0
        %939 = vmatprep.subr.mxu0 0.0
        %940 = vmatpush1.msra.mxu0 0.0
        %941 = vmatprep.mubr.f32.mxu0 0.0
        %942 = vmatmul.mubr.f32.gmra.mrb[0].mxu0 %v558
        %v943 = vpop.f32.mrb[0].mxu0
        %v944 = vadd.f32 0.0, %v943
        %v945 = vpop.f32.mrb[0].mxu0
        %946 = vmatprep.mubr.f32.mxu0 0.0
        %947 = vmatmul.mubr.f32.gmra.mrb[0].mxu0 %v561
        %v948 = vpop.f32.mrb[0].mxu0
        %v949 = vadd.f32 0.0, %v948
        %v950 = vpop.f32.mrb[0].mxu0
        %951 = vmatprep.mubr.f32.mxu0 0.0
        %952 = vmatmul.mubr.f32.gmra.mrb[0].mxu0 %v564
        %v953 = vpop.f32.mrb[0].mxu0
        %v954 = vadd.f32 0.0, %v953
        %v955 = vpop.f32.mrb[0].mxu0
        %956 = vmatprep.mubr.f32.mxu0 0.0
        %957 = vmatmul.mubr.f32.gmra.mrb[0].mxu0 %v567
        %v958 = vpop.f32.mrb[0].mxu0
        %v959 = vadd.f32 0.0, %v958
        %v960 = vpop.f32.mrb[0].mxu0
        %961 = vdwg.mxu0
        %v962 = vadd.f32 %v855, %v944
        %v963 = vadd.f32 %v860, %v949
        %v964 = vadd.f32 %v865, %v954
        %v965 = vadd.f32 %v870, %v959
        %v966 = vld [vmem:[%s4 + $0x18] sm:$0xff]
        %v967 = vld [vmem:[%s4 + $0x20] sm:$0xff]
        %vm968 = vcmask 130048
        %v970 = vsel %vm968, %v694, 0
        %v973 = vsel %vm968, %v695, 0
        %v976 = vsel %vm968, %v696, 0
        %v979 = vsel %vm968, %v697, 0
        %981 = vmatprep.subr.mxu0 0.0
        %982 = vmatpush1.msra.mxu0 %v966
        %983 = vmatprep.subr.mxu0 0.0
        %984 = vmatpush1.msra.mxu0 %v967
        %985 = vmatprep.subr.mxu0 0.0
        %986 = vmatpush1.msra.mxu0 0.0
        %987 = vmatprep.subr.mxu0 0.0
        %988 = vmatpush1.msra.mxu0 0.0
        %989 = vmatprep.subr.mxu0 0.0
        %990 = vmatpush1.msra.mxu0 0.0
        %991 = vmatprep.subr.mxu0 0.0
        %992 = vmatpush1.msra.mxu0 0.0
        %993 = vmatprep.subr.mxu0 0.0
        %994 = vmatpush1.msra.mxu0 0.0
        %995 = vmatprep.subr.mxu0 0.0
        %996 = vmatpush1.msra.mxu0 0.0
        %997 = vmatprep.subr.mxu0 0.0
        %998 = vmatpush1.msra.mxu0 0.0
        %999 = vmatprep.subr.mxu0 0.0
        %1000 = vmatpush1.msra.mxu0 0.0
        %1001 = vmatprep.subr.mxu0 0.0
        %1002 = vmatpush1.msra.mxu0 0.0
        %1003 = vmatprep.subr.mxu0 0.0
        %1004 = vmatpush1.msra.mxu0 0.0
        %1005 = vmatprep.subr.mxu0 0.0
        %1006 = vmatpush1.msra.mxu0 0.0
        %1007 = vmatprep.subr.mxu0 0.0
        %1008 = vmatpush1.msra.mxu0 0.0
        %1009 = vmatprep.subr.mxu0 0.0
        %1010 = vmatpush1.msra.mxu0 0.0
        %1011 = vmatprep.subr.mxu0 0.0
        %1012 = vmatpush1.msra.mxu0 0.0
        %1013 = vmatprep.subr.mxu0 0.0
        %1014 = vmatpush1.msra.mxu0 0.0
        %1015 = vmatprep.subr.mxu0 0.0
        %1016 = vmatpush1.msra.mxu0 0.0
        %1017 = vmatprep.subr.mxu0 0.0
        %1018 = vmatpush1.msra.mxu0 0.0
        %1019 = vmatprep.subr.mxu0 0.0
        %1020 = vmatpush1.msra.mxu0 0.0
        %1021 = vmatprep.subr.mxu0 0.0
        %1022 = vmatpush1.msra.mxu0 0.0
        %1023 = vmatprep.subr.mxu0 0.0
        %1024 = vmatpush1.msra.mxu0 0.0
        %1025 = vmatprep.subr.mxu0 0.0
        %1026 = vmatpush1.msra.mxu0 0.0
        %1027 = vmatprep.subr.mxu0 0.0
        %1028 = vmatpush1.msra.mxu0 0.0
        %1029 = vmatprep.subr.mxu0 0.0
        %1030 = vmatpush1.msra.mxu0 0.0
        %1031 = vmatprep.subr.mxu0 0.0
        %1032 = vmatpush1.msra.mxu0 0.0
        %1033 = vmatprep.subr.mxu0 0.0
        %1034 = vmatpush1.msra.mxu0 0.0
        %1035 = vmatprep.subr.mxu0 0.0
        %1036 = vmatpush1.msra.mxu0 0.0
        %1037 = vmatprep.subr.mxu0 0.0
        %1038 = vmatpush1.msra.mxu0 0.0
        %1039 = vmatprep.subr.mxu0 0.0
        %1040 = vmatpush1.msra.mxu0 0.0
        %1041 = vmatprep.subr.mxu0 0.0
        %1042 = vmatpush1.msra.mxu0 0.0
        %1043 = vmatprep.subr.mxu0 0.0
        %1044 = vmatpush1.msra.mxu0 0.0
        %1045 = vmatprep.mubr.f32.mxu0 0.0
        %1046 = vmatmul.mubr.f32.gmra.mrb[0].mxu0 %v970
        %v1047 = vpop.f32.mrb[0].mxu0
        %v1048 = vadd.f32 0.0, %v1047
        %v1049 = vpop.f32.mrb[0].mxu0
        %1050 = vmatprep.mubr.f32.mxu0 0.0
        %1051 = vmatmul.mubr.f32.gmra.mrb[0].mxu0 %v973
        %v1052 = vpop.f32.mrb[0].mxu0
        %v1053 = vadd.f32 0.0, %v1052
        %v1054 = vpop.f32.mrb[0].mxu0
        %1055 = vmatprep.mubr.f32.mxu0 0.0
        %1056 = vmatmul.mubr.f32.gmra.mrb[0].mxu0 %v976
        %v1057 = vpop.f32.mrb[0].mxu0
        %v1058 = vadd.f32 0.0, %v1057
        %v1059 = vpop.f32.mrb[0].mxu0
        %1060 = vmatprep.mubr.f32.mxu0 0.0
        %1061 = vmatmul.mubr.f32.gmra.mrb[0].mxu0 %v979
        %v1062 = vpop.f32.mrb[0].mxu0
        %v1063 = vadd.f32 0.0, %v1062
        %v1064 = vpop.f32.mrb[0].mxu0
        %1065 = vdwg.mxu0
        %v1066 = vadd.f32 %v962, %v1048
        %v1067 = vadd.f32 %v963, %v1053
        %v1068 = vadd.f32 %v964, %v1058
        %v1069 = vadd.f32 %v965, %v1063
        %vm1070 = vcmask 261120
        %v1071 = vsel %vm1070, %v334, 0.0
        %1072 = vadd.xlane.f32.xlu0 %v1071
        %v1073 = vpop.xlane.xlu0 %1072
        %v1074 = vsel %vm1070, %v335, 0.0
        %1075 = vadd.xlane.f32.xlu0 %v1074
        %v1076 = vpop.xlane.xlu0 %1075
        %v1077 = vsel %vm1070, %v336, 0.0
        %1078 = vadd.xlane.f32.xlu0 %v1077
        %v1079 = vpop.xlane.xlu0 %1078
        %v1080 = vsel %vm1070, %v337, 0.0
        %1081 = vadd.xlane.f32.xlu0 %v1080
        %v1082 = vpop.xlane.xlu0 %1081
        %vm1083 = vcmp.eq.f32.partialorder %v1073, 0.0
        %vm1084 = vcmp.eq.f32.partialorder %v1076, 0.0
        %vm1085 = vcmp.eq.f32.partialorder %v1079, 0.0
        %vm1086 = vcmp.eq.f32.partialorder %v1082, 0.0
        %v1087 = vrcp.pop %v1073
        %v1088 = vrcp.pop %v1076
        %v1089 = vrcp.pop %v1079
        %v1090 = vrcp.pop %v1082
        %v1091 = vsel %vm1083, 0.0, %v1087
        %v1092 = vsel %vm1084, 0.0, %v1088
        %v1093 = vsel %vm1085, 0.0, %v1089
        %v1094 = vsel %vm1086, 0.0, %v1090
        %v1095 = vmul.f32 %v1091, %v334
        %v1096 = vmul.f32 %v1092, %v335
        %v1097 = vmul.f32 %v1093, %v336
        %v1098 = vmul.f32 %v1094, %v337
        %v1100 = vsel %vm1070, %v1095, 0
        %v1103 = vsel %vm1070, %v1096, 0
        %v1106 = vsel %vm1070, %v1097, 0
        %v1109 = vsel %vm1070, %v1098, 0
        %1111 = vmatprep.subr.mxu0 0.0
        %1112 = vmatpush1.msra.mxu0 %v1066
        %1113 = vmatprep.subr.mxu0 0.0
        %1114 = vmatpush1.msra.mxu0 %v1067
        %1115 = vmatprep.subr.mxu0 0.0
        %1116 = vmatpush1.msra.mxu0 %v1068
        %1117 = vmatprep.subr.mxu0 0.0
        %1118 = vmatpush1.msra.mxu0 %v1069
        %1119 = vmatprep.subr.mxu0 0.0
        %1120 = vmatpush1.msra.mxu0 0.0
        %1121 = vmatprep.subr.mxu0 0.0
        %1122 = vmatpush1.msra.mxu0 0.0
        %1123 = vmatprep.subr.mxu0 0.0
        %1124 = vmatpush1.msra.mxu0 0.0
        %1125 = vmatprep.subr.mxu0 0.0
        %1126 = vmatpush1.msra.mxu0 0.0
        %1127 = vmatprep.subr.mxu0 0.0
        %1128 = vmatpush1.msra.mxu0 0.0
        %1129 = vmatprep.subr.mxu0 0.0
        %1130 = vmatpush1.msra.mxu0 0.0
        %1131 = vmatprep.subr.mxu0 0.0
        %1132 = vmatpush1.msra.mxu0 0.0
        %1133 = vmatprep.subr.mxu0 0.0
        %1134 = vmatpush1.msra.mxu0 0.0
        %1135 = vmatprep.subr.mxu0 0.0
        %1136 = vmatpush1.msra.mxu0 0.0
        %1137 = vmatprep.subr.mxu0 0.0
        %1138 = vmatpush1.msra.mxu0 0.0
        %1139 = vmatprep.subr.mxu0 0.0
        %1140 = vmatpush1.msra.mxu0 0.0
        %1141 = vmatprep.subr.mxu0 0.0
        %1142 = vmatpush1.msra.mxu0 0.0
        %1143 = vmatprep.subr.mxu0 0.0
        %1144 = vmatpush1.msra.mxu0 0.0
        %1145 = vmatprep.subr.mxu0 0.0
        %1146 = vmatpush1.msra.mxu0 0.0
        %1147 = vmatprep.subr.mxu0 0.0
        %1148 = vmatpush1.msra.mxu0 0.0
        %1149 = vmatprep.subr.mxu0 0.0
        %1150 = vmatpush1.msra.mxu0 0.0
        %1151 = vmatprep.subr.mxu0 0.0
        %1152 = vmatpush1.msra.mxu0 0.0
        %1153 = vmatprep.subr.mxu0 0.0
        %1154 = vmatpush1.msra.mxu0 0.0
        %1155 = vmatprep.subr.mxu0 0.0
        %1156 = vmatpush1.msra.mxu0 0.0
        %1157 = vmatprep.subr.mxu0 0.0
        %1158 = vmatpush1.msra.mxu0 0.0
        %1159 = vmatprep.subr.mxu0 0.0
        %1160 = vmatpush1.msra.mxu0 0.0
        %1161 = vmatprep.subr.mxu0 0.0
        %1162 = vmatpush1.msra.mxu0 0.0
        %1163 = vmatprep.subr.mxu0 0.0
        %1164 = vmatpush1.msra.mxu0 0.0
        %1165 = vmatprep.subr.mxu0 0.0
        %1166 = vmatpush1.msra.mxu0 0.0
        %1167 = vmatprep.subr.mxu0 0.0
        %1168 = vmatpush1.msra.mxu0 0.0
        %1169 = vmatprep.subr.mxu0 0.0
        %1170 = vmatpush1.msra.mxu0 0.0
        %1171 = vmatprep.subr.mxu0 0.0
        %1172 = vmatpush1.msra.mxu0 0.0
        %1173 = vmatprep.subr.mxu0 0.0
        %1174 = vmatpush1.msra.mxu0 0.0
        %1175 = vmatprep.mubr.f32.mxu0 0.0
        %1176 = vmatmul.mubr.f32.gmra.mrb[0].mxu0 %v1100
        %v1177 = vpop.f32.mrb[0].mxu0
        %v1178 = vadd.f32 0.0, %v1177
        %v1179 = vpop.f32.mrb[0].mxu0
        %1180 = vmatprep.mubr.f32.mxu0 0.0
        %1181 = vmatmul.mubr.f32.gmra.mrb[0].mxu0 %v1103
        %v1182 = vpop.f32.mrb[0].mxu0
        %v1183 = vadd.f32 0.0, %v1182
        %v1184 = vpop.f32.mrb[0].mxu0
        %1185 = vmatprep.mubr.f32.mxu0 0.0
        %1186 = vmatmul.mubr.f32.gmra.mrb[0].mxu0 %v1106
        %v1187 = vpop.f32.mrb[0].mxu0
        %v1188 = vadd.f32 0.0, %v1187
        %v1189 = vpop.f32.mrb[0].mxu0
        %1190 = vmatprep.mubr.f32.mxu0 0.0
        %1191 = vmatmul.mubr.f32.gmra.mrb[0].mxu0 %v1109
        %v1192 = vpop.f32.mrb[0].mxu0
        %v1193 = vadd.f32 0.0, %v1192
        %v1194 = vpop.f32.mrb[0].mxu0
        %1195 = vdwg.mxu0
        %v1196 = vsub.f32 0.0, %v1178
        %v1197 = vsub.f32 0.0, %v1183
        %v1198 = vsub.f32 0.0, %v1188
        %v1199 = vsub.f32 0.0, %v1193
        %1200 = vmatprep.subr.mxu0 0.0
        %1201 = vmatpush1.msra.mxu0 %v1196
        %1202 = vmatprep.subr.mxu0 0.0
        %1203 = vmatpush1.msra.mxu0 %v1197
        %1204 = vmatprep.subr.mxu0 0.0
        %1205 = vmatpush1.msra.mxu0 %v1198
        %1206 = vmatprep.subr.mxu0 0.0
        %1207 = vmatpush1.msra.mxu0 %v1199
        %1208 = vmatprep.subr.mxu0 0.0
        %1209 = vmatpush1.msra.mxu0 0.0
        %1210 = vmatprep.subr.mxu0 0.0
        %1211 = vmatpush1.msra.mxu0 0.0
        %1212 = vmatprep.subr.mxu0 0.0
        %1213 = vmatpush1.msra.mxu0 0.0
        %1214 = vmatprep.subr.mxu0 0.0
        %1215 = vmatpush1.msra.mxu0 0.0
        %1216 = vmatprep.subr.mxu0 0.0
        %1217 = vmatpush1.msra.mxu0 0.0
        %1218 = vmatprep.subr.mxu0 0.0
        %1219 = vmatpush1.msra.mxu0 0.0
        %1220 = vmatprep.subr.mxu0 0.0
        %1221 = vmatpush1.msra.mxu0 0.0
        %1222 = vmatprep.subr.mxu0 0.0
        %1223 = vmatpush1.msra.mxu0 0.0
        %1224 = vmatprep.subr.mxu0 0.0
        %1225 = vmatpush1.msra.mxu0 0.0
        %1226 = vmatprep.subr.mxu0 0.0
        %1227 = vmatpush1.msra.mxu0 0.0
        %1228 = vmatprep.subr.mxu0 0.0
        %1229 = vmatpush1.msra.mxu0 0.0
        %1230 = vmatprep.subr.mxu0 0.0
        %1231 = vmatpush1.msra.mxu0 0.0
        %1232 = vmatprep.subr.mxu0 0.0
        %1233 = vmatpush1.msra.mxu0 0.0
        %1234 = vmatprep.subr.mxu0 0.0
        %1235 = vmatpush1.msra.mxu0 0.0
        %1236 = vmatprep.subr.mxu0 0.0
        %1237 = vmatpush1.msra.mxu0 0.0
        %1238 = vmatprep.subr.mxu0 0.0
        %1239 = vmatpush1.msra.mxu0 0.0
        %1240 = vmatprep.subr.mxu0 0.0
        %1241 = vmatpush1.msra.mxu0 0.0
        %1242 = vmatprep.subr.mxu0 0.0
        %1243 = vmatpush1.msra.mxu0 0.0
        %1244 = vmatprep.subr.mxu0 0.0
        %1245 = vmatpush1.msra.mxu0 0.0
        %1246 = vmatprep.subr.mxu0 0.0
        %1247 = vmatpush1.msra.mxu0 0.0
        %1248 = vmatprep.subr.mxu0 0.0
        %1249 = vmatpush1.msra.mxu0 0.0
        %1250 = vmatprep.subr.mxu0 0.0
        %1251 = vmatpush1.msra.mxu0 0.0
        %1252 = vmatprep.subr.mxu0 0.0
        %1253 = vmatpush1.msra.mxu0 0.0
        %1254 = vmatprep.subr.mxu0 0.0
        %1255 = vmatpush1.msra.mxu0 0.0
        %1256 = vmatprep.subr.mxu0 0.0
        %1257 = vmatpush1.msra.mxu0 0.0
        %1258 = vmatprep.subr.mxu0 0.0
        %1259 = vmatpush1.msra.mxu0 0.0
        %1260 = vmatprep.subr.mxu0 0.0
        %1261 = vmatpush1.msra.mxu0 0.0
        %1262 = vmatprep.subr.mxu0 0.0
        %1263 = vmatpush1.msra.mxu0 0.0
        %1264 = vmatprep.mubr.f32.mxu0 0.0
        %1265 = vmatmul.mubr.f32.gmra.mrb[0].mxu0 %v1100
        %v1266 = vpop.f32.mrb[0].mxu0
        %v1267 = vadd.f32 0.0, %v1266
        %v1268 = vpop.f32.mrb[0].mxu0
        %1269 = vmatprep.mubr.f32.mxu0 0.0
        %1270 = vmatmul.mubr.f32.gmra.mrb[0].mxu0 %v1103
        %v1271 = vpop.f32.mrb[0].mxu0
        %v1272 = vadd.f32 0.0, %v1271
        %v1273 = vpop.f32.mrb[0].mxu0
        %1274 = vmatprep.mubr.f32.mxu0 0.0
        %1275 = vmatmul.mubr.f32.gmra.mrb[0].mxu0 %v1106
        %v1276 = vpop.f32.mrb[0].mxu0
        %v1277 = vadd.f32 0.0, %v1276
        %v1278 = vpop.f32.mrb[0].mxu0
        %1279 = vmatprep.mubr.f32.mxu0 0.0
        %1280 = vmatmul.mubr.f32.gmra.mrb[0].mxu0 %v1109
        %v1281 = vpop.f32.mrb[0].mxu0
        %v1282 = vadd.f32 0.0, %v1281
        %v1283 = vpop.f32.mrb[0].mxu0
        %1284 = vdwg.mxu0
        %v1285 = vsub.f32 0.0, %v1267
        %v1286 = vsub.f32 0.0, %v1272
        %v1287 = vsub.f32 0.0, %v1277
        %v1288 = vsub.f32 0.0, %v1282
        %v1289 = vsub.f32 %v1285, %v1066
        %v1290 = vsub.f32 %v1286, %v1067
        %v1291 = vsub.f32 %v1287, %v1068
        %v1292 = vsub.f32 %v1288, %v1069
        %v1293 = vmul.f32 %v1289, 0.5
        %v1294 = vmul.f32 %v1290, 0.5
        %v1295 = vmul.f32 %v1291, 0.5
        %v1296 = vmul.f32 %v1292, 0.5
        %v1297 = vmul.f32 %v1066, 7.3782034
        %v1298 = vmul.f32 %v1067, 7.3782034
        %v1299 = vmul.f32 %v1068, 7.3782034
        %v1300 = vmul.f32 %v1069, 7.3782034
        %v1301 = vmul.f32 %v1293, 12.41167
        %v1302 = vmul.f32 %v1294, 12.41167
        %v1303 = vmul.f32 %v1295, 12.41167
        %v1304 = vmul.f32 %v1296, 12.41167
        %v1305 = vsub.f32 %v1297, %v1301
        %v1306 = vsub.f32 %v1298, %v1302
        %v1307 = vsub.f32 %v1299, %v1303
        %v1308 = vsub.f32 %v1300, %v1304
        %1309 = vmatprep.subr.mxu0 0.0
        %1310 = vmatpush1.msra.mxu0 %v1293
        %1311 = vmatprep.subr.mxu0 0.0
        %1312 = vmatpush1.msra.mxu0 %v1294
        %1313 = vmatprep.subr.mxu0 0.0
        %1314 = vmatpush1.msra.mxu0 %v1295
        %1315 = vmatprep.subr.mxu0 0.0
        %1316 = vmatpush1.msra.mxu0 %v1296
        %1317 = vmatprep.subr.mxu0 0.0
        %1318 = vmatpush1.msra.mxu0 0.0
        %1319 = vmatprep.subr.mxu0 0.0
        %1320 = vmatpush1.msra.mxu0 0.0
        %1321 = vmatprep.subr.mxu0 0.0
        %1322 = vmatpush1.msra.mxu0 0.0
        %1323 = vmatprep.subr.mxu0 0.0
        %1324 = vmatpush1.msra.mxu0 0.0
        %1325 = vmatprep.subr.mxu0 0.0
        %1326 = vmatpush1.msra.mxu0 0.0
        %1327 = vmatprep.subr.mxu0 0.0
        %1328 = vmatpush1.msra.mxu0 0.0
        %1329 = vmatprep.subr.mxu0 0.0
        %1330 = vmatpush1.msra.mxu0 0.0
        %1331 = vmatprep.subr.mxu0 0.0
        %1332 = vmatpush1.msra.mxu0 0.0
        %1333 = vmatprep.subr.mxu0 0.0
        %1334 = vmatpush1.msra.mxu0 0.0
        %1335 = vmatprep.subr.mxu0 0.0
        %1336 = vmatpush1.msra.mxu0 0.0
        %1337 = vmatprep.subr.mxu0 0.0
        %1338 = vmatpush1.msra.mxu0 0.0
        %1339 = vmatprep.subr.mxu0 0.0
        %1340 = vmatpush1.msra.mxu0 0.0
        %1341 = vmatprep.subr.mxu0 0.0
        %1342 = vmatpush1.msra.mxu0 0.0
        %1343 = vmatprep.subr.mxu0 0.0
        %1344 = vmatpush1.msra.mxu0 0.0
        %1345 = vmatprep.subr.mxu0 0.0
        %1346 = vmatpush1.msra.mxu0 0.0
        %1347 = vmatprep.subr.mxu0 0.0
        %1348 = vmatpush1.msra.mxu0 0.0
        %1349 = vmatprep.subr.mxu0 0.0
        %1350 = vmatpush1.msra.mxu0 0.0
        %1351 = vmatprep.subr.mxu0 0.0
        %1352 = vmatpush1.msra.mxu0 0.0
        %1353 = vmatprep.subr.mxu0 0.0
        %1354 = vmatpush1.msra.mxu0 0.0
        %1355 = vmatprep.subr.mxu0 0.0
        %1356 = vmatpush1.msra.mxu0 0.0
        %1357 = vmatprep.subr.mxu0 0.0
        %1358 = vmatpush1.msra.mxu0 0.0
        %1359 = vmatprep.subr.mxu0 0.0
        %1360 = vmatpush1.msra.mxu0 0.0
        %1361 = vmatprep.subr.mxu0 0.0
        %1362 = vmatpush1.msra.mxu0 0.0
        %1363 = vmatprep.subr.mxu0 0.0
        %1364 = vmatpush1.msra.mxu0 0.0
        %1365 = vmatprep.subr.mxu0 0.0
        %1366 = vmatpush1.msra.mxu0 0.0
        %1367 = vmatprep.subr.mxu0 0.0
        %1368 = vmatpush1.msra.mxu0 0.0
        %1369 = vmatprep.subr.mxu0 0.0
        %1370 = vmatpush1.msra.mxu0 0.0
        %1371 = vmatprep.subr.mxu0 0.0
        %1372 = vmatpush1.msra.mxu0 0.0
        %1373 = vmatprep.mubr.f32.mxu0 0.0
        %1374 = vmatmul.mubr.f32.gmra.mrb[0].mxu0 %v1100
        %v1375 = vpop.f32.mrb[0].mxu0
        %v1376 = vadd.f32 0.0, %v1375
        %v1377 = vpop.f32.mrb[0].mxu0
        %1378 = vmatprep.mubr.f32.mxu0 0.0
        %1379 = vmatmul.mubr.f32.gmra.mrb[0].mxu0 %v1103
        %v1380 = vpop.f32.mrb[0].mxu0
        %v1381 = vadd.f32 0.0, %v1380
        %v1382 = vpop.f32.mrb[0].mxu0
        %1383 = vmatprep.mubr.f32.mxu0 0.0
        %1384 = vmatmul.mubr.f32.gmra.mrb[0].mxu0 %v1106
        %v1385 = vpop.f32.mrb[0].mxu0
        %v1386 = vadd.f32 0.0, %v1385
        %v1387 = vpop.f32.mrb[0].mxu0
        %1388 = vmatprep.mubr.f32.mxu0 0.0
        %1389 = vmatmul.mubr.f32.gmra.mrb[0].mxu0 %v1109
        %v1390 = vpop.f32.mrb[0].mxu0
        %v1391 = vadd.f32 0.0, %v1390
        %v1392 = vpop.f32.mrb[0].mxu0
        %1393 = vdwg.mxu0
        %v1394 = vsub.f32 0.0, %v1376
        %v1395 = vsub.f32 0.0, %v1381
        %v1396 = vsub.f32 0.0, %v1386
        %v1397 = vsub.f32 0.0, %v1391
        %1398 = vmatprep.subr.mxu0 0.0
        %1399 = vmatpush1.msra.mxu0 %v1394
        %1400 = vmatprep.subr.mxu0 0.0
        %1401 = vmatpush1.msra.mxu0 %v1395
        %1402 = vmatprep.subr.mxu0 0.0
        %1403 = vmatpush1.msra.mxu0 %v1396
        %1404 = vmatprep.subr.mxu0 0.0
        %1405 = vmatpush1.msra.mxu0 %v1397
        %1406 = vmatprep.subr.mxu0 0.0
        %1407 = vmatpush1.msra.mxu0 0.0
        %1408 = vmatprep.subr.mxu0 0.0
        %1409 = vmatpush1.msra.mxu0 0.0
        %1410 = vmatprep.subr.mxu0 0.0
        %1411 = vmatpush1.msra.mxu0 0.0
        %1412 = vmatprep.subr.mxu0 0.0
        %1413 = vmatpush1.msra.mxu0 0.0
        %1414 = vmatprep.subr.mxu0 0.0
        %1415 = vmatpush1.msra.mxu0 0.0
        %1416 = vmatprep.subr.mxu0 0.0
        %1417 = vmatpush1.msra.mxu0 0.0
        %1418 = vmatprep.subr.mxu0 0.0
        %1419 = vmatpush1.msra.mxu0 0.0
        %1420 = vmatprep.subr.mxu0 0.0
        %1421 = vmatpush1.msra.mxu0 0.0
        %1422 = vmatprep.subr.mxu0 0.0
        %1423 = vmatpush1.msra.mxu0 0.0
        %1424 = vmatprep.subr.mxu0 0.0
        %1425 = vmatpush1.msra.mxu0 0.0
        %1426 = vmatprep.subr.mxu0 0.0
        %1427 = vmatpush1.msra.mxu0 0.0
        %1428 = vmatprep.subr.mxu0 0.0
        %1429 = vmatpush1.msra.mxu0 0.0
        %1430 = vmatprep.subr.mxu0 0.0
        %1431 = vmatpush1.msra.mxu0 0.0
        %1432 = vmatprep.subr.mxu0 0.0
        %1433 = vmatpush1.msra.mxu0 0.0
        %1434 = vmatprep.subr.mxu0 0.0
        %1435 = vmatpush1.msra.mxu0 0.0
        %1436 = vmatprep.subr.mxu0 0.0
        %1437 = vmatpush1.msra.mxu0 0.0
        %1438 = vmatprep.subr.mxu0 0.0
        %1439 = vmatpush1.msra.mxu0 0.0
        %1440 = vmatprep.subr.mxu0 0.0
        %1441 = vmatpush1.msra.mxu0 0.0
        %1442 = vmatprep.subr.mxu0 0.0
        %1443 = vmatpush1.msra.mxu0 0.0
        %1444 = vmatprep.subr.mxu0 0.0
        %1445 = vmatpush1.msra.mxu0 0.0
        %1446 = vmatprep.subr.mxu0 0.0
        %1447 = vmatpush1.msra.mxu0 0.0
        %1448 = vmatprep.subr.mxu0 0.0
        %1449 = vmatpush1.msra.mxu0 0.0
        %1450 = vmatprep.subr.mxu0 0.0
        %1451 = vmatpush1.msra.mxu0 0.0
        %1452 = vmatprep.subr.mxu0 0.0
        %1453 = vmatpush1.msra.mxu0 0.0
        %1454 = vmatprep.subr.mxu0 0.0
        %1455 = vmatpush1.msra.mxu0 0.0
        %1456 = vmatprep.subr.mxu0 0.0
        %1457 = vmatpush1.msra.mxu0 0.0
        %1458 = vmatprep.subr.mxu0 0.0
        %1459 = vmatpush1.msra.mxu0 0.0
        %1460 = vmatprep.subr.mxu0 0.0
        %1461 = vmatpush1.msra.mxu0 0.0
        %1462 = vmatprep.mubr.f32.mxu0 0.0
        %1463 = vmatmul.mubr.f32.gmra.mrb[0].mxu0 %v1100
        %v1464 = vpop.f32.mrb[0].mxu0
        %v1465 = vadd.f32 0.0, %v1464
        %v1466 = vpop.f32.mrb[0].mxu0
        %1467 = vmatprep.mubr.f32.mxu0 0.0
        %1468 = vmatmul.mubr.f32.gmra.mrb[0].mxu0 %v1103
        %v1469 = vpop.f32.mrb[0].mxu0
        %v1470 = vadd.f32 0.0, %v1469
        %v1471 = vpop.f32.mrb[0].mxu0
        %1472 = vmatprep.mubr.f32.mxu0 0.0
        %1473 = vmatmul.mubr.f32.gmra.mrb[0].mxu0 %v1106
        %v1474 = vpop.f32.mrb[0].mxu0
        %v1475 = vadd.f32 0.0, %v1474
        %v1476 = vpop.f32.mrb[0].mxu0
        %1477 = vmatprep.mubr.f32.mxu0 0.0
        %1478 = vmatmul.mubr.f32.gmra.mrb[0].mxu0 %v1109
        %v1479 = vpop.f32.mrb[0].mxu0
        %v1480 = vadd.f32 0.0, %v1479
        %v1481 = vpop.f32.mrb[0].mxu0
        %1482 = vdwg.mxu0
        %v1483 = vsub.f32 0.0, %v1465
        %v1484 = vsub.f32 0.0, %v1470
        %v1485 = vsub.f32 0.0, %v1475
        %v1486 = vsub.f32 0.0, %v1480
        %v1487 = vsub.f32 %v1483, %v1293
        %v1488 = vsub.f32 %v1484, %v1294
        %v1489 = vsub.f32 %v1485, %v1295
        %v1490 = vsub.f32 %v1486, %v1296
        %v1491 = vsub.f32 %v1487, %v1066
        %v1492 = vsub.f32 %v1488, %v1067
        %v1493 = vsub.f32 %v1489, %v1068
        %v1494 = vsub.f32 %v1490, %v1069
        %v1495 = vmul.f32 %v1491, 7.664024
        %v1496 = vmul.f32 %v1492, 7.664024
        %v1497 = vmul.f32 %v1493, 7.664024
        %v1498 = vmul.f32 %v1494, 7.664024
        %v1499 = vadd.f32 %v1305, %v1495
        %v1500 = vadd.f32 %v1306, %v1496
        %v1501 = vadd.f32 %v1307, %v1497
        %v1502 = vadd.f32 %v1308, %v1498
        %v1503 = vld [vmem:[%s4 + $0x168] sm:$0x1]
        %v1504 = vlaneseq
        %v1505 = vshrl.u32 %v1504, 7
        %v1506 = vsub.s32 0, %v1505
        %v1507 = vrot.slane %v1503, %v1506
        %v1509 = vsel %vm1070, %v334, 0
        %v1512 = vsel %vm1070, %v335, 0
        %v1515 = vsel %vm1070, %v336, 0
        %v1518 = vsel %vm1070, %v337, 0
        %1520 = vmatprep.subr.mxu0 0.0
        %1521 = vmatpush1.msra.mxu0 %v1499
        %1522 = vmatprep.subr.mxu0 0.0
        %1523 = vmatpush1.msra.mxu0 %v1500
        %1524 = vmatprep.subr.mxu0 0.0
        %1525 = vmatpush1.msra.mxu0 %v1501
        %1526 = vmatprep.subr.mxu0 0.0
        %1527 = vmatpush1.msra.mxu0 %v1502
        %1528 = vmatprep.subr.mxu0 0.0
        %1529 = vmatpush1.msra.mxu0 0.0
        %1530 = vmatprep.subr.mxu0 0.0
        %1531 = vmatpush1.msra.mxu0 0.0
        %1532 = vmatprep.subr.mxu0 0.0
        %1533 = vmatpush1.msra.mxu0 0.0
        %1534 = vmatprep.subr.mxu0 0.0
        %1535 = vmatpush1.msra.mxu0 0.0
        %1536 = vmatprep.subr.mxu0 0.0
        %1537 = vmatpush1.msra.mxu0 0.0
        %1538 = vmatprep.subr.mxu0 0.0
        %1539 = vmatpush1.msra.mxu0 0.0
        %1540 = vmatprep.subr.mxu0 0.0
        %1541 = vmatpush1.msra.mxu0 0.0
        %1542 = vmatprep.subr.mxu0 0.0
        %1543 = vmatpush1.msra.mxu0 0.0
        %1544 = vmatprep.subr.mxu0 0.0
        %1545 = vmatpush1.msra.mxu0 0.0
        %1546 = vmatprep.subr.mxu0 0.0
        %1547 = vmatpush1.msra.mxu0 0.0
        %1548 = vmatprep.subr.mxu0 0.0
        %1549 = vmatpush1.msra.mxu0 0.0
        %1550 = vmatprep.subr.mxu0 0.0
        %1551 = vmatpush1.msra.mxu0 0.0
        %1552 = vmatprep.subr.mxu0 0.0
        %1553 = vmatpush1.msra.mxu0 0.0
        %1554 = vmatprep.subr.mxu0 0.0
        %1555 = vmatpush1.msra.mxu0 0.0
        %1556 = vmatprep.subr.mxu0 0.0
        %1557 = vmatpush1.msra.mxu0 0.0
        %1558 = vmatprep.subr.mxu0 0.0
        %1559 = vmatpush1.msra.mxu0 0.0
        %1560 = vmatprep.subr.mxu0 0.0
        %1561 = vmatpush1.msra.mxu0 0.0
        %1562 = vmatprep.subr.mxu0 0.0
        %1563 = vmatpush1.msra.mxu0 0.0
        %1564 = vmatprep.subr.mxu0 0.0
        %1565 = vmatpush1.msra.mxu0 0.0
        %1566 = vmatprep.subr.mxu0 0.0
        %1567 = vmatpush1.msra.mxu0 0.0
        %1568 = vmatprep.subr.mxu0 0.0
        %1569 = vmatpush1.msra.mxu0 0.0
        %1570 = vmatprep.subr.mxu0 0.0
        %1571 = vmatpush1.msra.mxu0 0.0
        %1572 = vmatprep.subr.mxu0 0.0
        %1573 = vmatpush1.msra.mxu0 0.0
        %1574 = vmatprep.subr.mxu0 0.0
        %1575 = vmatpush1.msra.mxu0 0.0
        %1576 = vmatprep.subr.mxu0 0.0
        %1577 = vmatpush1.msra.mxu0 0.0
        %1578 = vmatprep.subr.mxu0 0.0
        %1579 = vmatpush1.msra.mxu0 0.0
        %1580 = vmatprep.subr.mxu0 0.0
        %1581 = vmatpush1.msra.mxu0 0.0
        %1582 = vmatprep.subr.mxu0 0.0
        %1583 = vmatpush1.msra.mxu0 0.0
        %1584 = vmatprep.mubr.f32.mxu0 0.0
        %1585 = vmatmul.mubr.f32.gmra.mrb[0].mxu0 %v1509
        %v1586 = vpop.f32.mrb[0].mxu0
        %v1587 = vadd.f32 %v1507, %v1586
        %v1588 = vpop.f32.mrb[0].mxu0
        %1589 = vmatprep.mubr.f32.mxu0 0.0
        %1590 = vmatmul.mubr.f32.gmra.mrb[0].mxu0 %v1512
        %v1591 = vpop.f32.mrb[0].mxu0
        %v1592 = vadd.f32 %v1507, %v1591
        %v1593 = vpop.f32.mrb[0].mxu0
        %1594 = vmatprep.mubr.f32.mxu0 0.0
        %1595 = vmatmul.mubr.f32.gmra.mrb[0].mxu0 %v1515
        %v1596 = vpop.f32.mrb[0].mxu0
        %v1597 = vadd.f32 %v1507, %v1596
        %v1598 = vpop.f32.mrb[0].mxu0
        %1599 = vmatprep.mubr.f32.mxu0 0.0
        %1600 = vmatmul.mubr.f32.gmra.mrb[0].mxu0 %v1518
        %v1601 = vpop.f32.mrb[0].mxu0
        %v1602 = vadd.f32 %v1507, %v1601
        %v1603 = vpop.f32.mrb[0].mxu0
        %1604 = vdwg.mxu0
        %v1605 = vmax.f32 %v1587, 0.0
        %v1606 = vmax.f32 %v1592, 0.0
        %v1607 = vmax.f32 %v1597, 0.0
        %v1608 = vmax.f32 %v1602, 0.0
        %1609 = vmatprep.subr.mxu0 0.0
        %1610 = vmatpush1.msra.mxu0 %v1605
        %1611 = vmatprep.subr.mxu0 0.0
        %1612 = vmatpush1.msra.mxu0 %v1606
        %1613 = vmatprep.subr.mxu0 0.0
        %1614 = vmatpush1.msra.mxu0 %v1607
        %1615 = vmatprep.subr.mxu0 0.0
        %1616 = vmatpush1.msra.mxu0 %v1608
        %1617 = vmatprep.subr.mxu0 0.0
        %1618 = vmatpush1.msra.mxu0 0.0
        %1619 = vmatprep.subr.mxu0 0.0
        %1620 = vmatpush1.msra.mxu0 0.0
        %1621 = vmatprep.subr.mxu0 0.0
        %1622 = vmatpush1.msra.mxu0 0.0
        %1623 = vmatprep.subr.mxu0 0.0
        %1624 = vmatpush1.msra.mxu0 0.0
        %1625 = vmatprep.subr.mxu0 0.0
        %1626 = vmatpush1.msra.mxu0 0.0
        %1627 = vmatprep.subr.mxu0 0.0
        %1628 = vmatpush1.msra.mxu0 0.0
        %1629 = vmatprep.subr.mxu0 0.0
        %1630 = vmatpush1.msra.mxu0 0.0
        %1631 = vmatprep.subr.mxu0 0.0
        %1632 = vmatpush1.msra.mxu0 0.0
        %1633 = vmatprep.subr.mxu0 0.0
        %1634 = vmatpush1.msra.mxu0 0.0
        %1635 = vmatprep.subr.mxu0 0.0
        %1636 = vmatpush1.msra.mxu0 0.0
        %1637 = vmatprep.subr.mxu0 0.0
        %1638 = vmatpush1.msra.mxu0 0.0
        %1639 = vmatprep.subr.mxu0 0.0
        %1640 = vmatpush1.msra.mxu0 0.0
        %1641 = vmatprep.subr.mxu0 0.0
        %1642 = vmatpush1.msra.mxu0 0.0
        %1643 = vmatprep.subr.mxu0 0.0
        %1644 = vmatpush1.msra.mxu0 0.0
        %1645 = vmatprep.subr.mxu0 0.0
        %1646 = vmatpush1.msra.mxu0 0.0
        %1647 = vmatprep.subr.mxu0 0.0
        %1648 = vmatpush1.msra.mxu0 0.0
        %1649 = vmatprep.subr.mxu0 0.0
        %1650 = vmatpush1.msra.mxu0 0.0
        %1651 = vmatprep.subr.mxu0 0.0
        %1652 = vmatpush1.msra.mxu0 0.0
        %1653 = vmatprep.subr.mxu0 0.0
        %1654 = vmatpush1.msra.mxu0 0.0
        %1655 = vmatprep.subr.mxu0 0.0
        %1656 = vmatpush1.msra.mxu0 0.0
        %1657 = vmatprep.subr.mxu0 0.0
        %1658 = vmatpush1.msra.mxu0 0.0
        %1659 = vmatprep.subr.mxu0 0.0
        %1660 = vmatpush1.msra.mxu0 0.0
        %1661 = vmatprep.subr.mxu0 0.0
        %1662 = vmatpush1.msra.mxu0 0.0
        %1663 = vmatprep.subr.mxu0 0.0
        %1664 = vmatpush1.msra.mxu0 0.0
        %1665 = vmatprep.subr.mxu0 0.0
        %1666 = vmatpush1.msra.mxu0 0.0
        %1667 = vmatprep.subr.mxu0 0.0
        %1668 = vmatpush1.msra.mxu0 0.0
        %1669 = vmatprep.subr.mxu0 0.0
        %1670 = vmatpush1.msra.mxu0 0.0
        %1671 = vmatprep.subr.mxu0 0.0
        %1672 = vmatpush1.msra.mxu0 0.0
        %1673 = vmatprep.mubr.f32.mxu0 0.0
        %1674 = vmatmul.mubr.f32.gmra.mrb[0].mxu0 %v1509
        %v1675 = vpop.f32.mrb[0].mxu0
        %v1676 = vadd.f32 0.0, %v1675
        %v1677 = vpop.f32.mrb[0].mxu0
        %1678 = vmatprep.mubr.f32.mxu0 0.0
        %1679 = vmatmul.mubr.f32.gmra.mrb[0].mxu0 %v1512
        %v1680 = vpop.f32.mrb[0].mxu0
        %v1681 = vadd.f32 0.0, %v1680
        %v1682 = vpop.f32.mrb[0].mxu0
        %1683 = vmatprep.mubr.f32.mxu0 0.0
        %1684 = vmatmul.mubr.f32.gmra.mrb[0].mxu0 %v1515
        %v1685 = vpop.f32.mrb[0].mxu0
        %v1686 = vadd.f32 0.0, %v1685
        %v1687 = vpop.f32.mrb[0].mxu0
        %1688 = vmatprep.mubr.f32.mxu0 0.0
        %1689 = vmatmul.mubr.f32.gmra.mrb[0].mxu0 %v1518
        %v1690 = vpop.f32.mrb[0].mxu0
        %v1691 = vadd.f32 0.0, %v1690
        %v1692 = vpop.f32.mrb[0].mxu0
        %1693 = vdwg.mxu0
        %v1694 = vld [vmem:[%s4 + $0x40] sm:$0xff]
        %v1695 = vld [vmem:[%s4 + $0x48] sm:$0xff]
        %v1696 = vld [vmem:[%s4 + $0x50] sm:$0xff]
        %v1697 = vld [vmem:[%s4 + $0x58] sm:$0xff]
        %v1698 = vld [vmem:[%s4 + $0x60] sm:$0xff]
        %v1699 = vld [vmem:[%s4 + $0x68] sm:$0xff]
        %v1700 = vld [vmem:[%s4 + $0x170] sm:$0x1]
        %v1701 = vlaneseq
        %v1702 = vshrl.u32 %v1701, 7
        %v1703 = vsub.s32 0, %v1702
        %v1704 = vrot.slane %v1700, %v1703
        %vm1705 = vcmask 392192
        %v1707 = vsel %vm1705, %v1676, 0
        %v1710 = vsel %vm1705, %v1681, 0
        %v1713 = vsel %vm1705, %v1686, 0
        %v1716 = vsel %vm1705, %v1691, 0
        %1718 = vmatprep.subr.mxu0 0.0
        %1719 = vmatpush1.msra.mxu0 %v1694
        %1720 = vmatprep.subr.mxu0 0.0
        %1721 = vmatpush1.msra.mxu0 %v1695
        %1722 = vmatprep.subr.mxu0 0.0
        %1723 = vmatpush1.msra.mxu0 %v1696
        %1724 = vmatprep.subr.mxu0 0.0
        %1725 = vmatpush1.msra.mxu0 %v1697
        %1726 = vmatprep.subr.mxu0 0.0
        %1727 = vmatpush1.msra.mxu0 %v1698
        %1728 = vmatprep.subr.mxu0 0.0
        %1729 = vmatpush1.msra.mxu0 %v1699
        %1730 = vmatprep.subr.mxu0 0.0
        %1731 = vmatpush1.msra.mxu0 0.0
        %1732 = vmatprep.subr.mxu0 0.0
        %1733 = vmatpush1.msra.mxu0 0.0
        %1734 = vmatprep.subr.mxu0 0.0
        %1735 = vmatpush1.msra.mxu0 0.0
        %1736 = vmatprep.subr.mxu0 0.0
        %1737 = vmatpush1.msra.mxu0 0.0
        %1738 = vmatprep.subr.mxu0 0.0
        %1739 = vmatpush1.msra.mxu0 0.0
        %1740 = vmatprep.subr.mxu0 0.0
        %1741 = vmatpush1.msra.mxu0 0.0
        %1742 = vmatprep.subr.mxu0 0.0
        %1743 = vmatpush1.msra.mxu0 0.0
        %1744 = vmatprep.subr.mxu0 0.0
        %1745 = vmatpush1.msra.mxu0 0.0
        %1746 = vmatprep.subr.mxu0 0.0
        %1747 = vmatpush1.msra.mxu0 0.0
        %1748 = vmatprep.subr.mxu0 0.0
        %1749 = vmatpush1.msra.mxu0 0.0
        %1750 = vmatprep.subr.mxu0 0.0
        %1751 = vmatpush1.msra.mxu0 0.0
        %1752 = vmatprep.subr.mxu0 0.0
        %1753 = vmatpush1.msra.mxu0 0.0
        %1754 = vmatprep.subr.mxu0 0.0
        %1755 = vmatpush1.msra.mxu0 0.0
        %1756 = vmatprep.subr.mxu0 0.0
        %1757 = vmatpush1.msra.mxu0 0.0
        %1758 = vmatprep.subr.mxu0 0.0
        %1759 = vmatpush1.msra.mxu0 0.0
        %1760 = vmatprep.subr.mxu0 0.0
        %1761 = vmatpush1.msra.mxu0 0.0
        %1762 = vmatprep.subr.mxu0 0.0
        %1763 = vmatpush1.msra.mxu0 0.0
        %1764 = vmatprep.subr.mxu0 0.0
        %1765 = vmatpush1.msra.mxu0 0.0
        %1766 = vmatprep.subr.mxu0 0.0
        %1767 = vmatpush1.msra.mxu0 0.0
        %1768 = vmatprep.subr.mxu0 0.0
        %1769 = vmatpush1.msra.mxu0 0.0
        %1770 = vmatprep.subr.mxu0 0.0
        %1771 = vmatpush1.msra.mxu0 0.0
        %1772 = vmatprep.subr.mxu0 0.0
        %1773 = vmatpush1.msra.mxu0 0.0
        %1774 = vmatprep.subr.mxu0 0.0
        %1775 = vmatpush1.msra.mxu0 0.0
        %1776 = vmatprep.subr.mxu0 0.0
        %1777 = vmatpush1.msra.mxu0 0.0
        %1778 = vmatprep.subr.mxu0 0.0
        %1779 = vmatpush1.msra.mxu0 0.0
        %1780 = vmatprep.subr.mxu0 0.0
        %1781 = vmatpush1.msra.mxu0 0.0
        %1782 = vmatprep.mubr.f32.mxu0 0.0
        %1783 = vmatmul.mubr.f32.gmra.mrb[0].mxu0 %v1707
        %v1784 = vpop.f32.mrb[0].mxu0
        %v1785 = vadd.f32 %v1704, %v1784
        %v1786 = vpop.f32.mrb[0].mxu0
        %1787 = vmatprep.mubr.f32.mxu0 0.0
        %1788 = vmatmul.mubr.f32.gmra.mrb[0].mxu0 %v1710
        %v1789 = vpop.f32.mrb[0].mxu0
        %v1790 = vadd.f32 %v1704, %v1789
        %v1791 = vpop.f32.mrb[0].mxu0
        %1792 = vmatprep.mubr.f32.mxu0 0.0
        %1793 = vmatmul.mubr.f32.gmra.mrb[0].mxu0 %v1713
        %v1794 = vpop.f32.mrb[0].mxu0
        %v1795 = vadd.f32 %v1704, %v1794
        %v1796 = vpop.f32.mrb[0].mxu0
        %1797 = vmatprep.mubr.f32.mxu0 0.0
        %1798 = vmatmul.mubr.f32.gmra.mrb[0].mxu0 %v1716
        %v1799 = vpop.f32.mrb[0].mxu0
        %v1800 = vadd.f32 %v1704, %v1799
        %v1801 = vpop.f32.mrb[0].mxu0
        %1802 = vdwg.mxu0
        %v1803 = vld [vmem:[%s4 + $0x70] sm:$0xff]
        %v1804 = vld [vmem:[%s4 + $0x78] sm:$0xff]
        %v1805 = vld [vmem:[%s4 + $0x80] sm:$0xff]
        %v1806 = vld [vmem:[%s4 + $0x88] sm:$0xff]
        %v1807 = vld [vmem:[%s4 + $0x90] sm:$0xff]
        %v1808 = vld [vmem:[%s4 + $0x98] sm:$0xff]
        %1813 = vrot.lane.b32.xlu0 %v1785, 112
        %v1814 = vpop.permute.xlu0 %1813
        %1815 = vrot.lane.b32.xlu0 %v1790, 112
        %v1816 = vpop.permute.xlu0 %1815
        %1817 = vrot.lane.b32.xlu0 %v1795, 112
        %v1818 = vpop.permute.xlu0 %1817
        %1819 = vrot.lane.b32.xlu0 %v1800, 112
        %v1820 = vpop.permute.xlu0 %1819
        %v1821 = vsel %vm968, %v1814, 0
        %v1823 = vsel %vm968, %v1816, 0
        %v1825 = vsel %vm968, %v1818, 0
        %v1827 = vsel %vm968, %v1820, 0
        %1829 = vmatprep.subr.mxu0 0.0
        %1830 = vmatpush1.msra.mxu0 %v1807
        %1831 = vmatprep.subr.mxu0 0.0
        %1832 = vmatpush1.msra.mxu0 %v1808
        %1833 = vmatprep.subr.mxu0 0.0
        %1834 = vmatpush1.msra.mxu0 0.0
        %1835 = vmatprep.subr.mxu0 0.0
        %1836 = vmatpush1.msra.mxu0 0.0
        %1837 = vmatprep.subr.mxu0 0.0
        %1838 = vmatpush1.msra.mxu0 0.0
        %1839 = vmatprep.subr.mxu0 0.0
        %1840 = vmatpush1.msra.mxu0 0.0
        %1841 = vmatprep.subr.mxu0 0.0
        %1842 = vmatpush1.msra.mxu0 0.0
        %1843 = vmatprep.subr.mxu0 0.0
        %1844 = vmatpush1.msra.mxu0 0.0
        %1845 = vmatprep.subr.mxu0 0.0
        %1846 = vmatpush1.msra.mxu0 0.0
        %1847 = vmatprep.subr.mxu0 0.0
        %1848 = vmatpush1.msra.mxu0 0.0
        %1849 = vmatprep.subr.mxu0 0.0
        %1850 = vmatpush1.msra.mxu0 0.0
        %1851 = vmatprep.subr.mxu0 0.0
        %1852 = vmatpush1.msra.mxu0 0.0
        %1853 = vmatprep.subr.mxu0 0.0
        %1854 = vmatpush1.msra.mxu0 0.0
        %1855 = vmatprep.subr.mxu0 0.0
        %1856 = vmatpush1.msra.mxu0 0.0
        %1857 = vmatprep.subr.mxu0 0.0
        %1858 = vmatpush1.msra.mxu0 0.0
        %1859 = vmatprep.subr.mxu0 0.0
        %1860 = vmatpush1.msra.mxu0 0.0
        %1861 = vmatprep.subr.mxu0 0.0
        %1862 = vmatpush1.msra.mxu0 0.0
        %1863 = vmatprep.subr.mxu0 0.0
        %1864 = vmatpush1.msra.mxu0 0.0
        %1865 = vmatprep.subr.mxu0 0.0
        %1866 = vmatpush1.msra.mxu0 0.0
        %1867 = vmatprep.subr.mxu0 0.0
        %1868 = vmatpush1.msra.mxu0 0.0
        %1869 = vmatprep.subr.mxu0 0.0
        %1870 = vmatpush1.msra.mxu0 0.0
        %1871 = vmatprep.subr.mxu0 0.0
        %1872 = vmatpush1.msra.mxu0 0.0
        %1873 = vmatprep.subr.mxu0 0.0
        %1874 = vmatpush1.msra.mxu0 0.0
        %1875 = vmatprep.subr.mxu0 0.0
        %1876 = vmatpush1.msra.mxu0 0.0
        %1877 = vmatprep.subr.mxu0 0.0
        %1878 = vmatpush1.msra.mxu0 0.0
        %1879 = vmatprep.subr.mxu0 0.0
        %1880 = vmatpush1.msra.mxu0 0.0
        %1881 = vmatprep.subr.mxu0 0.0
        %1882 = vmatpush1.msra.mxu0 0.0
        %1883 = vmatprep.subr.mxu0 0.0
        %1884 = vmatpush1.msra.mxu0 0.0
        %1885 = vmatprep.subr.mxu0 0.0
        %1886 = vmatpush1.msra.mxu0 0.0
        %1887 = vmatprep.subr.mxu0 0.0
        %1888 = vmatpush1.msra.mxu0 0.0
        %1889 = vmatprep.subr.mxu0 0.0
        %1890 = vmatpush1.msra.mxu0 0.0
        %1891 = vmatprep.subr.mxu0 0.0
        %1892 = vmatpush1.msra.mxu0 0.0
        %1893 = vmatprep.mubr.f32.mxu0 0.0
        %1894 = vmatmul.mubr.f32.gmra.mrb[0].mxu0 %v1821
        %v1895 = vpop.f32.mrb[0].mxu0
        %v1896 = vadd.f32 0.0, %v1895
        %v1897 = vpop.f32.mrb[0].mxu0
        %1898 = vmatprep.mubr.f32.mxu0 0.0
        %1899 = vmatmul.mubr.f32.gmra.mrb[0].mxu0 %v1823
        %v1900 = vpop.f32.mrb[0].mxu0
        %v1901 = vadd.f32 0.0, %v1900
        %v1902 = vpop.f32.mrb[0].mxu0
        %1903 = vmatprep.mubr.f32.mxu0 0.0
        %1904 = vmatmul.mubr.f32.gmra.mrb[0].mxu0 %v1825
        %v1905 = vpop.f32.mrb[0].mxu0
        %v1906 = vadd.f32 0.0, %v1905
        %v1907 = vpop.f32.mrb[0].mxu0
        %1908 = vmatprep.mubr.f32.mxu0 0.0
        %1909 = vmatmul.mubr.f32.gmra.mrb[0].mxu0 %v1827
        %v1910 = vpop.f32.mrb[0].mxu0
        %v1911 = vadd.f32 0.0, %v1910
        %v1912 = vpop.f32.mrb[0].mxu0
        %1913 = vdwg.mxu0
        %1918 = vrot.lane.b32.xlu0 %v1605, 112
        %v1919 = vpop.permute.xlu0 %1918
        %1920 = vrot.lane.b32.xlu0 %v1606, 112
        %v1921 = vpop.permute.xlu0 %1920
        %1922 = vrot.lane.b32.xlu0 %v1607, 112
        %v1923 = vpop.permute.xlu0 %1922
        %1924 = vrot.lane.b32.xlu0 %v1608, 112
        %v1925 = vpop.permute.xlu0 %1924
        %v1926 = vsel %vm1070, %v1919, 0
        %v1928 = vsel %vm1070, %v1921, 0
        %v1930 = vsel %vm1070, %v1923, 0
        %v1932 = vsel %vm1070, %v1925, 0
        %1934 = vmatprep.subr.mxu0 0.0
        %1935 = vmatpush1.msra.mxu0 %v1803
        %1936 = vmatprep.subr.mxu0 0.0
        %1937 = vmatpush1.msra.mxu0 %v1804
        %1938 = vmatprep.subr.mxu0 0.0
        %1939 = vmatpush1.msra.mxu0 %v1805
        %1940 = vmatprep.subr.mxu0 0.0
        %1941 = vmatpush1.msra.mxu0 %v1806
        %1942 = vmatprep.subr.mxu0 0.0
        %1943 = vmatpush1.msra.mxu0 0.0
        %1944 = vmatprep.subr.mxu0 0.0
        %1945 = vmatpush1.msra.mxu0 0.0
        %1946 = vmatprep.subr.mxu0 0.0
        %1947 = vmatpush1.msra.mxu0 0.0
        %1948 = vmatprep.subr.mxu0 0.0
        %1949 = vmatpush1.msra.mxu0 0.0
        %1950 = vmatprep.subr.mxu0 0.0
        %1951 = vmatpush1.msra.mxu0 0.0
        %1952 = vmatprep.subr.mxu0 0.0
        %1953 = vmatpush1.msra.mxu0 0.0
        %1954 = vmatprep.subr.mxu0 0.0
        %1955 = vmatpush1.msra.mxu0 0.0
        %1956 = vmatprep.subr.mxu0 0.0
        %1957 = vmatpush1.msra.mxu0 0.0
        %1958 = vmatprep.subr.mxu0 0.0
        %1959 = vmatpush1.msra.mxu0 0.0
        %1960 = vmatprep.subr.mxu0 0.0
        %1961 = vmatpush1.msra.mxu0 0.0
        %1962 = vmatprep.subr.mxu0 0.0
        %1963 = vmatpush1.msra.mxu0 0.0
        %1964 = vmatprep.subr.mxu0 0.0
        %1965 = vmatpush1.msra.mxu0 0.0
        %1966 = vmatprep.subr.mxu0 0.0
        %1967 = vmatpush1.msra.mxu0 0.0
        %1968 = vmatprep.subr.mxu0 0.0
        %1969 = vmatpush1.msra.mxu0 0.0
        %1970 = vmatprep.subr.mxu0 0.0
        %1971 = vmatpush1.msra.mxu0 0.0
        %1972 = vmatprep.subr.mxu0 0.0
        %1973 = vmatpush1.msra.mxu0 0.0
        %1974 = vmatprep.subr.mxu0 0.0
        %1975 = vmatpush1.msra.mxu0 0.0
        %1976 = vmatprep.subr.mxu0 0.0
        %1977 = vmatpush1.msra.mxu0 0.0
        %1978 = vmatprep.subr.mxu0 0.0
        %1979 = vmatpush1.msra.mxu0 0.0
        %1980 = vmatprep.subr.mxu0 0.0
        %1981 = vmatpush1.msra.mxu0 0.0
        %1982 = vmatprep.subr.mxu0 0.0
        %1983 = vmatpush1.msra.mxu0 0.0
        %1984 = vmatprep.subr.mxu0 0.0
        %1985 = vmatpush1.msra.mxu0 0.0
        %1986 = vmatprep.subr.mxu0 0.0
        %1987 = vmatpush1.msra.mxu0 0.0
        %1988 = vmatprep.subr.mxu0 0.0
        %1989 = vmatpush1.msra.mxu0 0.0
        %1990 = vmatprep.subr.mxu0 0.0
        %1991 = vmatpush1.msra.mxu0 0.0
        %1992 = vmatprep.subr.mxu0 0.0
        %1993 = vmatpush1.msra.mxu0 0.0
        %1994 = vmatprep.subr.mxu0 0.0
        %1995 = vmatpush1.msra.mxu0 0.0
        %1996 = vmatprep.subr.mxu0 0.0
        %1997 = vmatpush1.msra.mxu0 0.0
        %1998 = vmatprep.mubr.f32.mxu0 0.0
        %1999 = vmatmul.mubr.f32.gmra.mrb[0].mxu0 %v1926
        %v2000 = vpop.f32.mrb[0].mxu0
        %v2001 = vadd.f32 %v1896, %v2000
        %v2002 = vpop.f32.mrb[0].mxu0
        %2003 = vmatprep.mubr.f32.mxu0 0.0
        %2004 = vmatmul.mubr.f32.gmra.mrb[0].mxu0 %v1928
        %v2005 = vpop.f32.mrb[0].mxu0
        %v2006 = vadd.f32 %v1901, %v2005
        %v2007 = vpop.f32.mrb[0].mxu0
        %2008 = vmatprep.mubr.f32.mxu0 0.0
        %2009 = vmatmul.mubr.f32.gmra.mrb[0].mxu0 %v1930
        %v2010 = vpop.f32.mrb[0].mxu0
        %v2011 = vadd.f32 %v1906, %v2010
        %v2012 = vpop.f32.mrb[0].mxu0
        %2013 = vmatprep.mubr.f32.mxu0 0.0
        %2014 = vmatmul.mubr.f32.gmra.mrb[0].mxu0 %v1932
        %v2015 = vpop.f32.mrb[0].mxu0
        %v2016 = vadd.f32 %v1911, %v2015
        %v2017 = vpop.f32.mrb[0].mxu0
        %2018 = vdwg.mxu0
        %v2019 = vld [vmem:[%s4 + $0x178] sm:$0x1]
        %v2020 = vlaneseq
        %v2021 = vshrl.u32 %v2020, 7
        %v2022 = vsub.s32 0, %v2021
        %v2023 = vrot.slane %v2019, %v2022
        %v2024 = vadd.f32 %v2001, %v2023
        %v2025 = vadd.f32 %v2006, %v2023
        %v2026 = vadd.f32 %v2011, %v2023
        %v2027 = vadd.f32 %v2016, %v2023
        %v2028 = vsel %vm968, %v2024, -inf
        %2029 = vmax.xlane.f32.xlu0 %v2028
        %v2030 = vpop.xlane.xlu0 %2029
        %v2031 = vsel %vm968, %v2025, -inf
        %2032 = vmax.xlane.f32.xlu0 %v2031
        %v2033 = vpop.xlane.xlu0 %2032
        %v2034 = vsel %vm968, %v2026, -inf
        %2035 = vmax.xlane.f32.xlu0 %v2034
        %v2036 = vpop.xlane.xlu0 %2035
        %v2037 = vsel %vm968, %v2027, -inf
        %2038 = vmax.xlane.f32.xlu0 %v2037
        %v2039 = vpop.xlane.xlu0 %2038
        %v2040 = vsub.f32 %v2024, %v2030
        %v2041 = vsub.f32 %v2025, %v2033
        %v2042 = vsub.f32 %v2026, %v2036
        %v2043 = vsub.f32 %v2027, %v2039
        %v2044 = vmul.f32 %v2040, 1.442695
        %v2045 = vpow.pop %v2044
        %v2046 = vmul.f32 %v2041, 1.442695
        %v2047 = vpow.pop %v2046
        %v2048 = vmul.f32 %v2042, 1.442695
        %v2049 = vpow.pop %v2048
        %v2050 = vmul.f32 %v2043, 1.442695
        %v2051 = vpow.pop %v2050
        %v2052 = vsel %vm968, %v2045, 0.0
        %2053 = vadd.xlane.f32.xlu0 %v2052
        %v2054 = vpop.xlane.xlu0 %2053
        %v2055 = vsel %vm968, %v2047, 0.0
        %2056 = vadd.xlane.f32.xlu0 %v2055
        %v2057 = vpop.xlane.xlu0 %2056
        %v2058 = vsel %vm968, %v2049, 0.0
        %2059 = vadd.xlane.f32.xlu0 %v2058
        %v2060 = vpop.xlane.xlu0 %2059
        %v2061 = vsel %vm968, %v2051, 0.0
        %2062 = vadd.xlane.f32.xlu0 %v2061
        %v2063 = vpop.xlane.xlu0 %2062
        %v2064 = vrcp.pop %v2054
        %v2065 = vrcp.pop %v2057
        %v2066 = vrcp.pop %v2060
        %v2067 = vrcp.pop %v2063
        %v2068 = vmul.f32 %v2045, %v2064
        %v2069 = vmul.f32 %v2047, %v2065
        %v2070 = vmul.f32 %v2049, %v2066
        %v2071 = vmul.f32 %v2051, %v2067
        %2072 = vst.msk [vmem:[%s321] sm:$0xff] %vm968, %v2068
        %2073 = vst.msk [vmem:[%s321 + $0x8] sm:$0xff] %vm968, %v2069
        %2074 = vst.msk [vmem:[%s321 + $0x10] sm:$0xff] %vm968, %v2070
        %2075 = vst.msk [vmem:[%s321 + $0x18] sm:$0xff] %vm968, %v2071
        %2076 = vxpose.xlu0.b32.start [1/16] %v2068, 128
        %2077 = vxpose.xlu0.b32.cont [2/16] %v2069, 128
        %2078 = vxpose.xlu0.b32.cont [3/16] %v2070, 128
        %2079 = vxpose.xlu0.b32.cont [4/16] %v2071, 128
        %2080 = vxpose.xlu0.b32.cont [5/16] 0.0, 128
        %2081 = vxpose.xlu0.b32.cont [6/16] 0.0, 128
        %2082 = vxpose.xlu0.b32.cont [7/16] 0.0, 128
        %2083 = vxpose.xlu0.b32.cont [8/16] 0.0, 128
        %2084 = vxpose.xlu0.b32.cont [9/16] 0.0, 128
        %2085 = vxpose.xlu0.b32.cont [10/16] 0.0, 128
        %2086 = vxpose.xlu0.b32.cont [11/16] 0.0, 128
        %2087 = vxpose.xlu0.b32.cont [12/16] 0.0, 128
        %2088 = vxpose.xlu0.b32.cont [13/16] 0.0, 128
        %2089 = vxpose.xlu0.b32.cont [14/16] 0.0, 128
        %2090 = vxpose.xlu0.b32.cont [15/16] 0.0, 128
        %2091 = vxpose.xlu0.b32.end [16/16] 0.0, 128
        %v2092 = vpop.trf.xlu0
        %v2093 = vpop.trf.xlu0
        %v2094 = vpop.trf.xlu0
        %v2095 = vpop.trf.xlu0
        %v2096 = vpop.trf.xlu0
        %v2097 = vpop.trf.xlu0
        %v2098 = vpop.trf.xlu0
        %v2099 = vpop.trf.xlu0
        %v2100 = vpop.trf.xlu0
        %v2101 = vpop.trf.xlu0
        %v2102 = vpop.trf.xlu0
        %v2103 = vpop.trf.xlu0
        %v2104 = vpop.trf.xlu0
        %v2105 = vpop.trf.xlu0
        %v2106 = vpop.trf.xlu0
        %v2107 = vpop.trf.xlu0
        %v2109 = vsel %vm1070, %v2092, 0
        %v2112 = vsel %vm1070, %v2093, 0
        %2114 = vmatprep.subr.mxu0 0.0
        %2115 = vmatpush1.msra.mxu0 %v1605
        %2116 = vmatprep.subr.mxu0 0.0
        %2117 = vmatpush1.msra.mxu0 %v1606
        %2118 = vmatprep.subr.mxu0 0.0
        %2119 = vmatpush1.msra.mxu0 %v1607
        %2120 = vmatprep.subr.mxu0 0.0
        %2121 = vmatpush1.msra.mxu0 %v1608
        %2122 = vmatprep.subr.mxu0 0.0
        %2123 = vmatpush1.msra.mxu0 0.0
        %2124 = vmatprep.subr.mxu0 0.0
        %2125 = vmatpush1.msra.mxu0 0.0
        %2126 = vmatprep.subr.mxu0 0.0
        %2127 = vmatpush1.msra.mxu0 0.0
        %2128 = vmatprep.subr.mxu0 0.0
        %2129 = vmatpush1.msra.mxu0 0.0
        %2130 = vmatprep.subr.mxu0 0.0
        %2131 = vmatpush1.msra.mxu0 0.0
        %2132 = vmatprep.subr.mxu0 0.0
        %2133 = vmatpush1.msra.mxu0 0.0
        %2134 = vmatprep.subr.mxu0 0.0
        %2135 = vmatpush1.msra.mxu0 0.0
        %2136 = vmatprep.subr.mxu0 0.0
        %2137 = vmatpush1.msra.mxu0 0.0
        %2138 = vmatprep.subr.mxu0 0.0
        %2139 = vmatpush1.msra.mxu0 0.0
        %2140 = vmatprep.subr.mxu0 0.0
        %2141 = vmatpush1.msra.mxu0 0.0
        %2142 = vmatprep.subr.mxu0 0.0
        %2143 = vmatpush1.msra.mxu0 0.0
        %2144 = vmatprep.subr.mxu0 0.0
        %2145 = vmatpush1.msra.mxu0 0.0
        %2146 = vmatprep.subr.mxu0 0.0
        %2147 = vmatpush1.msra.mxu0 0.0
        %2148 = vmatprep.subr.mxu0 0.0
        %2149 = vmatpush1.msra.mxu0 0.0
        %2150 = vmatprep.subr.mxu0 0.0
        %2151 = vmatpush1.msra.mxu0 0.0
        %2152 = vmatprep.subr.mxu0 0.0
        %2153 = vmatpush1.msra.mxu0 0.0
        %2154 = vmatprep.subr.mxu0 0.0
        %2155 = vmatpush1.msra.mxu0 0.0
        %2156 = vmatprep.subr.mxu0 0.0
        %2157 = vmatpush1.msra.mxu0 0.0
        %2158 = vmatprep.subr.mxu0 0.0
        %2159 = vmatpush1.msra.mxu0 0.0
        %2160 = vmatprep.subr.mxu0 0.0
        %2161 = vmatpush1.msra.mxu0 0.0
        %2162 = vmatprep.subr.mxu0 0.0
        %2163 = vmatpush1.msra.mxu0 0.0
        %2164 = vmatprep.subr.mxu0 0.0
        %2165 = vmatpush1.msra.mxu0 0.0
        %2166 = vmatprep.subr.mxu0 0.0
        %2167 = vmatpush1.msra.mxu0 0.0
        %2168 = vmatprep.subr.mxu0 0.0
        %2169 = vmatpush1.msra.mxu0 0.0
        %2170 = vmatprep.subr.mxu0 0.0
        %2171 = vmatpush1.msra.mxu0 0.0
        %2172 = vmatprep.subr.mxu0 0.0
        %2173 = vmatpush1.msra.mxu0 0.0
        %2174 = vmatprep.subr.mxu0 0.0
        %2175 = vmatpush1.msra.mxu0 0.0
        %2176 = vmatprep.subr.mxu0 0.0
        %2177 = vmatpush1.msra.mxu0 0.0
        %2178 = vmatprep.mubr.f32.mxu0 0.0
        %2179 = vmatmul.mubr.f32.gmra.mrb[0].mxu0 %v2109
        %v2180 = vpop.f32.mrb[0].mxu0
        %v2181 = vadd.f32 0.0, %v2180
        %v2182 = vpop.f32.mrb[0].mxu0
        %2183 = vmatprep.mubr.f32.mxu0 0.0
        %2184 = vmatmul.mubr.f32.gmra.mrb[0].mxu0 %v2112
        %v2185 = vpop.f32.mrb[0].mxu0
        %v2186 = vadd.f32 0.0, %v2185
        %v2187 = vpop.f32.mrb[0].mxu0
        %2188 = vdwg.mxu0
        %2189 = vmatprep.subr.mxu0 0.0
        %2190 = vmatpush1.msra.mxu0 %v1785
        %2191 = vmatprep.subr.mxu0 0.0
        %2192 = vmatpush1.msra.mxu0 %v1790
        %2193 = vmatprep.subr.mxu0 0.0
        %2194 = vmatpush1.msra.mxu0 %v1795
        %2195 = vmatprep.subr.mxu0 0.0
        %2196 = vmatpush1.msra.mxu0 %v1800
        %2197 = vmatprep.subr.mxu0 0.0
        %2198 = vmatpush1.msra.mxu0 0.0
        %2199 = vmatprep.subr.mxu0 0.0
        %2200 = vmatpush1.msra.mxu0 0.0
        %2201 = vmatprep.subr.mxu0 0.0
        %2202 = vmatpush1.msra.mxu0 0.0
        %2203 = vmatprep.subr.mxu0 0.0
        %2204 = vmatpush1.msra.mxu0 0.0
        %2205 = vmatprep.subr.mxu0 0.0
        %2206 = vmatpush1.msra.mxu0 0.0
        %2207 = vmatprep.subr.mxu0 0.0
        %2208 = vmatpush1.msra.mxu0 0.0
        %2209 = vmatprep.subr.mxu0 0.0
        %2210 = vmatpush1.msra.mxu0 0.0
        %2211 = vmatprep.subr.mxu0 0.0
        %2212 = vmatpush1.msra.mxu0 0.0
        %2213 = vmatprep.subr.mxu0 0.0
        %2214 = vmatpush1.msra.mxu0 0.0
        %2215 = vmatprep.subr.mxu0 0.0
        %2216 = vmatpush1.msra.mxu0 0.0
        %2217 = vmatprep.subr.mxu0 0.0
        %2218 = vmatpush1.msra.mxu0 0.0
        %2219 = vmatprep.subr.mxu0 0.0
        %2220 = vmatpush1.msra.mxu0 0.0
        %2221 = vmatprep.subr.mxu0 0.0
        %2222 = vmatpush1.msra.mxu0 0.0
        %2223 = vmatprep.subr.mxu0 0.0
        %2224 = vmatpush1.msra.mxu0 0.0
        %2225 = vmatprep.subr.mxu0 0.0
        %2226 = vmatpush1.msra.mxu0 0.0
        %2227 = vmatprep.subr.mxu0 0.0
        %2228 = vmatpush1.msra.mxu0 0.0
        %2229 = vmatprep.subr.mxu0 0.0
        %2230 = vmatpush1.msra.mxu0 0.0
        %2231 = vmatprep.subr.mxu0 0.0
        %2232 = vmatpush1.msra.mxu0 0.0
        %2233 = vmatprep.subr.mxu0 0.0
        %2234 = vmatpush1.msra.mxu0 0.0
        %2235 = vmatprep.subr.mxu0 0.0
        %2236 = vmatpush1.msra.mxu0 0.0
        %2237 = vmatprep.subr.mxu0 0.0
        %2238 = vmatpush1.msra.mxu0 0.0
        %2239 = vmatprep.subr.mxu0 0.0
        %2240 = vmatpush1.msra.mxu0 0.0
        %2241 = vmatprep.subr.mxu0 0.0
        %2242 = vmatpush1.msra.mxu0 0.0
        %2243 = vmatprep.subr.mxu0 0.0
        %2244 = vmatpush1.msra.mxu0 0.0
        %2245 = vmatprep.subr.mxu0 0.0
        %2246 = vmatpush1.msra.mxu0 0.0
        %2247 = vmatprep.subr.mxu0 0.0
        %2248 = vmatpush1.msra.mxu0 0.0
        %2249 = vmatprep.subr.mxu0 0.0
        %2250 = vmatpush1.msra.mxu0 0.0
        %2251 = vmatprep.subr.mxu0 0.0
        %2252 = vmatpush1.msra.mxu0 0.0
        %2253 = vmatprep.mubr.f32.mxu0 0.0
        %2254 = vmatmul.mubr.f32.gmra.mrb[0].mxu0 %v2109
        %v2255 = vpop.f32.mrb[0].mxu0
        %v2256 = vadd.f32 0.0, %v2255
        %v2257 = vpop.f32.mrb[0].mxu0
        %2258 = vmatprep.mubr.f32.mxu0 0.0
        %2259 = vmatmul.mubr.f32.gmra.mrb[0].mxu0 %v2112
        %v2260 = vpop.f32.mrb[0].mxu0
        %v2261 = vadd.f32 0.0, %v2260
        %v2262 = vpop.f32.mrb[0].mxu0
        %2263 = vdwg.mxu0
        %2264 = vmatprep.subr.mxu0 0.0
        %2265 = vmatpush1.msra.mxu0 %v334
        %2266 = vmatprep.subr.mxu0 0.0
        %2267 = vmatpush1.msra.mxu0 %v335
        %2268 = vmatprep.subr.mxu0 0.0
        %2269 = vmatpush1.msra.mxu0 %v336
        %2270 = vmatprep.subr.mxu0 0.0
        %2271 = vmatpush1.msra.mxu0 %v337
        %2272 = vmatprep.subr.mxu0 0.0
        %2273 = vmatpush1.msra.mxu0 0.0
        %2274 = vmatprep.subr.mxu0 0.0
        %2275 = vmatpush1.msra.mxu0 0.0
        %2276 = vmatprep.subr.mxu0 0.0
        %2277 = vmatpush1.msra.mxu0 0.0
        %2278 = vmatprep.subr.mxu0 0.0
        %2279 = vmatpush1.msra.mxu0 0.0
        %2280 = vmatprep.subr.mxu0 0.0
        %2281 = vmatpush1.msra.mxu0 0.0
        %2282 = vmatprep.subr.mxu0 0.0
        %2283 = vmatpush1.msra.mxu0 0.0
        %2284 = vmatprep.subr.mxu0 0.0
        %2285 = vmatpush1.msra.mxu0 0.0
        %2286 = vmatprep.subr.mxu0 0.0
        %2287 = vmatpush1.msra.mxu0 0.0
        %2288 = vmatprep.subr.mxu0 0.0
        %2289 = vmatpush1.msra.mxu0 0.0
        %2290 = vmatprep.subr.mxu0 0.0
        %2291 = vmatpush1.msra.mxu0 0.0
        %2292 = vmatprep.subr.mxu0 0.0
        %2293 = vmatpush1.msra.mxu0 0.0
        %2294 = vmatprep.subr.mxu0 0.0
        %2295 = vmatpush1.msra.mxu0 0.0
        %2296 = vmatprep.subr.mxu0 0.0
        %2297 = vmatpush1.msra.mxu0 0.0
        %2298 = vmatprep.subr.mxu0 0.0
        %2299 = vmatpush1.msra.mxu0 0.0
        %2300 = vmatprep.subr.mxu0 0.0
        %2301 = vmatpush1.msra.mxu0 0.0
        %2302 = vmatprep.subr.mxu0 0.0
        %2303 = vmatpush1.msra.mxu0 0.0
        %2304 = vmatprep.subr.mxu0 0.0
        %2305 = vmatpush1.msra.mxu0 0.0
        %2306 = vmatprep.subr.mxu0 0.0
        %2307 = vmatpush1.msra.mxu0 0.0
        %2308 = vmatprep.subr.mxu0 0.0
        %2309 = vmatpush1.msra.mxu0 0.0
        %2310 = vmatprep.subr.mxu0 0.0
        %2311 = vmatpush1.msra.mxu0 0.0
        %2312 = vmatprep.subr.mxu0 0.0
        %2313 = vmatpush1.msra.mxu0 0.0
        %2314 = vmatprep.subr.mxu0 0.0
        %2315 = vmatpush1.msra.mxu0 0.0
        %2316 = vmatprep.subr.mxu0 0.0
        %2317 = vmatpush1.msra.mxu0 0.0
        %2318 = vmatprep.subr.mxu0 0.0
        %2319 = vmatpush1.msra.mxu0 0.0
        %2320 = vmatprep.subr.mxu0 0.0
        %2321 = vmatpush1.msra.mxu0 0.0
        %2322 = vmatprep.subr.mxu0 0.0
        %2323 = vmatpush1.msra.mxu0 0.0
        %2324 = vmatprep.subr.mxu0 0.0
        %2325 = vmatpush1.msra.mxu0 0.0
        %2326 = vmatprep.subr.mxu0 0.0
        %2327 = vmatpush1.msra.mxu0 0.0
        %2328 = vmatprep.mubr.f32.mxu0 0.0
        %2329 = vmatmul.mubr.f32.gmra.mrb[0].mxu0 %v2109
        %v2330 = vpop.f32.mrb[0].mxu0
        %v2331 = vadd.f32 0.0, %v2330
        %v2332 = vpop.f32.mrb[0].mxu0
        %2333 = vmatprep.mubr.f32.mxu0 0.0
        %2334 = vmatmul.mubr.f32.gmra.mrb[0].mxu0 %v2112
        %v2335 = vpop.f32.mrb[0].mxu0
        %v2336 = vadd.f32 0.0, %v2335
        %v2337 = vpop.f32.mrb[0].mxu0
        %2338 = vdwg.mxu0
        %v2340 = vsel %vm1070, %v2331, 0
        %v2343 = vsel %vm1070, %v2336, 0
        %2345 = vmatprep.subr.mxu0 0.0
        %2346 = vmatpush1.msra.mxu0 %v2068
        %2347 = vmatprep.subr.mxu0 0.0
        %2348 = vmatpush1.msra.mxu0 %v2069
        %2349 = vmatprep.subr.mxu0 0.0
        %2350 = vmatpush1.msra.mxu0 %v2070
        %2351 = vmatprep.subr.mxu0 0.0
        %2352 = vmatpush1.msra.mxu0 %v2071
        %2353 = vmatprep.subr.mxu0 0.0
        %2354 = vmatpush1.msra.mxu0 0.0
        %2355 = vmatprep.subr.mxu0 0.0
        %2356 = vmatpush1.msra.mxu0 0.0
        %2357 = vmatprep.subr.mxu0 0.0
        %2358 = vmatpush1.msra.mxu0 0.0
        %2359 = vmatprep.subr.mxu0 0.0
        %2360 = vmatpush1.msra.mxu0 0.0
        %2361 = vmatprep.subr.mxu0 0.0
        %2362 = vmatpush1.msra.mxu0 0.0
        %2363 = vmatprep.subr.mxu0 0.0
        %2364 = vmatpush1.msra.mxu0 0.0
        %2365 = vmatprep.subr.mxu0 0.0
        %2366 = vmatpush1.msra.mxu0 0.0
        %2367 = vmatprep.subr.mxu0 0.0
        %2368 = vmatpush1.msra.mxu0 0.0
        %2369 = vmatprep.subr.mxu0 0.0
        %2370 = vmatpush1.msra.mxu0 0.0
        %2371 = vmatprep.subr.mxu0 0.0
        %2372 = vmatpush1.msra.mxu0 0.0
        %2373 = vmatprep.subr.mxu0 0.0
        %2374 = vmatpush1.msra.mxu0 0.0
        %2375 = vmatprep.subr.mxu0 0.0
        %2376 = vmatpush1.msra.mxu0 0.0
        %2377 = vmatprep.subr.mxu0 0.0
        %2378 = vmatpush1.msra.mxu0 0.0
        %2379 = vmatprep.subr.mxu0 0.0
        %2380 = vmatpush1.msra.mxu0 0.0
        %2381 = vmatprep.subr.mxu0 0.0
        %2382 = vmatpush1.msra.mxu0 0.0
        %2383 = vmatprep.subr.mxu0 0.0
        %2384 = vmatpush1.msra.mxu0 0.0
        %2385 = vmatprep.subr.mxu0 0.0
        %2386 = vmatpush1.msra.mxu0 0.0
        %2387 = vmatprep.subr.mxu0 0.0
        %2388 = vmatpush1.msra.mxu0 0.0
        %2389 = vmatprep.subr.mxu0 0.0
        %2390 = vmatpush1.msra.mxu0 0.0
        %2391 = vmatprep.subr.mxu0 0.0
        %2392 = vmatpush1.msra.mxu0 0.0
        %2393 = vmatprep.subr.mxu0 0.0
        %2394 = vmatpush1.msra.mxu0 0.0
        %2395 = vmatprep.subr.mxu0 0.0
        %2396 = vmatpush1.msra.mxu0 0.0
        %2397 = vmatprep.subr.mxu0 0.0
        %2398 = vmatpush1.msra.mxu0 0.0
        %2399 = vmatprep.subr.mxu0 0.0
        %2400 = vmatpush1.msra.mxu0 0.0
        %2401 = vmatprep.subr.mxu0 0.0
        %2402 = vmatpush1.msra.mxu0 0.0
        %2403 = vmatprep.subr.mxu0 0.0
        %2404 = vmatpush1.msra.mxu0 0.0
        %2405 = vmatprep.subr.mxu0 0.0
        %2406 = vmatpush1.msra.mxu0 0.0
        %2407 = vmatprep.subr.mxu0 0.0
        %2408 = vmatpush1.msra.mxu0 0.0
        %2409 = vmatprep.mubr.f32.mxu0 0.0
        %2410 = vmatmul.mubr.f32.gmra.mrb[0].mxu0 %v2340
        %v2411 = vpop.f32.mrb[0].mxu0
        %v2412 = vadd.f32 0.0, %v2411
        %v2413 = vpop.f32.mrb[0].mxu0
        %2414 = vmatprep.mubr.f32.mxu0 0.0
        %2415 = vmatmul.mubr.f32.gmra.mrb[0].mxu0 %v2343
        %v2416 = vpop.f32.mrb[0].mxu0
        %v2417 = vadd.f32 0.0, %v2416
        %v2418 = vpop.f32.mrb[0].mxu0
        %2419 = vdwg.mxu0
        %v2420 = vld [vmem:[%s4 + $0xa0] sm:$0xff]
        %v2421 = vld [vmem:[%s4 + $0xa8] sm:$0xff]
        %v2422 = vld [vmem:[%s4 + $0xb0] sm:$0xff]
        %v2423 = vld [vmem:[%s4 + $0xb8] sm:$0xff]
        %v2425 = vsel %vm968, %v2256, 0
        %v2428 = vsel %vm968, %v2261, 0
        %2430 = vmatprep.subr.mxu0 0.0
        %2431 = vmatpush1.msra.mxu0 %v2422
        %2432 = vmatprep.subr.mxu0 0.0
        %2433 = vmatpush1.msra.mxu0 %v2423
        %2434 = vmatprep.subr.mxu0 0.0
        %2435 = vmatpush1.msra.mxu0 0.0
        %2436 = vmatprep.subr.mxu0 0.0
        %2437 = vmatpush1.msra.mxu0 0.0
        %2438 = vmatprep.subr.mxu0 0.0
        %2439 = vmatpush1.msra.mxu0 0.0
        %2440 = vmatprep.subr.mxu0 0.0
        %2441 = vmatpush1.msra.mxu0 0.0
        %2442 = vmatprep.subr.mxu0 0.0
        %2443 = vmatpush1.msra.mxu0 0.0
        %2444 = vmatprep.subr.mxu0 0.0
        %2445 = vmatpush1.msra.mxu0 0.0
        %2446 = vmatprep.subr.mxu0 0.0
        %2447 = vmatpush1.msra.mxu0 0.0
        %2448 = vmatprep.subr.mxu0 0.0
        %2449 = vmatpush1.msra.mxu0 0.0
        %2450 = vmatprep.subr.mxu0 0.0
        %2451 = vmatpush1.msra.mxu0 0.0
        %2452 = vmatprep.subr.mxu0 0.0
        %2453 = vmatpush1.msra.mxu0 0.0
        %2454 = vmatprep.subr.mxu0 0.0
        %2455 = vmatpush1.msra.mxu0 0.0
        %2456 = vmatprep.subr.mxu0 0.0
        %2457 = vmatpush1.msra.mxu0 0.0
        %2458 = vmatprep.subr.mxu0 0.0
        %2459 = vmatpush1.msra.mxu0 0.0
        %2460 = vmatprep.subr.mxu0 0.0
        %2461 = vmatpush1.msra.mxu0 0.0
        %2462 = vmatprep.subr.mxu0 0.0
        %2463 = vmatpush1.msra.mxu0 0.0
        %2464 = vmatprep.subr.mxu0 0.0
        %2465 = vmatpush1.msra.mxu0 0.0
        %2466 = vmatprep.subr.mxu0 0.0
        %2467 = vmatpush1.msra.mxu0 0.0
        %2468 = vmatprep.subr.mxu0 0.0
        %2469 = vmatpush1.msra.mxu0 0.0
        %2470 = vmatprep.subr.mxu0 0.0
        %2471 = vmatpush1.msra.mxu0 0.0
        %2472 = vmatprep.subr.mxu0 0.0
        %2473 = vmatpush1.msra.mxu0 0.0
        %2474 = vmatprep.subr.mxu0 0.0
        %2475 = vmatpush1.msra.mxu0 0.0
        %2476 = vmatprep.subr.mxu0 0.0
        %2477 = vmatpush1.msra.mxu0 0.0
        %2478 = vmatprep.subr.mxu0 0.0
        %2479 = vmatpush1.msra.mxu0 0.0
        %2480 = vmatprep.subr.mxu0 0.0
        %2481 = vmatpush1.msra.mxu0 0.0
        %2482 = vmatprep.subr.mxu0 0.0
        %2483 = vmatpush1.msra.mxu0 0.0
        %2484 = vmatprep.subr.mxu0 0.0
        %2485 = vmatpush1.msra.mxu0 0.0
        %2486 = vmatprep.subr.mxu0 0.0
        %2487 = vmatpush1.msra.mxu0 0.0
        %2488 = vmatprep.subr.mxu0 0.0
        %2489 = vmatpush1.msra.mxu0 0.0
        %2490 = vmatprep.subr.mxu0 0.0
        %2491 = vmatpush1.msra.mxu0 0.0
        %2492 = vmatprep.subr.mxu0 0.0
        %2493 = vmatpush1.msra.mxu0 0.0
        %2494 = vmatprep.mubr.f32.mxu0 0.0
        %2495 = vmatmul.mubr.f32.gmra.mrb[0].mxu0 %v2425
        %v2496 = vpop.f32.mrb[0].mxu0
        %v2497 = vadd.f32 0.0, %v2496
        %v2498 = vpop.f32.mrb[0].mxu0
        %2499 = vmatprep.mubr.f32.mxu0 0.0
        %2500 = vmatmul.mubr.f32.gmra.mrb[0].mxu0 %v2428
        %v2501 = vpop.f32.mrb[0].mxu0
        %v2502 = vadd.f32 0.0, %v2501
        %v2503 = vpop.f32.mrb[0].mxu0
        %2504 = vdwg.mxu0
        %v2506 = vsel %vm968, %v2181, 0
        %v2509 = vsel %vm968, %v2186, 0
        %2511 = vmatprep.subr.mxu0 0.0
        %2512 = vmatpush1.msra.mxu0 %v2420
        %2513 = vmatprep.subr.mxu0 0.0
        %2514 = vmatpush1.msra.mxu0 %v2421
        %2515 = vmatprep.subr.mxu0 0.0
        %2516 = vmatpush1.msra.mxu0 0.0
        %2517 = vmatprep.subr.mxu0 0.0
        %2518 = vmatpush1.msra.mxu0 0.0
        %2519 = vmatprep.subr.mxu0 0.0
        %2520 = vmatpush1.msra.mxu0 0.0
        %2521 = vmatprep.subr.mxu0 0.0
        %2522 = vmatpush1.msra.mxu0 0.0
        %2523 = vmatprep.subr.mxu0 0.0
        %2524 = vmatpush1.msra.mxu0 0.0
        %2525 = vmatprep.subr.mxu0 0.0
        %2526 = vmatpush1.msra.mxu0 0.0
        %2527 = vmatprep.subr.mxu0 0.0
        %2528 = vmatpush1.msra.mxu0 0.0
        %2529 = vmatprep.subr.mxu0 0.0
        %2530 = vmatpush1.msra.mxu0 0.0
        %2531 = vmatprep.subr.mxu0 0.0
        %2532 = vmatpush1.msra.mxu0 0.0
        %2533 = vmatprep.subr.mxu0 0.0
        %2534 = vmatpush1.msra.mxu0 0.0
        %2535 = vmatprep.subr.mxu0 0.0
        %2536 = vmatpush1.msra.mxu0 0.0
        %2537 = vmatprep.subr.mxu0 0.0
        %2538 = vmatpush1.msra.mxu0 0.0
        %2539 = vmatprep.subr.mxu0 0.0
        %2540 = vmatpush1.msra.mxu0 0.0
        %2541 = vmatprep.subr.mxu0 0.0
        %2542 = vmatpush1.msra.mxu0 0.0
        %2543 = vmatprep.subr.mxu0 0.0
        %2544 = vmatpush1.msra.mxu0 0.0
        %2545 = vmatprep.subr.mxu0 0.0
        %2546 = vmatpush1.msra.mxu0 0.0
        %2547 = vmatprep.subr.mxu0 0.0
        %2548 = vmatpush1.msra.mxu0 0.0
        %2549 = vmatprep.subr.mxu0 0.0
        %2550 = vmatpush1.msra.mxu0 0.0
        %2551 = vmatprep.subr.mxu0 0.0
        %2552 = vmatpush1.msra.mxu0 0.0
        %2553 = vmatprep.subr.mxu0 0.0
        %2554 = vmatpush1.msra.mxu0 0.0
        %2555 = vmatprep.subr.mxu0 0.0
        %2556 = vmatpush1.msra.mxu0 0.0
        %2557 = vmatprep.subr.mxu0 0.0
        %2558 = vmatpush1.msra.mxu0 0.0
        %2559 = vmatprep.subr.mxu0 0.0
        %2560 = vmatpush1.msra.mxu0 0.0
        %2561 = vmatprep.subr.mxu0 0.0
        %2562 = vmatpush1.msra.mxu0 0.0
        %2563 = vmatprep.subr.mxu0 0.0
        %2564 = vmatpush1.msra.mxu0 0.0
        %2565 = vmatprep.subr.mxu0 0.0
        %2566 = vmatpush1.msra.mxu0 0.0
        %2567 = vmatprep.subr.mxu0 0.0
        %2568 = vmatpush1.msra.mxu0 0.0
        %2569 = vmatprep.subr.mxu0 0.0
        %2570 = vmatpush1.msra.mxu0 0.0
        %2571 = vmatprep.subr.mxu0 0.0
        %2572 = vmatpush1.msra.mxu0 0.0
        %2573 = vmatprep.subr.mxu0 0.0
        %2574 = vmatpush1.msra.mxu0 0.0
        %2575 = vmatprep.mubr.f32.mxu0 0.0
        %2576 = vmatmul.mubr.f32.gmra.mrb[0].mxu0 %v2506
        %v2577 = vpop.f32.mrb[0].mxu0
        %v2578 = vadd.f32 %v2497, %v2577
        %v2579 = vpop.f32.mrb[0].mxu0
        %2580 = vmatprep.mubr.f32.mxu0 0.0
        %2581 = vmatmul.mubr.f32.gmra.mrb[0].mxu0 %v2509
        %v2582 = vpop.f32.mrb[0].mxu0
        %v2583 = vadd.f32 %v2502, %v2582
        %v2584 = vpop.f32.mrb[0].mxu0
        %2585 = vdwg.mxu0
        %v2586 = vld [vmem:[%s4 + $0x180] sm:$0x1]
        %v2587 = vlaneseq
        %v2588 = vshrl.u32 %v2587, 7
        %v2589 = vsub.s32 0, %v2588
        %v2590 = vrot.slane %v2586, %v2589
        %v2592 = vsel %vm968, %v2412, 0
        %v2595 = vsel %vm968, %v2417, 0
        %2597 = vmatprep.subr.mxu0 0.0
        %2598 = vmatpush1.msra.mxu0 %v2578
        %2599 = vmatprep.subr.mxu0 0.0
        %2600 = vmatpush1.msra.mxu0 %v2583
        %2601 = vmatprep.subr.mxu0 0.0
        %2602 = vmatpush1.msra.mxu0 0.0
        %2603 = vmatprep.subr.mxu0 0.0
        %2604 = vmatpush1.msra.mxu0 0.0
        %2605 = vmatprep.subr.mxu0 0.0
        %2606 = vmatpush1.msra.mxu0 0.0
        %2607 = vmatprep.subr.mxu0 0.0
        %2608 = vmatpush1.msra.mxu0 0.0
        %2609 = vmatprep.subr.mxu0 0.0
        %2610 = vmatpush1.msra.mxu0 0.0
        %2611 = vmatprep.subr.mxu0 0.0
        %2612 = vmatpush1.msra.mxu0 0.0
        %2613 = vmatprep.subr.mxu0 0.0
        %2614 = vmatpush1.msra.mxu0 0.0
        %2615 = vmatprep.subr.mxu0 0.0
        %2616 = vmatpush1.msra.mxu0 0.0
        %2617 = vmatprep.subr.mxu0 0.0
        %2618 = vmatpush1.msra.mxu0 0.0
        %2619 = vmatprep.subr.mxu0 0.0
        %2620 = vmatpush1.msra.mxu0 0.0
        %2621 = vmatprep.subr.mxu0 0.0
        %2622 = vmatpush1.msra.mxu0 0.0
        %2623 = vmatprep.subr.mxu0 0.0
        %2624 = vmatpush1.msra.mxu0 0.0
        %2625 = vmatprep.subr.mxu0 0.0
        %2626 = vmatpush1.msra.mxu0 0.0
        %2627 = vmatprep.subr.mxu0 0.0
        %2628 = vmatpush1.msra.mxu0 0.0
        %2629 = vmatprep.subr.mxu0 0.0
        %2630 = vmatpush1.msra.mxu0 0.0
        %2631 = vmatprep.subr.mxu0 0.0
        %2632 = vmatpush1.msra.mxu0 0.0
        %2633 = vmatprep.subr.mxu0 0.0
        %2634 = vmatpush1.msra.mxu0 0.0
        %2635 = vmatprep.subr.mxu0 0.0
        %2636 = vmatpush1.msra.mxu0 0.0
        %2637 = vmatprep.subr.mxu0 0.0
        %2638 = vmatpush1.msra.mxu0 0.0
        %2639 = vmatprep.subr.mxu0 0.0
        %2640 = vmatpush1.msra.mxu0 0.0
        %2641 = vmatprep.subr.mxu0 0.0
        %2642 = vmatpush1.msra.mxu0 0.0
        %2643 = vmatprep.subr.mxu0 0.0
        %2644 = vmatpush1.msra.mxu0 0.0
        %2645 = vmatprep.subr.mxu0 0.0
        %2646 = vmatpush1.msra.mxu0 0.0
        %2647 = vmatprep.subr.mxu0 0.0
        %2648 = vmatpush1.msra.mxu0 0.0
        %2649 = vmatprep.subr.mxu0 0.0
        %2650 = vmatpush1.msra.mxu0 0.0
        %2651 = vmatprep.subr.mxu0 0.0
        %2652 = vmatpush1.msra.mxu0 0.0
        %2653 = vmatprep.subr.mxu0 0.0
        %2654 = vmatpush1.msra.mxu0 0.0
        %2655 = vmatprep.subr.mxu0 0.0
        %2656 = vmatpush1.msra.mxu0 0.0
        %2657 = vmatprep.subr.mxu0 0.0
        %2658 = vmatpush1.msra.mxu0 0.0
        %2659 = vmatprep.subr.mxu0 0.0
        %2660 = vmatpush1.msra.mxu0 0.0
        %2661 = vmatprep.mubr.f32.mxu0 0.0
        %2662 = vmatmul.mubr.f32.gmra.mrb[0].mxu0 %v2592
        %v2663 = vpop.f32.mrb[0].mxu0
        %v2664 = vadd.f32 %v2590, %v2663
        %v2665 = vpop.f32.mrb[0].mxu0
        %2666 = vmatprep.mubr.f32.mxu0 0.0
        %2667 = vmatmul.mubr.f32.gmra.mrb[0].mxu0 %v2595
        %v2668 = vpop.f32.mrb[0].mxu0
        %v2669 = vadd.f32 %v2590, %v2668
        %v2670 = vpop.f32.mrb[0].mxu0
        %2671 = vdwg.mxu0
        %v2672 = vmax.f32 %v2664, 0.0
        %v2673 = vmax.f32 %v2669, 0.0
        %2674 = vmatprep.subr.mxu0 0.0
        %2675 = vmatpush1.msra.mxu0 %v2672
        %2676 = vmatprep.subr.mxu0 0.0
        %2677 = vmatpush1.msra.mxu0 %v2673
        %2678 = vmatprep.subr.mxu0 0.0
        %2679 = vmatpush1.msra.mxu0 0.0
        %2680 = vmatprep.subr.mxu0 0.0
        %2681 = vmatpush1.msra.mxu0 0.0
        %2682 = vmatprep.subr.mxu0 0.0
        %2683 = vmatpush1.msra.mxu0 0.0
        %2684 = vmatprep.subr.mxu0 0.0
        %2685 = vmatpush1.msra.mxu0 0.0
        %2686 = vmatprep.subr.mxu0 0.0
        %2687 = vmatpush1.msra.mxu0 0.0
        %2688 = vmatprep.subr.mxu0 0.0
        %2689 = vmatpush1.msra.mxu0 0.0
        %2690 = vmatprep.subr.mxu0 0.0
        %2691 = vmatpush1.msra.mxu0 0.0
        %2692 = vmatprep.subr.mxu0 0.0
        %2693 = vmatpush1.msra.mxu0 0.0
        %2694 = vmatprep.subr.mxu0 0.0
        %2695 = vmatpush1.msra.mxu0 0.0
        %2696 = vmatprep.subr.mxu0 0.0
        %2697 = vmatpush1.msra.mxu0 0.0
        %2698 = vmatprep.subr.mxu0 0.0
        %2699 = vmatpush1.msra.mxu0 0.0
        %2700 = vmatprep.subr.mxu0 0.0
        %2701 = vmatpush1.msra.mxu0 0.0
        %2702 = vmatprep.subr.mxu0 0.0
        %2703 = vmatpush1.msra.mxu0 0.0
        %2704 = vmatprep.subr.mxu0 0.0
        %2705 = vmatpush1.msra.mxu0 0.0
        %2706 = vmatprep.subr.mxu0 0.0
        %2707 = vmatpush1.msra.mxu0 0.0
        %2708 = vmatprep.subr.mxu0 0.0
        %2709 = vmatpush1.msra.mxu0 0.0
        %2710 = vmatprep.subr.mxu0 0.0
        %2711 = vmatpush1.msra.mxu0 0.0
        %2712 = vmatprep.subr.mxu0 0.0
        %2713 = vmatpush1.msra.mxu0 0.0
        %2714 = vmatprep.subr.mxu0 0.0
        %2715 = vmatpush1.msra.mxu0 0.0
        %2716 = vmatprep.subr.mxu0 0.0
        %2717 = vmatpush1.msra.mxu0 0.0
        %2718 = vmatprep.subr.mxu0 0.0
        %2719 = vmatpush1.msra.mxu0 0.0
        %2720 = vmatprep.subr.mxu0 0.0
        %2721 = vmatpush1.msra.mxu0 0.0
        %2722 = vmatprep.subr.mxu0 0.0
        %2723 = vmatpush1.msra.mxu0 0.0
        %2724 = vmatprep.subr.mxu0 0.0
        %2725 = vmatpush1.msra.mxu0 0.0
        %2726 = vmatprep.subr.mxu0 0.0
        %2727 = vmatpush1.msra.mxu0 0.0
        %2728 = vmatprep.subr.mxu0 0.0
        %2729 = vmatpush1.msra.mxu0 0.0
        %2730 = vmatprep.subr.mxu0 0.0
        %2731 = vmatpush1.msra.mxu0 0.0
        %2732 = vmatprep.subr.mxu0 0.0
        %2733 = vmatpush1.msra.mxu0 0.0
        %2734 = vmatprep.subr.mxu0 0.0
        %2735 = vmatpush1.msra.mxu0 0.0
        %2736 = vmatprep.subr.mxu0 0.0
        %2737 = vmatpush1.msra.mxu0 0.0
        %2738 = vmatprep.mubr.f32.mxu0 0.0
        %2739 = vmatmul.mubr.f32.gmra.mrb[0].mxu0 %v2592
        %v2740 = vpop.f32.mrb[0].mxu0
        %v2741 = vadd.f32 0.0, %v2740
        %v2742 = vpop.f32.mrb[0].mxu0
        %2743 = vmatprep.mubr.f32.mxu0 0.0
        %2744 = vmatmul.mubr.f32.gmra.mrb[0].mxu0 %v2595
        %v2745 = vpop.f32.mrb[0].mxu0
        %v2746 = vadd.f32 0.0, %v2745
        %v2747 = vpop.f32.mrb[0].mxu0
        %2748 = vdwg.mxu0
        %v2749 = vld [vmem:[%s4 + $0xc0] sm:$0xff]
        %v2750 = vld [vmem:[%s4 + $0xc8] sm:$0xff]
        %v2751 = vld [vmem:[%s4 + $0x188] sm:$0x1]
        %v2752 = vlaneseq
        %v2753 = vshrl.u32 %v2752, 7
        %v2754 = vsub.s32 0, %v2753
        %v2755 = vrot.slane %v2751, %v2754
        %v2757 = vsel %vm968, %v2741, 0
        %v2760 = vsel %vm968, %v2746, 0
        %2762 = vmatprep.subr.mxu0 0.0
        %2763 = vmatpush1.msra.mxu0 %v2749
        %2764 = vmatprep.subr.mxu0 0.0
        %2765 = vmatpush1.msra.mxu0 %v2750
        %2766 = vmatprep.subr.mxu0 0.0
        %2767 = vmatpush1.msra.mxu0 0.0
        %2768 = vmatprep.subr.mxu0 0.0
        %2769 = vmatpush1.msra.mxu0 0.0
        %2770 = vmatprep.subr.mxu0 0.0
        %2771 = vmatpush1.msra.mxu0 0.0
        %2772 = vmatprep.subr.mxu0 0.0
        %2773 = vmatpush1.msra.mxu0 0.0
        %2774 = vmatprep.subr.mxu0 0.0
        %2775 = vmatpush1.msra.mxu0 0.0
        %2776 = vmatprep.subr.mxu0 0.0
        %2777 = vmatpush1.msra.mxu0 0.0
        %2778 = vmatprep.subr.mxu0 0.0
        %2779 = vmatpush1.msra.mxu0 0.0
        %2780 = vmatprep.subr.mxu0 0.0
        %2781 = vmatpush1.msra.mxu0 0.0
        %2782 = vmatprep.subr.mxu0 0.0
        %2783 = vmatpush1.msra.mxu0 0.0
        %2784 = vmatprep.subr.mxu0 0.0
        %2785 = vmatpush1.msra.mxu0 0.0
        %2786 = vmatprep.subr.mxu0 0.0
        %2787 = vmatpush1.msra.mxu0 0.0
        %2788 = vmatprep.subr.mxu0 0.0
        %2789 = vmatpush1.msra.mxu0 0.0
        %2790 = vmatprep.subr.mxu0 0.0
        %2791 = vmatpush1.msra.mxu0 0.0
        %2792 = vmatprep.subr.mxu0 0.0
        %2793 = vmatpush1.msra.mxu0 0.0
        %2794 = vmatprep.subr.mxu0 0.0
        %2795 = vmatpush1.msra.mxu0 0.0
        %2796 = vmatprep.subr.mxu0 0.0
        %2797 = vmatpush1.msra.mxu0 0.0
        %2798 = vmatprep.subr.mxu0 0.0
        %2799 = vmatpush1.msra.mxu0 0.0
        %2800 = vmatprep.subr.mxu0 0.0
        %2801 = vmatpush1.msra.mxu0 0.0
        %2802 = vmatprep.subr.mxu0 0.0
        %2803 = vmatpush1.msra.mxu0 0.0
        %2804 = vmatprep.subr.mxu0 0.0
        %2805 = vmatpush1.msra.mxu0 0.0
        %2806 = vmatprep.subr.mxu0 0.0
        %2807 = vmatpush1.msra.mxu0 0.0
        %2808 = vmatprep.subr.mxu0 0.0
        %2809 = vmatpush1.msra.mxu0 0.0
        %2810 = vmatprep.subr.mxu0 0.0
        %2811 = vmatpush1.msra.mxu0 0.0
        %2812 = vmatprep.subr.mxu0 0.0
        %2813 = vmatpush1.msra.mxu0 0.0
        %2814 = vmatprep.subr.mxu0 0.0
        %2815 = vmatpush1.msra.mxu0 0.0
        %2816 = vmatprep.subr.mxu0 0.0
        %2817 = vmatpush1.msra.mxu0 0.0
        %2818 = vmatprep.subr.mxu0 0.0
        %2819 = vmatpush1.msra.mxu0 0.0
        %2820 = vmatprep.subr.mxu0 0.0
        %2821 = vmatpush1.msra.mxu0 0.0
        %2822 = vmatprep.subr.mxu0 0.0
        %2823 = vmatpush1.msra.mxu0 0.0
        %2824 = vmatprep.subr.mxu0 0.0
        %2825 = vmatpush1.msra.mxu0 0.0
        %2826 = vmatprep.mubr.f32.mxu0 0.0
        %2827 = vmatmul.mubr.f32.gmra.mrb[0].mxu0 %v2757
        %v2828 = vpop.f32.mrb[0].mxu0
        %v2829 = vadd.f32 %v2755, %v2828
        %v2830 = vpop.f32.mrb[0].mxu0
        %2831 = vmatprep.mubr.f32.mxu0 0.0
        %2832 = vmatmul.mubr.f32.gmra.mrb[0].mxu0 %v2760
        %v2833 = vpop.f32.mrb[0].mxu0
        %v2834 = vadd.f32 %v2755, %v2833
        %v2835 = vpop.f32.mrb[0].mxu0
        %2836 = vdwg.mxu0
        %v2837 = vsel %vm968, %v1605, 0.0
        %v2838 = vsel %vm968, %v1606, 0.0
        %v2839 = vadd.f32 %v2837, %v2838
        %v2840 = vsel %vm968, %v1607, 0.0
        %v2841 = vadd.f32 %v2839, %v2840
        %v2842 = vsel %vm968, %v1608, 0.0
        %v2843 = vadd.f32 %v2841, %v2842
        %v2844 = vrot.slane %v2843, 4
        %v2845 = vadd.f32 %v2843, %v2844
        %v2846 = vrot.slane %v2845, 2
        %v2847 = vadd.f32 %v2845, %v2846
        %v2848 = vrot.slane %v2847, 1
        %v2849 = vadd.f32 %v2847, %v2848
        %v2850 = vsel %vm968, %v1785, 0.0
        %v2851 = vsel %vm968, %v1790, 0.0
        %v2852 = vadd.f32 %v2850, %v2851
        %v2853 = vsel %vm968, %v1795, 0.0
        %v2854 = vadd.f32 %v2852, %v2853
        %v2855 = vsel %vm968, %v1800, 0.0
        %v2856 = vadd.f32 %v2854, %v2855
        %v2857 = vrot.slane %v2856, 4
        %v2858 = vadd.f32 %v2856, %v2857
        %v2859 = vrot.slane %v2858, 2
        %v2860 = vadd.f32 %v2858, %v2859
        %v2861 = vrot.slane %v2860, 1
        %v2862 = vadd.f32 %v2860, %v2861
        %v2863 = vsel %vm968, %v2672, 0.0
        %v2864 = vsel %vm968, %v2673, 0.0
        %v2865 = vadd.f32 %v2863, %v2864
        %v2866 = vrot.slane %v2865, 4
        %v2867 = vadd.f32 %v2865, %v2866
        %v2868 = vrot.slane %v2867, 2
        %v2869 = vadd.f32 %v2867, %v2868
        %v2870 = vrot.slane %v2869, 1
        %v2871 = vadd.f32 %v2869, %v2870
        %v2872 = vsel %vm968, %v2829, 0.0
        %v2873 = vsel %vm968, %v2834, 0.0
        %v2874 = vadd.f32 %v2872, %v2873
        %v2875 = vrot.slane %v2874, 4
        %v2876 = vadd.f32 %v2874, %v2875
        %v2877 = vrot.slane %v2876, 2
        %v2878 = vadd.f32 %v2876, %v2877
        %v2879 = vrot.slane %v2878, 1
        %v2880 = vadd.f32 %v2878, %v2879
        %v2881 = vld [vmem:[%s4 + $0xd0] sm:$0xff]
        %v2882 = vld [vmem:[%s4 + $0xd8] sm:$0xff]
        %v2883 = vld [vmem:[%s4 + $0xe0] sm:$0xff]
        %v2884 = vld [vmem:[%s4 + $0xe8] sm:$0xff]
        %v2886 = vsel %vm968, %v2862, 0
        %2888 = vmatprep.subr.mxu0 0.0
        %2889 = vmatpush1.msra.mxu0 %v2883
        %2890 = vmatprep.subr.mxu0 0.0
        %2891 = vmatpush1.msra.mxu0 %v2884
        %2892 = vmatprep.subr.mxu0 0.0
        %2893 = vmatpush1.msra.mxu0 0.0
        %2894 = vmatprep.subr.mxu0 0.0
        %2895 = vmatpush1.msra.mxu0 0.0
        %2896 = vmatprep.subr.mxu0 0.0
        %2897 = vmatpush1.msra.mxu0 0.0
        %2898 = vmatprep.subr.mxu0 0.0
        %2899 = vmatpush1.msra.mxu0 0.0
        %2900 = vmatprep.subr.mxu0 0.0
        %2901 = vmatpush1.msra.mxu0 0.0
        %2902 = vmatprep.subr.mxu0 0.0
        %2903 = vmatpush1.msra.mxu0 0.0
        %2904 = vmatprep.subr.mxu0 0.0
        %2905 = vmatpush1.msra.mxu0 0.0
        %2906 = vmatprep.subr.mxu0 0.0
        %2907 = vmatpush1.msra.mxu0 0.0
        %2908 = vmatprep.subr.mxu0 0.0
        %2909 = vmatpush1.msra.mxu0 0.0
        %2910 = vmatprep.subr.mxu0 0.0
        %2911 = vmatpush1.msra.mxu0 0.0
        %2912 = vmatprep.subr.mxu0 0.0
        %2913 = vmatpush1.msra.mxu0 0.0
        %2914 = vmatprep.subr.mxu0 0.0
        %2915 = vmatpush1.msra.mxu0 0.0
        %2916 = vmatprep.subr.mxu0 0.0
        %2917 = vmatpush1.msra.mxu0 0.0
        %2918 = vmatprep.subr.mxu0 0.0
        %2919 = vmatpush1.msra.mxu0 0.0
        %2920 = vmatprep.subr.mxu0 0.0
        %2921 = vmatpush1.msra.mxu0 0.0
        %2922 = vmatprep.subr.mxu0 0.0
        %2923 = vmatpush1.msra.mxu0 0.0
        %2924 = vmatprep.subr.mxu0 0.0
        %2925 = vmatpush1.msra.mxu0 0.0
        %2926 = vmatprep.subr.mxu0 0.0
        %2927 = vmatpush1.msra.mxu0 0.0
        %2928 = vmatprep.subr.mxu0 0.0
        %2929 = vmatpush1.msra.mxu0 0.0
        %2930 = vmatprep.subr.mxu0 0.0
        %2931 = vmatpush1.msra.mxu0 0.0
        %2932 = vmatprep.subr.mxu0 0.0
        %2933 = vmatpush1.msra.mxu0 0.0
        %2934 = vmatprep.subr.mxu0 0.0
        %2935 = vmatpush1.msra.mxu0 0.0
        %2936 = vmatprep.subr.mxu0 0.0
        %2937 = vmatpush1.msra.mxu0 0.0
        %2938 = vmatprep.subr.mxu0 0.0
        %2939 = vmatpush1.msra.mxu0 0.0
        %2940 = vmatprep.subr.mxu0 0.0
        %2941 = vmatpush1.msra.mxu0 0.0
        %2942 = vmatprep.subr.mxu0 0.0
        %2943 = vmatpush1.msra.mxu0 0.0
        %2944 = vmatprep.subr.mxu0 0.0
        %2945 = vmatpush1.msra.mxu0 0.0
        %2946 = vmatprep.subr.mxu0 0.0
        %2947 = vmatpush1.msra.mxu0 0.0
        %2948 = vmatprep.subr.mxu0 0.0
        %2949 = vmatpush1.msra.mxu0 0.0
        %2950 = vmatprep.subr.mxu0 0.0
        %2951 = vmatpush1.msra.mxu0 0.0
        %2952 = vmatprep.mubr.f32.mxu0 0.0
        %2953 = vmatmul.mubr.f32.gmra.mrb[0].mxu0 %v2886
        %v2954 = vpop.f32.mrb[0].mxu0
        %v2955 = vadd.f32 0.0, %v2954
        %v2956 = vpop.f32.mrb[0].mxu0
        %2957 = vdwg.mxu0
        %v2959 = vsel %vm968, %v2849, 0
        %2961 = vmatprep.subr.mxu0 0.0
        %2962 = vmatpush1.msra.mxu0 %v2881
        %2963 = vmatprep.subr.mxu0 0.0
        %2964 = vmatpush1.msra.mxu0 %v2882
        %2965 = vmatprep.subr.mxu0 0.0
        %2966 = vmatpush1.msra.mxu0 0.0
        %2967 = vmatprep.subr.mxu0 0.0
        %2968 = vmatpush1.msra.mxu0 0.0
        %2969 = vmatprep.subr.mxu0 0.0
        %2970 = vmatpush1.msra.mxu0 0.0
        %2971 = vmatprep.subr.mxu0 0.0
        %2972 = vmatpush1.msra.mxu0 0.0
        %2973 = vmatprep.subr.mxu0 0.0
        %2974 = vmatpush1.msra.mxu0 0.0
        %2975 = vmatprep.subr.mxu0 0.0
        %2976 = vmatpush1.msra.mxu0 0.0
        %2977 = vmatprep.subr.mxu0 0.0
        %2978 = vmatpush1.msra.mxu0 0.0
        %2979 = vmatprep.subr.mxu0 0.0
        %2980 = vmatpush1.msra.mxu0 0.0
        %2981 = vmatprep.subr.mxu0 0.0
        %2982 = vmatpush1.msra.mxu0 0.0
        %2983 = vmatprep.subr.mxu0 0.0
        %2984 = vmatpush1.msra.mxu0 0.0
        %2985 = vmatprep.subr.mxu0 0.0
        %2986 = vmatpush1.msra.mxu0 0.0
        %2987 = vmatprep.subr.mxu0 0.0
        %2988 = vmatpush1.msra.mxu0 0.0
        %2989 = vmatprep.subr.mxu0 0.0
        %2990 = vmatpush1.msra.mxu0 0.0
        %2991 = vmatprep.subr.mxu0 0.0
        %2992 = vmatpush1.msra.mxu0 0.0
        %2993 = vmatprep.subr.mxu0 0.0
        %2994 = vmatpush1.msra.mxu0 0.0
        %2995 = vmatprep.subr.mxu0 0.0
        %2996 = vmatpush1.msra.mxu0 0.0
        %2997 = vmatprep.subr.mxu0 0.0
        %2998 = vmatpush1.msra.mxu0 0.0
        %2999 = vmatprep.subr.mxu0 0.0
        %3000 = vmatpush1.msra.mxu0 0.0
        %3001 = vmatprep.subr.mxu0 0.0
        %3002 = vmatpush1.msra.mxu0 0.0
        %3003 = vmatprep.subr.mxu0 0.0
        %3004 = vmatpush1.msra.mxu0 0.0
        %3005 = vmatprep.subr.mxu0 0.0
        %3006 = vmatpush1.msra.mxu0 0.0
        %3007 = vmatprep.subr.mxu0 0.0
        %3008 = vmatpush1.msra.mxu0 0.0
        %3009 = vmatprep.subr.mxu0 0.0
        %3010 = vmatpush1.msra.mxu0 0.0
        %3011 = vmatprep.subr.mxu0 0.0
        %3012 = vmatpush1.msra.mxu0 0.0
        %3013 = vmatprep.subr.mxu0 0.0
        %3014 = vmatpush1.msra.mxu0 0.0
        %3015 = vmatprep.subr.mxu0 0.0
        %3016 = vmatpush1.msra.mxu0 0.0
        %3017 = vmatprep.subr.mxu0 0.0
        %3018 = vmatpush1.msra.mxu0 0.0
        %3019 = vmatprep.subr.mxu0 0.0
        %3020 = vmatpush1.msra.mxu0 0.0
        %3021 = vmatprep.subr.mxu0 0.0
        %3022 = vmatpush1.msra.mxu0 0.0
        %3023 = vmatprep.subr.mxu0 0.0
        %3024 = vmatpush1.msra.mxu0 0.0
        %3025 = vmatprep.mubr.f32.mxu0 0.0
        %3026 = vmatmul.mubr.f32.gmra.mrb[0].mxu0 %v2959
        %v3027 = vpop.f32.mrb[0].mxu0
        %v3028 = vadd.f32 %v2955, %v3027
        %v3029 = vpop.f32.mrb[0].mxu0
        %3030 = vdwg.mxu0
        %v3031 = vld [vmem:[%s4 + $0xf0] sm:$0xff]
        %v3032 = vld [vmem:[%s4 + $0xf8] sm:$0xff]
        %v3034 = vsel %vm968, %v2871, 0
        %3036 = vmatprep.subr.mxu0 0.0
        %3037 = vmatpush1.msra.mxu0 %v3031
        %3038 = vmatprep.subr.mxu0 0.0
        %3039 = vmatpush1.msra.mxu0 %v3032
        %3040 = vmatprep.subr.mxu0 0.0
        %3041 = vmatpush1.msra.mxu0 0.0
        %3042 = vmatprep.subr.mxu0 0.0
        %3043 = vmatpush1.msra.mxu0 0.0
        %3044 = vmatprep.subr.mxu0 0.0
        %3045 = vmatpush1.msra.mxu0 0.0
        %3046 = vmatprep.subr.mxu0 0.0
        %3047 = vmatpush1.msra.mxu0 0.0
        %3048 = vmatprep.subr.mxu0 0.0
        %3049 = vmatpush1.msra.mxu0 0.0
        %3050 = vmatprep.subr.mxu0 0.0
        %3051 = vmatpush1.msra.mxu0 0.0
        %3052 = vmatprep.subr.mxu0 0.0
        %3053 = vmatpush1.msra.mxu0 0.0
        %3054 = vmatprep.subr.mxu0 0.0
        %3055 = vmatpush1.msra.mxu0 0.0
        %3056 = vmatprep.subr.mxu0 0.0
        %3057 = vmatpush1.msra.mxu0 0.0
        %3058 = vmatprep.subr.mxu0 0.0
        %3059 = vmatpush1.msra.mxu0 0.0
        %3060 = vmatprep.subr.mxu0 0.0
        %3061 = vmatpush1.msra.mxu0 0.0
        %3062 = vmatprep.subr.mxu0 0.0
        %3063 = vmatpush1.msra.mxu0 0.0
        %3064 = vmatprep.subr.mxu0 0.0
        %3065 = vmatpush1.msra.mxu0 0.0
        %3066 = vmatprep.subr.mxu0 0.0
        %3067 = vmatpush1.msra.mxu0 0.0
        %3068 = vmatprep.subr.mxu0 0.0
        %3069 = vmatpush1.msra.mxu0 0.0
        %3070 = vmatprep.subr.mxu0 0.0
        %3071 = vmatpush1.msra.mxu0 0.0
        %3072 = vmatprep.subr.mxu0 0.0
        %3073 = vmatpush1.msra.mxu0 0.0
        %3074 = vmatprep.subr.mxu0 0.0
        %3075 = vmatpush1.msra.mxu0 0.0
        %3076 = vmatprep.subr.mxu0 0.0
        %3077 = vmatpush1.msra.mxu0 0.0
        %3078 = vmatprep.subr.mxu0 0.0
        %3079 = vmatpush1.msra.mxu0 0.0
        %3080 = vmatprep.subr.mxu0 0.0
        %3081 = vmatpush1.msra.mxu0 0.0
        %3082 = vmatprep.subr.mxu0 0.0
        %3083 = vmatpush1.msra.mxu0 0.0
        %3084 = vmatprep.subr.mxu0 0.0
        %3085 = vmatpush1.msra.mxu0 0.0
        %3086 = vmatprep.subr.mxu0 0.0
        %3087 = vmatpush1.msra.mxu0 0.0
        %3088 = vmatprep.subr.mxu0 0.0
        %3089 = vmatpush1.msra.mxu0 0.0
        %3090 = vmatprep.subr.mxu0 0.0
        %3091 = vmatpush1.msra.mxu0 0.0
        %3092 = vmatprep.subr.mxu0 0.0
        %3093 = vmatpush1.msra.mxu0 0.0
        %3094 = vmatprep.subr.mxu0 0.0
        %3095 = vmatpush1.msra.mxu0 0.0
        %3096 = vmatprep.subr.mxu0 0.0
        %3097 = vmatpush1.msra.mxu0 0.0
        %3098 = vmatprep.subr.mxu0 0.0
        %3099 = vmatpush1.msra.mxu0 0.0
        %3100 = vmatprep.mubr.f32.mxu0 0.0
        %3101 = vmatmul.mubr.f32.gmra.mrb[0].mxu0 %v3034
        %v3102 = vpop.f32.mrb[0].mxu0
        %v3103 = vadd.f32 0.0, %v3102
        %v3104 = vpop.f32.mrb[0].mxu0
        %3105 = vdwg.mxu0
        %v3106 = vadd.f32 %v3028, %v3103
        %v3107 = vld [vmem:[%s4 + $0x100] sm:$0xff]
        %v3108 = vld [vmem:[%s4 + $0x108] sm:$0xff]
        %v3110 = vsel %vm968, %v2880, 0
        %3112 = vmatprep.subr.mxu0 0.0
        %3113 = vmatpush1.msra.mxu0 %v3107
        %3114 = vmatprep.subr.mxu0 0.0
        %3115 = vmatpush1.msra.mxu0 %v3108
        %3116 = vmatprep.subr.mxu0 0.0
        %3117 = vmatpush1.msra.mxu0 0.0
        %3118 = vmatprep.subr.mxu0 0.0
        %3119 = vmatpush1.msra.mxu0 0.0
        %3120 = vmatprep.subr.mxu0 0.0
        %3121 = vmatpush1.msra.mxu0 0.0
        %3122 = vmatprep.subr.mxu0 0.0
        %3123 = vmatpush1.msra.mxu0 0.0
        %3124 = vmatprep.subr.mxu0 0.0
        %3125 = vmatpush1.msra.mxu0 0.0
        %3126 = vmatprep.subr.mxu0 0.0
        %3127 = vmatpush1.msra.mxu0 0.0
        %3128 = vmatprep.subr.mxu0 0.0
        %3129 = vmatpush1.msra.mxu0 0.0
        %3130 = vmatprep.subr.mxu0 0.0
        %3131 = vmatpush1.msra.mxu0 0.0
        %3132 = vmatprep.subr.mxu0 0.0
        %3133 = vmatpush1.msra.mxu0 0.0
        %3134 = vmatprep.subr.mxu0 0.0
        %3135 = vmatpush1.msra.mxu0 0.0
        %3136 = vmatprep.subr.mxu0 0.0
        %3137 = vmatpush1.msra.mxu0 0.0
        %3138 = vmatprep.subr.mxu0 0.0
        %3139 = vmatpush1.msra.mxu0 0.0
        %3140 = vmatprep.subr.mxu0 0.0
        %3141 = vmatpush1.msra.mxu0 0.0
        %3142 = vmatprep.subr.mxu0 0.0
        %3143 = vmatpush1.msra.mxu0 0.0
        %3144 = vmatprep.subr.mxu0 0.0
        %3145 = vmatpush1.msra.mxu0 0.0
        %3146 = vmatprep.subr.mxu0 0.0
        %3147 = vmatpush1.msra.mxu0 0.0
        %3148 = vmatprep.subr.mxu0 0.0
        %3149 = vmatpush1.msra.mxu0 0.0
        %3150 = vmatprep.subr.mxu0 0.0
        %3151 = vmatpush1.msra.mxu0 0.0
        %3152 = vmatprep.subr.mxu0 0.0
        %3153 = vmatpush1.msra.mxu0 0.0
        %3154 = vmatprep.subr.mxu0 0.0
        %3155 = vmatpush1.msra.mxu0 0.0
        %3156 = vmatprep.subr.mxu0 0.0
        %3157 = vmatpush1.msra.mxu0 0.0
        %3158 = vmatprep.subr.mxu0 0.0
        %3159 = vmatpush1.msra.mxu0 0.0
        %3160 = vmatprep.subr.mxu0 0.0
        %3161 = vmatpush1.msra.mxu0 0.0
        %3162 = vmatprep.subr.mxu0 0.0
        %3163 = vmatpush1.msra.mxu0 0.0
        %3164 = vmatprep.subr.mxu0 0.0
        %3165 = vmatpush1.msra.mxu0 0.0
        %3166 = vmatprep.subr.mxu0 0.0
        %3167 = vmatpush1.msra.mxu0 0.0
        %3168 = vmatprep.subr.mxu0 0.0
        %3169 = vmatpush1.msra.mxu0 0.0
        %3170 = vmatprep.subr.mxu0 0.0
        %3171 = vmatpush1.msra.mxu0 0.0
        %3172 = vmatprep.subr.mxu0 0.0
        %3173 = vmatpush1.msra.mxu0 0.0
        %3174 = vmatprep.subr.mxu0 0.0
        %3175 = vmatpush1.msra.mxu0 0.0
        %3176 = vmatprep.mubr.f32.mxu0 0.0
        %3177 = vmatmul.mubr.f32.gmra.mrb[0].mxu0 %v3110
        %v3178 = vpop.f32.mrb[0].mxu0
        %v3179 = vadd.f32 0.0, %v3178
        %v3180 = vpop.f32.mrb[0].mxu0
        %3181 = vdwg.mxu0
        %v3182 = vadd.f32 %v3106, %v3179
        %v3183 = vld [vmem:[%s4 + $0x190] sm:$0x1]
        %v3184 = vadd.f32 %v3182, %v3183
        %v3185 = vmax.f32 %v3184, 0.0
        %v3186 = vld [vmem:[%s4 + $0x110] sm:$0xff]
        %v3187 = vld [vmem:[%s4 + $0x118] sm:$0xff]
        %v3188 = vld [vmem:[%s4 + $0x120] sm:$0xff]
        %v3189 = vld [vmem:[%s4 + $0x128] sm:$0xff]
        %v3190 = vld [vmem:[%s4 + $0x130] sm:$0xff]
        %v3191 = vld [vmem:[%s4 + $0x138] sm:$0xff]
        %v3192 = vld [vmem:[%s4 + $0x140] sm:$0x3]
        %v3193 = vld [vmem:[%s4 + $0x198] sm:$0x1]
        %vm3194 = vcmask 408576
        %v3196 = vsel %vm3194, %v3185, 0
        %v3199 = vsel %vm357, %v3192, 0
        %3201 = vmatprep.subr.mxu0 0.0
        %3202 = vmatpush1.msra.mxu0 %v3186
        %3203 = vmatprep.subr.mxu0 0.0
        %3204 = vmatpush1.msra.mxu0 %v3187
        %3205 = vmatprep.subr.mxu0 0.0
        %3206 = vmatpush1.msra.mxu0 %v3188
        %3207 = vmatprep.subr.mxu0 0.0
        %3208 = vmatpush1.msra.mxu0 %v3189
        %3209 = vmatprep.subr.mxu0 0.0
        %3210 = vmatpush1.msra.mxu0 %v3190
        %3211 = vmatprep.subr.mxu0 0.0
        %3212 = vmatpush1.msra.mxu0 %v3191
        %3213 = vmatprep.subr.mxu0 0.0
        %3214 = vmatpush1.msra.mxu0 %v3199
        %3215 = vmatprep.subr.mxu0 0.0
        %3216 = vmatpush1.msra.mxu0 0.0
        %3217 = vmatprep.subr.mxu0 0.0
        %3218 = vmatpush1.msra.mxu0 0.0
        %3219 = vmatprep.subr.mxu0 0.0
        %3220 = vmatpush1.msra.mxu0 0.0
        %3221 = vmatprep.subr.mxu0 0.0
        %3222 = vmatpush1.msra.mxu0 0.0
        %3223 = vmatprep.subr.mxu0 0.0
        %3224 = vmatpush1.msra.mxu0 0.0
        %3225 = vmatprep.subr.mxu0 0.0
        %3226 = vmatpush1.msra.mxu0 0.0
        %3227 = vmatprep.subr.mxu0 0.0
        %3228 = vmatpush1.msra.mxu0 0.0
        %3229 = vmatprep.subr.mxu0 0.0
        %3230 = vmatpush1.msra.mxu0 0.0
        %3231 = vmatprep.subr.mxu0 0.0
        %3232 = vmatpush1.msra.mxu0 0.0
        %3233 = vmatprep.subr.mxu0 0.0
        %3234 = vmatpush1.msra.mxu0 0.0
        %3235 = vmatprep.subr.mxu0 0.0
        %3236 = vmatpush1.msra.mxu0 0.0
        %3237 = vmatprep.subr.mxu0 0.0
        %3238 = vmatpush1.msra.mxu0 0.0
        %3239 = vmatprep.subr.mxu0 0.0
        %3240 = vmatpush1.msra.mxu0 0.0
        %3241 = vmatprep.subr.mxu0 0.0
        %3242 = vmatpush1.msra.mxu0 0.0
        %3243 = vmatprep.subr.mxu0 0.0
        %3244 = vmatpush1.msra.mxu0 0.0
        %3245 = vmatprep.subr.mxu0 0.0
        %3246 = vmatpush1.msra.mxu0 0.0
        %3247 = vmatprep.subr.mxu0 0.0
        %3248 = vmatpush1.msra.mxu0 0.0
        %3249 = vmatprep.subr.mxu0 0.0
        %3250 = vmatpush1.msra.mxu0 0.0
        %3251 = vmatprep.subr.mxu0 0.0
        %3252 = vmatpush1.msra.mxu0 0.0
        %3253 = vmatprep.subr.mxu0 0.0
        %3254 = vmatpush1.msra.mxu0 0.0
        %3255 = vmatprep.subr.mxu0 0.0
        %3256 = vmatpush1.msra.mxu0 0.0
        %3257 = vmatprep.subr.mxu0 0.0
        %3258 = vmatpush1.msra.mxu0 0.0
        %3259 = vmatprep.subr.mxu0 0.0
        %3260 = vmatpush1.msra.mxu0 0.0
        %3261 = vmatprep.subr.mxu0 0.0
        %3262 = vmatpush1.msra.mxu0 0.0
        %3263 = vmatprep.subr.mxu0 0.0
        %3264 = vmatpush1.msra.mxu0 0.0
        %3265 = vmatprep.mubr.f32.mxu0 0.0
        %3266 = vmatmul.mubr.f32.gmra.mrb[0].mxu0 %v3196
        %v3267 = vpop.f32.mrb[0].mxu0
        %v3268 = vadd.f32 %v3193, %v3267
        %v3269 = vpop.f32.mrb[0].mxu0
        %3270 = vdwg.mxu0
        %v3271 = vmax.f32 %v3268, 0.0
        %v3272 = vld [vmem:[%s4 + $0x148] sm:$0xff]
        %v3273 = vld [vmem:[%s4 + $0x150] sm:$0xff]
        %v3274 = vld [vmem:[%s4 + $0x158] sm:$0xff]
        %v3275 = vld [vmem:[%s4 + $0x160] sm:$0xff]
        %v3276 = vld [vmem:[%s4 + $0x1a0] sm:$0x1]
        %v3278 = vsel %vm1070, %v3271, 0
        %3280 = vmatprep.subr.mxu0 0.0
        %3281 = vmatpush1.msra.mxu0 %v3272
        %3282 = vmatprep.subr.mxu0 0.0
        %3283 = vmatpush1.msra.mxu0 %v3273
        %3284 = vmatprep.subr.mxu0 0.0
        %3285 = vmatpush1.msra.mxu0 %v3274
        %3286 = vmatprep.subr.mxu0 0.0
        %3287 = vmatpush1.msra.mxu0 %v3275
        %3288 = vmatprep.subr.mxu0 0.0
        %3289 = vmatpush1.msra.mxu0 0.0
        %3290 = vmatprep.subr.mxu0 0.0
        %3291 = vmatpush1.msra.mxu0 0.0
        %3292 = vmatprep.subr.mxu0 0.0
        %3293 = vmatpush1.msra.mxu0 0.0
        %3294 = vmatprep.subr.mxu0 0.0
        %3295 = vmatpush1.msra.mxu0 0.0
        %3296 = vmatprep.subr.mxu0 0.0
        %3297 = vmatpush1.msra.mxu0 0.0
        %3298 = vmatprep.subr.mxu0 0.0
        %3299 = vmatpush1.msra.mxu0 0.0
        %3300 = vmatprep.subr.mxu0 0.0
        %3301 = vmatpush1.msra.mxu0 0.0
        %3302 = vmatprep.subr.mxu0 0.0
        %3303 = vmatpush1.msra.mxu0 0.0
        %3304 = vmatprep.subr.mxu0 0.0
        %3305 = vmatpush1.msra.mxu0 0.0
        %3306 = vmatprep.subr.mxu0 0.0
        %3307 = vmatpush1.msra.mxu0 0.0
        %3308 = vmatprep.subr.mxu0 0.0
        %3309 = vmatpush1.msra.mxu0 0.0
        %3310 = vmatprep.subr.mxu0 0.0
        %3311 = vmatpush1.msra.mxu0 0.0
        %3312 = vmatprep.subr.mxu0 0.0
        %3313 = vmatpush1.msra.mxu0 0.0
        %3314 = vmatprep.subr.mxu0 0.0
        %3315 = vmatpush1.msra.mxu0 0.0
        %3316 = vmatprep.subr.mxu0 0.0
        %3317 = vmatpush1.msra.mxu0 0.0
        %3318 = vmatprep.subr.mxu0 0.0
        %3319 = vmatpush1.msra.mxu0 0.0
        %3320 = vmatprep.subr.mxu0 0.0
        %3321 = vmatpush1.msra.mxu0 0.0
        %3322 = vmatprep.subr.mxu0 0.0
        %3323 = vmatpush1.msra.mxu0 0.0
        %3324 = vmatprep.subr.mxu0 0.0
        %3325 = vmatpush1.msra.mxu0 0.0
        %3326 = vmatprep.subr.mxu0 0.0
        %3327 = vmatpush1.msra.mxu0 0.0
        %3328 = vmatprep.subr.mxu0 0.0
        %3329 = vmatpush1.msra.mxu0 0.0
        %3330 = vmatprep.subr.mxu0 0.0
        %3331 = vmatpush1.msra.mxu0 0.0
        %3332 = vmatprep.subr.mxu0 0.0
        %3333 = vmatpush1.msra.mxu0 0.0
        %3334 = vmatprep.subr.mxu0 0.0
        %3335 = vmatpush1.msra.mxu0 0.0
        %3336 = vmatprep.subr.mxu0 0.0
        %3337 = vmatpush1.msra.mxu0 0.0
        %3338 = vmatprep.subr.mxu0 0.0
        %3339 = vmatpush1.msra.mxu0 0.0
        %3340 = vmatprep.subr.mxu0 0.0
        %3341 = vmatpush1.msra.mxu0 0.0
        %3342 = vmatprep.subr.mxu0 0.0
        %3343 = vmatpush1.msra.mxu0 0.0
        %3344 = vmatprep.mubr.f32.mxu0 0.0
        %3345 = vmatmul.mubr.f32.gmra.mrb[0].mxu0 %v3278
        %v3346 = vpop.f32.mrb[0].mxu0
        %v3347 = vadd.f32 %v3276, %v3346
        %v3348 = vpop.f32.mrb[0].mxu0
        %3349 = vdwg.mxu0
        %vm3350 = vcmask 8192
        %v3351 = vsel %vm3350, %v3347, -inf
        %3352 = vmax.xlane.f32.xlu0 %v3351
        %v3353 = vpop.xlane.xlu0 %3352
        %v3354 = vsub.f32 %v3347, %v3353
        %v3355 = vmul.f32 %v3354, 1.442695
        %v3356 = vpow.pop %v3355
        %v3357 = vsel %vm3350, %v3356, 0.0
        %3358 = vadd.xlane.f32.xlu0 %v3357
        %v3359 = vpop.xlane.xlu0 %3358
        %v3360 = vlog2.pop %v3359
        %v3361 = vmul.f32 %v3360, 0.6931472
        %v3362 = vsub.f32 %v3354, %v3361
        %3363 = vst.msk [vmem:[%s289] sm:$0x1] %vm3350, %v3362
        %s3364 = sand.u32 %s154, 1
        %s3365 = scalar_lea.sflag [#allocation3], %s3364
        %s3366 = sand.u32 %s154, 1
        %s3367 = scalar_lea.vmem [#allocation2], %s3366
        %p3368 = scmp.lt.s32.totalorder %s21, 1
        %s3369 = scalar_select %p3368, %s21, 1
        %s3370 = smul.addr %s3369, 4
        %s3371 = smul.addr %s3370, 8
        %s3372 = scalar_lea.vmem %s6, %s3371
        // Predicated region
        $region41: #{batch_wrap_diffgat_pool_forward.1} parent=39 // pred_check
          %p3373 = pneg %p164
        $region42: #{batch_wrap_diffgat_pool_forward.1} parent=39 // pred_check_branch
          %3375 = sbr.rel (%p3373) target = $region44
        $region43: #{batch_wrap_diffgat_pool_forward.1} parent=39 // pred_region
          %s3377 = ssub.s32 16, 16
          %3378 = vsyncadd %s3365, %s3377
          %s3379 = smul.addr %s21, 16
          %s3380 = scalar_lea.hbm %s5, %s3379
          %s3382 = sshll.u32 %s3367, 4
          %s3383 = int_to_ptr.vmem [resolvable:$true] %s3382
          %3385 = dma.vmem_to_hbm [thread:$0]  %s3383, 16, %s3380, %s3365
        $region44: #{batch_wrap_diffgat_pool_forward.1} parent=39 // pred_fallthru
          _
        // Predicated region
        $region45: #{batch_wrap_diffgat_pool_forward.1} parent=39 // pred_check
          %p3386 = pneg %p190
        $region46: #{batch_wrap_diffgat_pool_forward.1} parent=39 // pred_check_branch
          %3388 = sbr.rel (%p3386) target = $region48
        $region47: #{batch_wrap_diffgat_pool_forward.1} parent=39 // pred_region
          _
        $region48: #{batch_wrap_diffgat_pool_forward.1} parent=39 // pred_fallthru
          _
      $region40: #{batch_wrap_diffgat_pool_forward.1} parent=5 // pred_fallthru
        _
      %p3389 = scmp.le.s32.totalorder 2, %s16
      // Predicated region
      $region49: #{batch_wrap_diffgat_pool_forward.1} parent=5 // pred_check
        %p3390 = pneg %p3389
      $region50: #{batch_wrap_diffgat_pool_forward.1} parent=5 // pred_check_branch
        %3392 = sbr.rel (%p3390) target = $region52
      $region51: #{batch_wrap_diffgat_pool_forward.1} parent=5 // pred_region
        %s3393 = ssub.s32 %s16, 2
        // Predicated region
        $region53: #{batch_wrap_diffgat_pool_forward.1} parent=51 // pred_check
          %p3394 = pneg %p170
        $region54: #{batch_wrap_diffgat_pool_forward.1} parent=51 // pred_check_branch
          %3396 = sbr.rel (%p3394) target = $region56
        $region55: #{batch_wrap_diffgat_pool_forward.1} parent=51 // pred_region
          %s3397 = sand.u32 %s155, 1
          %s3398 = scalar_lea.sflag [#allocation3], %s3397
          %s3399 = sand.u32 %s155, 1
          %s3400 = scalar_lea.vmem [#allocation2], %s3399
          %3401 = dma.done %s3398, 16
        $region56: #{batch_wrap_diffgat_pool_forward.1} parent=51 // pred_fallthru
          _
        // Predicated region
        $region57: #{batch_wrap_diffgat_pool_forward.1} parent=51 // pred_check
          %p3402 = pneg %p196
        $region58: #{batch_wrap_diffgat_pool_forward.1} parent=51 // pred_check_branch
          %3404 = sbr.rel (%p3402) target = $region60
        $region59: #{batch_wrap_diffgat_pool_forward.1} parent=51 // pred_region
          %p3405 = scmp.lt.s32.totalorder %s22, 1
          %s3406 = scalar_select %p3405, %s22, 1
          %s3407 = smul.addr %s3406, 4
          %s3408 = smul.addr %s3407, 8
          %s3409 = scalar_lea.vmem %s6, %s3408
        $region60: #{batch_wrap_diffgat_pool_forward.1} parent=51 // pred_fallthru
          _
      $region52: #{batch_wrap_diffgat_pool_forward.1} parent=5 // pred_fallthru
        _
    $region6: #{batch_wrap_diffgat_pool_forward.1} parent=1 // loop_footer
      %s20 = sadd.s32 1, %s16
    $region7: #{batch_wrap_diffgat_pool_forward.1} parent=1 // loop_footer_branch
      %15 = sbr.rel target = $region3
    $region8: #{batch_wrap_diffgat_pool_forward.1} parent=1 // loop_exit
      _
    %3410 = vsyncpa [#allocation3], 1
    %s3411 = scalar_lea.sflag [#allocation3], 1
    %3412 = vsyncpa %s3411, 1

</llo_original>
